<compile_context>
chip_gen: v6e
topology: v6e:2x2x1
jax: 0.10.0
libtpu: 0.0.40
codegen_flags: <defaults>
</compile_context>

<pallas_src>
import functools

import jax
import jax.numpy as jnp
import numpy as np
from jax import lax
from jax.experimental import pallas as pl
from jax.experimental.pallas import tpu as pltpu

# module-level constants from the PyTorch code
BLOCK_SIZE = 256
N_EMBD = 384
N_HEAD = 6
HEAD_SIZE = N_EMBD // N_HEAD  # 64


# ----------------------------------------------------------------------------
# Fused kernel: single QKV projection + causal softmax attention (all heads) +
#               single output projection + bias; one grid step per batch elem.
# ----------------------------------------------------------------------------
def _mha_kernel(x_ref, wqkv_ref, wp_ref, b_ref, o_ref, *, n_head, head_size):
    x = x_ref[0].astype(jnp.bfloat16)          # (T, C)  one cast per grid step
    wqkv = wqkv_ref[...]                       # (C, 3C) bf16, scale folded into Wq
    wp = wp_ref[...]                           # (C, C)  bf16 = W_proj.T

    T = x.shape[0]
    C = x.shape[1]

    # One full-width MXU pass for all heads' q/k/v, f32 accumulation, then a
    # single (T, 3C) cast back to bf16.  q/k/v slices below are 128-lane aligned.
    qkv = jnp.dot(x, wqkv, preferred_element_type=jnp.float32).astype(jnp.bfloat16)

    # Additive causal bias, computed once (f32).  exp(-1e30 - m) underflows to 0.
    row = lax.broadcasted_iota(jnp.int32, (T, T), 0)
    col = lax.broadcasted_iota(jnp.int32, (T, T), 1)
    bias = jnp.where(col <= row, 0.0, -1e30).astype(jnp.float32)

    heads = []
    for h in range(n_head):                    # static unroll over 6 heads
        lo = h * head_size
        qh = qkv[:, lo:lo + head_size]                     # (T, hs) bf16, scaled
        kh = qkv[:, C + lo:C + lo + head_size]             # (T, hs) bf16
        vh = qkv[:, 2 * C + lo:2 * C + lo + head_size]     # (T, hs) bf16

        # q @ k^T without materializing a transpose of k: contract on head dim.
        s = lax.dot_general(qh, kh, (((1,), (1,)), ((), ())),
                            preferred_element_type=jnp.float32)           # (T,T)
        s = s + bias                                       # f32 add, no selects

        m = jnp.max(s, axis=-1, keepdims=True)
        e = jnp.exp(s - m)                                 # masked lanes -> 0.0
        l = jnp.sum(e, axis=-1, keepdims=True)
        inv_l = pl.reciprocal(l, approx=True)              # EUP slot

        # (p @ v) with the 1/l normalization folded in afterwards (row-wise).
        out_h = jnp.dot(e.astype(jnp.bfloat16), vh,
                        preferred_element_type=jnp.float32) * inv_l       # (T,hs)
        heads.append(out_h.astype(jnp.bfloat16))

    # Concat heads (lane concat) then ONE K=384 projection matmul + bias.
    cat = jnp.concatenate(heads, axis=-1)                  # (T, C) bf16
    acc = jnp.dot(cat, wp, preferred_element_type=jnp.float32)            # (T, C)

    # dropout is identity in eval mode
    o_ref[0] = (acc + b_ref[...]).astype(o_ref.dtype)      # lane-dense (T, C) store


def multi_head_attention(x, prep):
    """x: (B, T, C).  prep: wqkv (C,3C) bf16, wp_t (C,C) bf16, bp (1,C) f32."""
    B, T, C = x.shape
    kernel = functools.partial(_mha_kernel, n_head=N_HEAD, head_size=HEAD_SIZE)
    return pl.pallas_call(
        kernel,
        out_shape=jax.ShapeDtypeStruct((B, T, C), x.dtype),
        grid_spec=pltpu.PrefetchScalarGridSpec(
            num_scalar_prefetch=0,
            grid=(B,),
            in_specs=[
                pl.BlockSpec((1, T, C), lambda b: (b, 0, 0)),     # x
                pl.BlockSpec((C, 3 * C), lambda b: (0, 0)),       # wqkv (bf16)
                pl.BlockSpec((C, C), lambda b: (0, 0)),           # wp_t (bf16)
                pl.BlockSpec((1, C), lambda b: (0, 0)),           # bp
            ],
            out_specs=pl.BlockSpec((1, T, C), lambda b: (b, 0, 0)),
        ),
        compiler_params=pltpu.CompilerParams(
            dimension_semantics=("parallel",)),   # one batch per TC on v7x
    )(x, prep["wqkv"], prep["wp_t"], prep["bp"])


# ----------------------------------------------------------------------------
# Params / host-side preparation / reference
# ----------------------------------------------------------------------------
def init_params(key):
    """Head weights stored stacked along columns: w[:, h*hs:(h+1)*hs] = W_head_h.
    Matches nn.Linear default U(-1/sqrt(fan_in), 1/sqrt(fan_in))."""
    ks = jax.random.split(key, 5)
    bound = 1.0 / np.sqrt(N_EMBD)
    wq = jax.random.uniform(ks[0], (N_EMBD, N_EMBD), jnp.float32, -bound, bound)
    wk = jax.random.uniform(ks[1], (N_EMBD, N_EMBD), jnp.float32, -bound, bound)
    wv = jax.random.uniform(ks[2], (N_EMBD, N_EMBD), jnp.float32, -bound, bound)
    wp_t = jax.random.uniform(ks[3], (N_EMBD, N_EMBD), jnp.float32, -bound, bound)  # = W_proj.T
    bp = jax.random.uniform(ks[4], (1, N_EMBD), jnp.float32, -bound, bound)
    return {"wq": wq, "wk": wk, "wv": wv, "wp_t": wp_t, "bp": bp}


def prepare_params(params):
    """Host-side one-time prep: fold the C**-0.5 scale into Wq (in f32), fuse
    Wq/Wk/Wv into one (C, 3C) weight, and pre-cast all weights to bf16."""
    scale = float(N_EMBD) ** -0.5     # n_embd scaling, matching the PyTorch code
    wqkv = jnp.concatenate(
        [params["wq"] * scale, params["wk"], params["wv"]], axis=1)
    return {
        "wqkv": wqkv.astype(jnp.bfloat16),                 # (C, 3C)
        "wp_t": params["wp_t"].astype(jnp.bfloat16),       # (C, C)
        "bp": params["bp"].astype(jnp.float32),            # (1, C)
    }


def reference_forward(x, params):
    """Pure-JAX f32 reference mirroring the PyTorch module (eval mode)."""
    B, T, C = x.shape
    outs = []
    for h in range(N_HEAD):
        sl = slice(h * HEAD_SIZE, (h + 1) * HEAD_SIZE)
        q = x @ params["wq"][:, sl]
        k = x @ params["wk"][:, sl]
        v = x @ params["wv"][:, sl]
        wei = (q @ jnp.swapaxes(k, -1, -2)) * (C ** -0.5)
        mask = jnp.tril(jnp.ones((T, T), bool))
        wei = jnp.where(mask, wei, -jnp.inf)
        wei = jax.nn.softmax(wei, axis=-1)
        outs.append(wei @ v)
    cat = jnp.concatenate(outs, axis=-1)
    return cat @ params["wp_t"] + params["bp"]


if __name__ == "__main__":
    key = jax.random.PRNGKey(0)
    kx, kp = jax.random.split(key)

    B, T = 2, 128   # T <= block_size (256)
    x = jax.random.normal(kx, (B, T, N_EMBD), jnp.float32)
    params = init_params(kp)
    prep = prepare_params(params)

    out = multi_head_attention(x, prep)
    out = jax.block_until_ready(out)

    ref = reference_forward(x, params)
    # bf16 MXU operands with f32 accumulation -> compare at bf16-level tolerance
    np.testing.assert_allclose(np.asarray(out), np.asarray(ref), atol=2e-2, rtol=2e-2)

    print("KERNEL_OK")
</pallas_src>

<mosaic_0001>
module attributes {stable_mosaic.version = 11 : i64} {
  func.func @_mha_kernel(%arg0: i32, %arg1: memref<1x128x384xf32, #tpu.memory_space<vmem>>, %arg2: memref<384x1152xbf16, #tpu.memory_space<vmem>>, %arg3: memref<384x384xbf16, #tpu.memory_space<vmem>>, %arg4: memref<1x384xf32, #tpu.memory_space<vmem>>, %arg5: memref<1x128x384xf32, #tpu.memory_space<vmem>>) attributes {dimension_semantics = [#tpu.dimension_semantics<parallel>], iteration_bounds = array<i64: 2>, scalar_prefetch = 0 : i64, scratch_operands = 0 : i64, tpu.core_type = #tpu.core_type<tc>, window_params = [{transform_indices = @transform_0, window_bounds = array<i64: 1, 128, 384>}, {pipeline_mode = #tpu.pipeline_mode<synchronous>, transform_indices = @transform_1, window_bounds = array<i64: 384, 1152>}, {pipeline_mode = #tpu.pipeline_mode<synchronous>, transform_indices = @transform_2, window_bounds = array<i64: 384, 384>}, {pipeline_mode = #tpu.pipeline_mode<synchronous>, transform_indices = @transform_3, window_bounds = array<i64: 1, 384>}, {transform_indices = @transform_4, window_bounds = array<i64: 1, 128, 384>}]} {
    %c0 = arith.constant 0 : index
    %c0_0 = arith.constant 0 : index
    %c0_1 = arith.constant 0 : index
    %0 = vector.load %arg1[%c0, %c0_0, %c0_1] : memref<1x128x384xf32, #tpu.memory_space<vmem>>, vector<1x128x384xf32>
    %1 = vector.shape_cast %0 : vector<1x128x384xf32> to vector<128x384xf32>
    %2 = arith.truncf %1 : vector<128x384xf32> to vector<128x384xbf16>
    %c0_2 = arith.constant 0 : index
    %c0_3 = arith.constant 0 : index
    %3 = vector.load %arg2[%c0_2, %c0_3] : memref<384x1152xbf16, #tpu.memory_space<vmem>>, vector<384x1152xbf16>
    %c0_4 = arith.constant 0 : index
    %c0_5 = arith.constant 0 : index
    %4 = vector.load %arg3[%c0_4, %c0_5] : memref<384x384xbf16, #tpu.memory_space<vmem>>, vector<384x384xbf16>
    %cst = arith.constant dense<0.000000e+00> : vector<128x1152xf32>
    %5 = tpu.matmul %2, %3, %cst {dimension_numbers = #tpu.dot_dimension_numbers<[1], [0], [0], [1], [0, 0, 1, 1], [], []>} : vector<128x384xbf16>, vector<384x1152xbf16>, vector<128x1152xf32> -> vector<128x1152xf32>
    %6 = arith.truncf %5 : vector<128x1152xf32> to vector<128x1152xbf16>
    %7 = tpu.iota {dimensions = array<i32: 0>} : vector<128x128xi32>
    %8 = tpu.iota {dimensions = array<i32: 1>} : vector<128x128xi32>
    %9 = arith.cmpi sle, %8, %7 : vector<128x128xi32>
    %cst_6 = arith.constant 0.000000e+00 : f32
    %cst_7 = arith.constant -1.000000e+30 : f32
    %10 = vector.broadcast %cst_6 : f32 to vector<128x128xf32>
    %11 = vector.broadcast %cst_7 : f32 to vector<128x128xf32>
    %12 = arith.select %9, %10, %11 : vector<128x128xi1>, vector<128x128xf32>
    %13 = vector.extract_strided_slice %6 {offsets = [0, 0], sizes = [128, 64], strides = [1, 1]} : vector<128x1152xbf16> to vector<128x64xbf16>
    %14 = vector.extract_strided_slice %6 {offsets = [0, 384], sizes = [128, 64], strides = [1, 1]} : vector<128x1152xbf16> to vector<128x64xbf16>
    %15 = vector.extract_strided_slice %6 {offsets = [0, 768], sizes = [128, 64], strides = [1, 1]} : vector<128x1152xbf16> to vector<128x64xbf16>
    %cst_8 = arith.constant dense<0.000000e+00> : vector<128x128xf32>
    %16 = tpu.matmul %13, %14, %cst_8 {dimension_numbers = #tpu.dot_dimension_numbers<[1], [1], [0], [0], [0, 0, 1, 0], [], []>} : vector<128x64xbf16>, vector<128x64xbf16>, vector<128x128xf32> -> vector<128x128xf32>
    %17 = arith.addf %16, %12 : vector<128x128xf32>
    %cst_9 = arith.constant dense<0xFF800000> : vector<128xf32>
    %18 = vector.multi_reduction <maximumf>, %17, %cst_9 [1] : vector<128x128xf32> to vector<128xf32>
    %19 = vector.shape_cast %18 : vector<128xf32> to vector<128x1xf32>
    %20 = vector.broadcast %19 : vector<128x1xf32> to vector<128x128xf32>
    %21 = arith.subf %17, %20 : vector<128x128xf32>
    %22 = math.exp %21 : vector<128x128xf32>
    %cst_10 = arith.constant dense<0.000000e+00> : vector<128xf32>
    %23 = vector.multi_reduction <add>, %22, %cst_10 [1] : vector<128x128xf32> to vector<128xf32>
    %24 = vector.shape_cast %23 : vector<128xf32> to vector<128x1xf32>
    %25 = tpu.reciprocal %24 {approx = true} : vector<128x1xf32> -> vector<128x1xf32>
    %26 = arith.truncf %22 : vector<128x128xf32> to vector<128x128xbf16>
    %cst_11 = arith.constant dense<0.000000e+00> : vector<128x64xf32>
    %27 = tpu.matmul %26, %15, %cst_11 {dimension_numbers = #tpu.dot_dimension_numbers<[1], [0], [0], [1], [0, 0, 1, 1], [], []>} : vector<128x128xbf16>, vector<128x64xbf16>, vector<128x64xf32> -> vector<128x64xf32>
    %28 = vector.broadcast %25 : vector<128x1xf32> to vector<128x64xf32>
    %29 = arith.mulf %27, %28 : vector<128x64xf32>
    %30 = arith.truncf %29 : vector<128x64xf32> to vector<128x64xbf16>
    %31 = vector.extract_strided_slice %6 {offsets = [0, 64], sizes = [128, 64], strides = [1, 1]} : vector<128x1152xbf16> to vector<128x64xbf16>
    %32 = vector.extract_strided_slice %6 {offsets = [0, 448], sizes = [128, 64], strides = [1, 1]} : vector<128x1152xbf16> to vector<128x64xbf16>
    %33 = vector.extract_strided_slice %6 {offsets = [0, 832], sizes = [128, 64], strides = [1, 1]} : vector<128x1152xbf16> to vector<128x64xbf16>
    %cst_12 = arith.constant dense<0.000000e+00> : vector<128x128xf32>
    %34 = tpu.matmul %31, %32, %cst_12 {dimension_numbers = #tpu.dot_dimension_numbers<[1], [1], [0], [0], [0, 0, 1, 0], [], []>} : vector<128x64xbf16>, vector<128x64xbf16>, vector<128x128xf32> -> vector<128x128xf32>
    %35 = arith.addf %34, %12 : vector<128x128xf32>
    %cst_13 = arith.constant dense<0xFF800000> : vector<128xf32>
    %36 = vector.multi_reduction <maximumf>, %35, %cst_13 [1] : vector<128x128xf32> to vector<128xf32>
    %37 = vector.shape_cast %36 : vector<128xf32> to vector<128x1xf32>
    %38 = vector.broadcast %37 : vector<128x1xf32> to vector<128x128xf32>
    %39 = arith.subf %35, %38 : vector<128x128xf32>
    %40 = math.exp %39 : vector<128x128xf32>
    %cst_14 = arith.constant dense<0.000000e+00> : vector<128xf32>
    %41 = vector.multi_reduction <add>, %40, %cst_14 [1] : vector<128x128xf32> to vector<128xf32>
    %42 = vector.shape_cast %41 : vector<128xf32> to vector<128x1xf32>
    %43 = tpu.reciprocal %42 {approx = true} : vector<128x1xf32> -> vector<128x1xf32>
    %44 = arith.truncf %40 : vector<128x128xf32> to vector<128x128xbf16>
    %cst_15 = arith.constant dense<0.000000e+00> : vector<128x64xf32>
    %45 = tpu.matmul %44, %33, %cst_15 {dimension_numbers = #tpu.dot_dimension_numbers<[1], [0], [0], [1], [0, 0, 1, 1], [], []>} : vector<128x128xbf16>, vector<128x64xbf16>, vector<128x64xf32> -> vector<128x64xf32>
    %46 = vector.broadcast %43 : vector<128x1xf32> to vector<128x64xf32>
    %47 = arith.mulf %45, %46 : vector<128x64xf32>
    %48 = arith.truncf %47 : vector<128x64xf32> to vector<128x64xbf16>
    %49 = vector.extract_strided_slice %6 {offsets = [0, 128], sizes = [128, 64], strides = [1, 1]} : vector<128x1152xbf16> to vector<128x64xbf16>
    %50 = vector.extract_strided_slice %6 {offsets = [0, 512], sizes = [128, 64], strides = [1, 1]} : vector<128x1152xbf16> to vector<128x64xbf16>
    %51 = vector.extract_strided_slice %6 {offsets = [0, 896], sizes = [128, 64], strides = [1, 1]} : vector<128x1152xbf16> to vector<128x64xbf16>
    %cst_16 = arith.constant dense<0.000000e+00> : vector<128x128xf32>
    %52 = tpu.matmul %49, %50, %cst_16 {dimension_numbers = #tpu.dot_dimension_numbers<[1], [1], [0], [0], [0, 0, 1, 0], [], []>} : vector<128x64xbf16>, vector<128x64xbf16>, vector<128x128xf32> -> vector<128x128xf32>
    %53 = arith.addf %52, %12 : vector<128x128xf32>
    %cst_17 = arith.constant dense<0xFF800000> : vector<128xf32>
    %54 = vector.multi_reduction <maximumf>, %53, %cst_17 [1] : vector<128x128xf32> to vector<128xf32>
    %55 = vector.shape_cast %54 : vector<128xf32> to vector<128x1xf32>
    %56 = vector.broadcast %55 : vector<128x1xf32> to vector<128x128xf32>
    %57 = arith.subf %53, %56 : vector<128x128xf32>
    %58 = math.exp %57 : vector<128x128xf32>
    %cst_18 = arith.constant dense<0.000000e+00> : vector<128xf32>
    %59 = vector.multi_reduction <add>, %58, %cst_18 [1] : vector<128x128xf32> to vector<128xf32>
    %60 = vector.shape_cast %59 : vector<128xf32> to vector<128x1xf32>
    %61 = tpu.reciprocal %60 {approx = true} : vector<128x1xf32> -> vector<128x1xf32>
    %62 = arith.truncf %58 : vector<128x128xf32> to vector<128x128xbf16>
    %cst_19 = arith.constant dense<0.000000e+00> : vector<128x64xf32>
    %63 = tpu.matmul %62, %51, %cst_19 {dimension_numbers = #tpu.dot_dimension_numbers<[1], [0], [0], [1], [0, 0, 1, 1], [], []>} : vector<128x128xbf16>, vector<128x64xbf16>, vector<128x64xf32> -> vector<128x64xf32>
    %64 = vector.broadcast %61 : vector<128x1xf32> to vector<128x64xf32>
    %65 = arith.mulf %63, %64 : vector<128x64xf32>
    %66 = arith.truncf %65 : vector<128x64xf32> to vector<128x64xbf16>
    %67 = vector.extract_strided_slice %6 {offsets = [0, 192], sizes = [128, 64], strides = [1, 1]} : vector<128x1152xbf16> to vector<128x64xbf16>
    %68 = vector.extract_strided_slice %6 {offsets = [0, 576], sizes = [128, 64], strides = [1, 1]} : vector<128x1152xbf16> to vector<128x64xbf16>
    %69 = vector.extract_strided_slice %6 {offsets = [0, 960], sizes = [128, 64], strides = [1, 1]} : vector<128x1152xbf16> to vector<128x64xbf16>
    %cst_20 = arith.constant dense<0.000000e+00> : vector<128x128xf32>
    %70 = tpu.matmul %67, %68, %cst_20 {dimension_numbers = #tpu.dot_dimension_numbers<[1], [1], [0], [0], [0, 0, 1, 0], [], []>} : vector<128x64xbf16>, vector<128x64xbf16>, vector<128x128xf32> -> vector<128x128xf32>
    %71 = arith.addf %70, %12 : vector<128x128xf32>
    %cst_21 = arith.constant dense<0xFF800000> : vector<128xf32>
    %72 = vector.multi_reduction <maximumf>, %71, %cst_21 [1] : vector<128x128xf32> to vector<128xf32>
    %73 = vector.shape_cast %72 : vector<128xf32> to vector<128x1xf32>
    %74 = vector.broadcast %73 : vector<128x1xf32> to vector<128x128xf32>
    %75 = arith.subf %71, %74 : vector<128x128xf32>
    %76 = math.exp %75 : vector<128x128xf32>
    %cst_22 = arith.constant dense<0.000000e+00> : vector<128xf32>
    %77 = vector.multi_reduction <add>, %76, %cst_22 [1] : vector<128x128xf32> to vector<128xf32>
    %78 = vector.shape_cast %77 : vector<128xf32> to vector<128x1xf32>
    %79 = tpu.reciprocal %78 {approx = true} : vector<128x1xf32> -> vector<128x1xf32>
    %80 = arith.truncf %76 : vector<128x128xf32> to vector<128x128xbf16>
    %cst_23 = arith.constant dense<0.000000e+00> : vector<128x64xf32>
    %81 = tpu.matmul %80, %69, %cst_23 {dimension_numbers = #tpu.dot_dimension_numbers<[1], [0], [0], [1], [0, 0, 1, 1], [], []>} : vector<128x128xbf16>, vector<128x64xbf16>, vector<128x64xf32> -> vector<128x64xf32>
    %82 = vector.broadcast %79 : vector<128x1xf32> to vector<128x64xf32>
    %83 = arith.mulf %81, %82 : vector<128x64xf32>
    %84 = arith.truncf %83 : vector<128x64xf32> to vector<128x64xbf16>
    %85 = vector.extract_strided_slice %6 {offsets = [0, 256], sizes = [128, 64], strides = [1, 1]} : vector<128x1152xbf16> to vector<128x64xbf16>
    %86 = vector.extract_strided_slice %6 {offsets = [0, 640], sizes = [128, 64], strides = [1, 1]} : vector<128x1152xbf16> to vector<128x64xbf16>
    %87 = vector.extract_strided_slice %6 {offsets = [0, 1024], sizes = [128, 64], strides = [1, 1]} : vector<128x1152xbf16> to vector<128x64xbf16>
    %cst_24 = arith.constant dense<0.000000e+00> : vector<128x128xf32>
    %88 = tpu.matmul %85, %86, %cst_24 {dimension_numbers = #tpu.dot_dimension_numbers<[1], [1], [0], [0], [0, 0, 1, 0], [], []>} : vector<128x64xbf16>, vector<128x64xbf16>, vector<128x128xf32> -> vector<128x128xf32>
    %89 = arith.addf %88, %12 : vector<128x128xf32>
    %cst_25 = arith.constant dense<0xFF800000> : vector<128xf32>
    %90 = vector.multi_reduction <maximumf>, %89, %cst_25 [1] : vector<128x128xf32> to vector<128xf32>
    %91 = vector.shape_cast %90 : vector<128xf32> to vector<128x1xf32>
    %92 = vector.broadcast %91 : vector<128x1xf32> to vector<128x128xf32>
    %93 = arith.subf %89, %92 : vector<128x128xf32>
    %94 = math.exp %93 : vector<128x128xf32>
    %cst_26 = arith.constant dense<0.000000e+00> : vector<128xf32>
    %95 = vector.multi_reduction <add>, %94, %cst_26 [1] : vector<128x128xf32> to vector<128xf32>
    %96 = vector.shape_cast %95 : vector<128xf32> to vector<128x1xf32>
    %97 = tpu.reciprocal %96 {approx = true} : vector<128x1xf32> -> vector<128x1xf32>
    %98 = arith.truncf %94 : vector<128x128xf32> to vector<128x128xbf16>
    %cst_27 = arith.constant dense<0.000000e+00> : vector<128x64xf32>
    %99 = tpu.matmul %98, %87, %cst_27 {dimension_numbers = #tpu.dot_dimension_numbers<[1], [0], [0], [1], [0, 0, 1, 1], [], []>} : vector<128x128xbf16>, vector<128x64xbf16>, vector<128x64xf32> -> vector<128x64xf32>
    %100 = vector.broadcast %97 : vector<128x1xf32> to vector<128x64xf32>
    %101 = arith.mulf %99, %100 : vector<128x64xf32>
    %102 = arith.truncf %101 : vector<128x64xf32> to vector<128x64xbf16>
    %103 = vector.extract_strided_slice %6 {offsets = [0, 320], sizes = [128, 64], strides = [1, 1]} : vector<128x1152xbf16> to vector<128x64xbf16>
    %104 = vector.extract_strided_slice %6 {offsets = [0, 704], sizes = [128, 64], strides = [1, 1]} : vector<128x1152xbf16> to vector<128x64xbf16>
    %105 = vector.extract_strided_slice %6 {offsets = [0, 1088], sizes = [128, 64], strides = [1, 1]} : vector<128x1152xbf16> to vector<128x64xbf16>
    %cst_28 = arith.constant dense<0.000000e+00> : vector<128x128xf32>
    %106 = tpu.matmul %103, %104, %cst_28 {dimension_numbers = #tpu.dot_dimension_numbers<[1], [1], [0], [0], [0, 0, 1, 0], [], []>} : vector<128x64xbf16>, vector<128x64xbf16>, vector<128x128xf32> -> vector<128x128xf32>
    %107 = arith.addf %106, %12 : vector<128x128xf32>
    %cst_29 = arith.constant dense<0xFF800000> : vector<128xf32>
    %108 = vector.multi_reduction <maximumf>, %107, %cst_29 [1] : vector<128x128xf32> to vector<128xf32>
    %109 = vector.shape_cast %108 : vector<128xf32> to vector<128x1xf32>
    %110 = vector.broadcast %109 : vector<128x1xf32> to vector<128x128xf32>
    %111 = arith.subf %107, %110 : vector<128x128xf32>
    %112 = math.exp %111 : vector<128x128xf32>
    %cst_30 = arith.constant dense<0.000000e+00> : vector<128xf32>
    %113 = vector.multi_reduction <add>, %112, %cst_30 [1] : vector<128x128xf32> to vector<128xf32>
    %114 = vector.shape_cast %113 : vector<128xf32> to vector<128x1xf32>
    %115 = tpu.reciprocal %114 {approx = true} : vector<128x1xf32> -> vector<128x1xf32>
    %116 = arith.truncf %112 : vector<128x128xf32> to vector<128x128xbf16>
    %cst_31 = arith.constant dense<0.000000e+00> : vector<128x64xf32>
    %117 = tpu.matmul %116, %105, %cst_31 {dimension_numbers = #tpu.dot_dimension_numbers<[1], [0], [0], [1], [0, 0, 1, 1], [], []>} : vector<128x128xbf16>, vector<128x64xbf16>, vector<128x64xf32> -> vector<128x64xf32>
    %118 = vector.broadcast %115 : vector<128x1xf32> to vector<128x64xf32>
    %119 = arith.mulf %117, %118 : vector<128x64xf32>
    %120 = arith.truncf %119 : vector<128x64xf32> to vector<128x64xbf16>
    %121 = tpu.concatenate %30, %48, %66, %84, %102, %120 in 1 : vector<128x64xbf16>, vector<128x64xbf16>, vector<128x64xbf16>, vector<128x64xbf16>, vector<128x64xbf16>, vector<128x64xbf16> -> vector<128x384xbf16>
    %cst_32 = arith.constant dense<0.000000e+00> : vector<128x384xf32>
    %122 = tpu.matmul %121, %4, %cst_32 {dimension_numbers = #tpu.dot_dimension_numbers<[1], [0], [0], [1], [0, 0, 1, 1], [], []>} : vector<128x384xbf16>, vector<384x384xbf16>, vector<128x384xf32> -> vector<128x384xf32>
    %c0_33 = arith.constant 0 : index
    %c0_34 = arith.constant 0 : index
    %123 = vector.load %arg4[%c0_33, %c0_34] : memref<1x384xf32, #tpu.memory_space<vmem>>, vector<1x384xf32>
    %124 = vector.broadcast %123 : vector<1x384xf32> to vector<128x384xf32>
    %125 = arith.addf %122, %124 : vector<128x384xf32>
    %c0_35 = arith.constant 0 : index
    %c0_36 = arith.constant 0 : index
    %c0_37 = arith.constant 0 : index
    %126 = vector.load %arg5[%c0_35, %c0_36, %c0_37] : memref<1x128x384xf32, #tpu.memory_space<vmem>>, vector<1x128x384xf32>
    %127 = vector.shape_cast %126 : vector<1x128x384xf32> to vector<128x384xf32>
    %128 = vector.shape_cast %125 : vector<128x384xf32> to vector<1x128x384xf32>
    tpu.vector_store %arg5[%c0_35, %c0_36, %c0_37], %128 {strides = array<i32>} : memref<1x128x384xf32, #tpu.memory_space<vmem>>, vector<1x128x384xf32>,
    return
  }
  func.func @transform_0(%arg0: i32) -> (i32, i32, i32) {
    %c0_i32 = arith.constant 0 : i32
    %c0_i32_0 = arith.constant 0 : i32
    %c0_i32_1 = arith.constant 0 : i32
    return %arg0, %c0_i32, %c0_i32_0 : i32, i32, i32
  }
  func.func @transform_1(%arg0: i32) -> (i32, i32) {
    %c0_i32 = arith.constant 0 : i32
    %c0_i32_0 = arith.constant 0 : i32
    %c0_i32_1 = arith.constant 0 : i32
    return %c0_i32, %c0_i32_0 : i32, i32
  }
  func.func @transform_2(%arg0: i32) -> (i32, i32) {
    %c0_i32 = arith.constant 0 : i32
    %c0_i32_0 = arith.constant 0 : i32
    %c0_i32_1 = arith.constant 0 : i32
    return %c0_i32, %c0_i32_0 : i32, i32
  }
  func.func @transform_3(%arg0: i32) -> (i32, i32) {
    %c0_i32 = arith.constant 0 : i32
    %c0_i32_0 = arith.constant 0 : i32
    %c0_i32_1 = arith.constant 0 : i32
    return %c0_i32, %c0_i32_0 : i32, i32
  }
  func.func @transform_4(%arg0: i32) -> (i32, i32, i32) {
    %c0_i32 = arith.constant 0 : i32
    %c0_i32_0 = arith.constant 0 : i32
    %c0_i32_1 = arith.constant 0 : i32
    return %arg0, %c0_i32, %c0_i32_0 : i32, i32, i32
  }
}

</mosaic_0001>

<llo_original>
// kernel: tpu_custom_call.1
$region0: #{tpu_custom_call.1}
  #allocation0 [shape = 'u32[]', space=smem, size = 0x4, offset = 0x4, fixed_abs, tag = 'smem constant byte address 0x4 - core index']
  #allocation1 [shape = 'u32[144,128]{1,0:T(1,128)}', space=vmem, size = 0x12000, scoped, tag = 'internal scratch']
  %s0 = inlined_call_operand.hbm [shape: f32[2,128,384], index: 0, kind: input, shape index: {}]
  %s1 = inlined_call_operand.hbm [shape: bf16[384,1152], index: 1, kind: input, shape index: {}]
  %s2 = inlined_call_operand.hbm [shape: bf16[384,384], index: 2, kind: input, shape index: {}]
  %s3 = inlined_call_operand.vmem [shape: f32[1,384], index: 3, kind: input, shape index: {}]
  %s4 = inlined_call_operand.hbm [shape: f32[2,128,384], index: 4, kind: output, shape index: {}]
  %s5 = sld [smem:[#allocation0]]
  $region61: #{tpu_custom_call.1} parent=0
    _
  %s7 = ssub.s32 1, %s5
  %s8 = scalar_select 0, %s7, %s5
  $region1: #{tpu_custom_call.1} parent=0
    #allocation2 [shape = 'u8[393216]{0}', space=vmem, size = 0x60000, scoped, tag = 'input window, operand 0']
    #allocation3 [shape = 's32[2]{0}', space=sflag, size = 0x8, scoped, tag = 'scoped memory for tpu_custom_call.1']
    #allocation4 [shape = 's32[2]{0}', space=sflag, size = 0x8, scoped, tag = 'scoped memory for tpu_custom_call.1']
    #allocation5 [shape = 'u8[884736]{0}', space=vmem, size = 0xd8000, scoped, tag = 'input window, operand 1, single buffered']
    #allocation6 [shape = 's32[1]{0}', space=sflag, size = 0x4, scoped, tag = 'scoped memory for tpu_custom_call.1']
    #allocation7 [shape = 'u8[294912]{0}', space=vmem, size = 0x48000, scoped, tag = 'input window, operand 2, single buffered']
    #allocation8 [shape = 'u8[393216]{0}', space=vmem, size = 0x60000, scoped, tag = 'output window, operand 0']
    %9 = vsyncpa [#allocation3], 0
    %s10 = scalar_lea.sflag [#allocation3], 1
    %11 = vsyncpa %s10, 0
    %12 = vsyncpa [#allocation6], 0
    %13 = vsyncpa [#allocation4], 0
    %s14 = scalar_lea.sflag [#allocation4], 1
    %15 = vsyncpa %s14, 0
    loop: start=0, step=1, limit=4
    $region2: #{tpu_custom_call.1} parent=1 // loop_pre_header
      _
    $region3: #{tpu_custom_call.1} parent=1 // loop_header
      %s17 = sphi 0, %s21
      %p18 = scmp.ge.s32.totalorder %s17, 4
      %s27 = sphi 0, %s29
      %s30 = sphi 0, %s27
      %s31 = sphi 0, %s30
      %s47 = sphi 0, %s31
      %s51 = sphi 0, %s51
      %s53 = sphi 0, %s51
      %s54 = sphi 0, %s53
      %s68 = sphi 0, %s54
      %s72 = sphi 0, %s72
      %s74 = sphi 0, %s72
      %s75 = sphi 0, %s74
      %s89 = sphi 0, %s75
      %s93 = sphi 0, %s93
      %s95 = sphi 0, %s93
      %s96 = sphi 0, %s95
      %s110 = sphi 0, %s96
      %s116 = sphi 0, %s118
      %s119 = sphi 0, %s116
      %s120 = sphi 0, %s119
      %s136 = sphi 0, %s120
    $region4: #{tpu_custom_call.1} parent=1 // loop_header_branch
      %20 = sbr.rel (%p18) target = $region8
    $region5: #{tpu_custom_call.1} parent=1 // loop_body
      %s22 = ssub.s32 %s17, 1
      %s23 = ssub.s32 %s17, 2
      %s24 = sadd.s32 %s17, 1
      %s25 = ssub.s32 %s17, %s24
      %p26 = scmp.eq.s32.totalorder %s25, 0
      %s28 = sadd.s32 %s27, 1
      %s29 = scalar_select %p26, %s27, %s28
      %p32 = pneg %p26
      %p33 = scmp.eq.s32.totalorder %s17, 1
      %p34 = por %p32, %p33
      %p35 = scmp.ne.s32.totalorder %s27, %s30
      %p36 = scmp.eq.s32.totalorder %s17, 0
      %p37 = por %p35, %p36
      %p38 = scmp.ne.s32.totalorder %s27, %s30
      %p39 = scmp.eq.s32.totalorder %s22, 1
      %p40 = por %p38, %p39
      %p41 = scmp.ne.s32.totalorder %s30, %s31
      %p42 = scmp.eq.s32.totalorder %s22, 0
      %p43 = por %p41, %p42
      %p44 = scmp.ne.s32.totalorder %s30, %s31
      %p45 = scmp.eq.s32.totalorder %s23, 1
      %p46 = por %p44, %p45
      %p48 = scmp.ne.s32.totalorder %s31, %s47
      %p49 = scmp.eq.s32.totalorder %s23, 0
      %p50 = por %p48, %p49
      %s52 = sadd.s32 %s51, 1
      %p55 = scmp.eq.s32.totalorder %s17, 1
      %p56 = scmp.ne.s32.totalorder %s51, %s53
      %p57 = scmp.eq.s32.totalorder %s17, 0
      %p58 = por %p56, %p57
      %p59 = scmp.ne.s32.totalorder %s51, %s53
      %p60 = scmp.eq.s32.totalorder %s22, 1
      %p61 = por %p59, %p60
      %p62 = scmp.ne.s32.totalorder %s53, %s54
      %p63 = scmp.eq.s32.totalorder %s22, 0
      %p64 = por %p62, %p63
      %p65 = scmp.ne.s32.totalorder %s53, %s54
      %p66 = scmp.eq.s32.totalorder %s23, 1
      %p67 = por %p65, %p66
      %p69 = scmp.ne.s32.totalorder %s54, %s68
      %p70 = scmp.eq.s32.totalorder %s23, 0
      %p71 = por %p69, %p70
      %s73 = sadd.s32 %s72, 1
      %p76 = scmp.eq.s32.totalorder %s17, 1
      %p77 = scmp.ne.s32.totalorder %s72, %s74
      %p78 = scmp.eq.s32.totalorder %s17, 0
      %p79 = por %p77, %p78
      %p80 = scmp.ne.s32.totalorder %s72, %s74
      %p81 = scmp.eq.s32.totalorder %s22, 1
      %p82 = por %p80, %p81
      %p83 = scmp.ne.s32.totalorder %s74, %s75
      %p84 = scmp.eq.s32.totalorder %s22, 0
      %p85 = por %p83, %p84
      %p86 = scmp.ne.s32.totalorder %s74, %s75
      %p87 = scmp.eq.s32.totalorder %s23, 1
      %p88 = por %p86, %p87
      %p90 = scmp.ne.s32.totalorder %s75, %s89
      %p91 = scmp.eq.s32.totalorder %s23, 0
      %p92 = por %p90, %p91
      %s94 = sadd.s32 %s93, 1
      %p97 = scmp.eq.s32.totalorder %s17, 1
      %p98 = scmp.ne.s32.totalorder %s93, %s95
      %p99 = scmp.eq.s32.totalorder %s17, 0
      %p100 = por %p98, %p99
      %p101 = scmp.ne.s32.totalorder %s93, %s95
      %p102 = scmp.eq.s32.totalorder %s22, 1
      %p103 = por %p101, %p102
      %p104 = scmp.ne.s32.totalorder %s95, %s96
      %p105 = scmp.eq.s32.totalorder %s22, 0
      %p106 = por %p104, %p105
      %p107 = scmp.ne.s32.totalorder %s95, %s96
      %p108 = scmp.eq.s32.totalorder %s23, 1
      %p109 = por %p107, %p108
      %p111 = scmp.ne.s32.totalorder %s96, %s110
      %p112 = scmp.eq.s32.totalorder %s23, 0
      %p113 = por %p111, %p112
      %s114 = ssub.s32 %s17, %s24
      %p115 = scmp.eq.s32.totalorder %s114, 0
      %s117 = sadd.s32 %s116, 1
      %s118 = scalar_select %p115, %s116, %s117
      %p121 = pneg %p115
      %p122 = scmp.eq.s32.totalorder %s17, 1
      %p123 = por %p121, %p122
      %p124 = scmp.ne.s32.totalorder %s116, %s119
      %p125 = scmp.eq.s32.totalorder %s17, 0
      %p126 = por %p124, %p125
      %p127 = scmp.ne.s32.totalorder %s116, %s119
      %p128 = scmp.eq.s32.totalorder %s22, 1
      %p129 = por %p127, %p128
      %p130 = scmp.ne.s32.totalorder %s119, %s120
      %p131 = scmp.eq.s32.totalorder %s22, 0
      %p132 = por %p130, %p131
      %p133 = scmp.ne.s32.totalorder %s119, %s120
      %p134 = scmp.eq.s32.totalorder %s23, 1
      %p135 = por %p133, %p134
      %p137 = scmp.ne.s32.totalorder %s120, %s136
      %p138 = scmp.eq.s32.totalorder %s23, 0
      %p139 = por %p137, %p138
      %p140 = scmp.le.s32.totalorder 1, %s17
      %p141 = scmp.lt.s32.totalorder %s17, 3
      %p142 = pnand %p140, %p141
      %p143 = pneg %p142
      // Predicated region
      $region9: #{tpu_custom_call.1} parent=5 // pred_check
        _
      $region10: #{tpu_custom_call.1} parent=5 // pred_check_branch
        %145 = sbr.rel (%p142) target = $region12
      $region11: #{tpu_custom_call.1} parent=5 // pred_region
        %s146 = ssub.s32 %s17, 1
        // Predicated region
        $region13: #{tpu_custom_call.1} parent=11 // pred_check
          %p147 = pneg %p64
        $region14: #{tpu_custom_call.1} parent=11 // pred_check_branch
          %149 = sbr.rel (%p147) target = $region16
        $region15: #{tpu_custom_call.1} parent=11 // pred_region
          %s151 = ssub.s32 27648, 27648
          %152 = vsyncadd [#allocation6], %s151
          %s153 = sshll.u32 [#allocation5], 4
          %s154 = int_to_ptr.vmem [resolvable:$true] %s153
          %159 = dma.hbm_to_vmem [thread:$0]  %s1, 27648, %s154, [#allocation6], 576, 576, 36
        $region16: #{tpu_custom_call.1} parent=11 // pred_fallthru
          _
        // Predicated region
        $region17: #{tpu_custom_call.1} parent=11 // pred_check
          %p160 = pneg %p85
        $region18: #{tpu_custom_call.1} parent=11 // pred_check_branch
          %162 = sbr.rel (%p160) target = $region20
        $region19: #{tpu_custom_call.1} parent=11 // pred_region
          %s164 = ssub.s32 9216, 9216
          %165 = vsyncadd [#allocation6], %s164
          %s166 = sshll.u32 [#allocation7], 4
          %s167 = int_to_ptr.vmem [resolvable:$true] %s166
          %172 = dma.hbm_to_vmem [thread:$0]  %s2, 9216, %s167, [#allocation6], 192, 192, 12
        $region20: #{tpu_custom_call.1} parent=11 // pred_fallthru
          _
        // Predicated region
        $region21: #{tpu_custom_call.1} parent=11 // pred_check
          %p173 = pneg %p106
        $region22: #{tpu_custom_call.1} parent=11 // pred_check_branch
          %175 = sbr.rel (%p173) target = $region24
        $region23: #{tpu_custom_call.1} parent=11 // pred_region
          _
        $region24: #{tpu_custom_call.1} parent=11 // pred_fallthru
          _
      $region12: #{tpu_custom_call.1} parent=5 // pred_fallthru
        _
      %p176 = scmp.lt.s32.totalorder %s17, 2
      // Predicated region
      $region25: #{tpu_custom_call.1} parent=5 // pred_check
        %p177 = pneg %p176
      $region26: #{tpu_custom_call.1} parent=5 // pred_check_branch
        %179 = sbr.rel (%p177) target = $region28
      $region27: #{tpu_custom_call.1} parent=5 // pred_region
        // Predicated region
        $region29: #{tpu_custom_call.1} parent=27 // pred_check
          %p180 = pneg %p37
        $region30: #{tpu_custom_call.1} parent=27 // pred_check_branch
          %182 = sbr.rel (%p180) target = $region32
        $region31: #{tpu_custom_call.1} parent=27 // pred_region
          %s183 = sand.u32 %s27, 1
          %s184 = scalar_lea.sflag [#allocation3], %s183
          %s185 = sand.u32 %s27, 1
          %s186 = smul.addr %s185, 384
          %s187 = scalar_lea.vmem [#allocation2], %s186
          %s189 = ssub.s32 6144, 6144
          %190 = vsyncadd %s184, %s189
          %s191 = smul.addr %s17, 48
          %s192 = smul.addr %s191, 128
          %s193 = scalar_lea.hbm %s0, %s192
          %s194 = sshll.u32 %s187, 4
          %s195 = int_to_ptr.vmem [resolvable:$true] %s194
          %200 = dma.hbm_to_vmem [thread:$0]  %s193, 6144, %s195, %s184, 384, 384, 24
        $region32: #{tpu_custom_call.1} parent=27 // pred_fallthru
          _
      $region28: #{tpu_custom_call.1} parent=5 // pred_fallthru
        _
      %p201 = scmp.le.s32.totalorder 1, %s17
      %p202 = scmp.lt.s32.totalorder %s17, 3
      %p203 = pnand %p201, %p202
      %p204 = pneg %p203
      // Predicated region
      $region33: #{tpu_custom_call.1} parent=5 // pred_check
        _
      $region34: #{tpu_custom_call.1} parent=5 // pred_check_branch
        %206 = sbr.rel (%p203) target = $region36
      $region35: #{tpu_custom_call.1} parent=5 // pred_region
        %s207 = ssub.s32 %s17, 1
        %s208 = sand.u32 %s30, 1
        %s209 = scalar_lea.sflag [#allocation3], %s208
        %s210 = sand.u32 %s30, 1
        %s211 = smul.addr %s210, 384
        %s212 = scalar_lea.vmem [#allocation2], %s211
        // Predicated region
        $region37: #{tpu_custom_call.1} parent=35 // pred_check
          %p213 = pneg %p43
        $region38: #{tpu_custom_call.1} parent=35 // pred_check_branch
          %215 = sbr.rel (%p213) target = $region40
        $region39: #{tpu_custom_call.1} parent=35 // pred_region
          %216 = dma.done %s209, 6144
        $region40: #{tpu_custom_call.1} parent=35 // pred_fallthru
          _
        // Predicated region
        $region41: #{tpu_custom_call.1} parent=35 // pred_check
          %p217 = pneg %p64
        $region42: #{tpu_custom_call.1} parent=35 // pred_check_branch
          %219 = sbr.rel (%p217) target = $region44
        $region43: #{tpu_custom_call.1} parent=35 // pred_region
          %220 = dma.done [#allocation6], 27648
        $region44: #{tpu_custom_call.1} parent=35 // pred_fallthru
          _
        // Predicated region
        $region45: #{tpu_custom_call.1} parent=35 // pred_check
          %p221 = pneg %p85
        $region46: #{tpu_custom_call.1} parent=35 // pred_check_branch
          %223 = sbr.rel (%p221) target = $region48
        $region47: #{tpu_custom_call.1} parent=35 // pred_region
          %224 = dma.done [#allocation6], 9216
        $region48: #{tpu_custom_call.1} parent=35 // pred_fallthru
          _
        %s225 = sand.u32 %s30, 1
        %s226 = scalar_lea.sflag [#allocation3], %s225
        %s227 = sand.u32 %s30, 1
        %s228 = smul.addr %s227, 384
        %s229 = scalar_lea.vmem [#allocation2], %s228
        %p230 = pneg %p43
        %p231 = pneg %p40
        %p232 = pneg %p64
        %p233 = pneg %p61
        %p234 = pneg %p85
        %p235 = pneg %p82
        %p236 = pneg %p106
        %p237 = pneg %p103
        %p238 = pneg %p132
        %p239 = pneg %p129
        %s240 = sand.u32 %s119, 1
        %s241 = scalar_lea.sflag [#allocation4], %s240
        %s242 = sand.u32 %s119, 1
        %s243 = smul.addr %s242, 384
        %s244 = scalar_lea.vmem [#allocation8], %s243
        %v246 = vld [vmem:[%s212] sm:$0xff]
        %v247 = vld [vmem:[%s212 + $0x8] sm:$0xff]
        %v248 = vld [vmem:[%s212 + $0x10] sm:$0xff]
        %v249 = vld [vmem:[%s212 + $0x18] sm:$0xff]
        %v250 = vld [vmem:[%s212 + $0x20] sm:$0xff]
        %v251 = vld [vmem:[%s212 + $0x28] sm:$0xff]
        %v252 = vld [vmem:[%s212 + $0x30] sm:$0xff]
        %v253 = vld [vmem:[%s212 + $0x38] sm:$0xff]
        %v254 = vld [vmem:[%s212 + $0x40] sm:$0xff]
        %v255 = vld [vmem:[%s212 + $0x48] sm:$0xff]
        %v256 = vld [vmem:[%s212 + $0x50] sm:$0xff]
        %v257 = vld [vmem:[%s212 + $0x58] sm:$0xff]
        %v258 = vld [vmem:[%s212 + $0x60] sm:$0xff]
        %v259 = vld [vmem:[%s212 + $0x68] sm:$0xff]
        %v260 = vld [vmem:[%s212 + $0x70] sm:$0xff]
        %v261 = vld [vmem:[%s212 + $0x78] sm:$0xff]
        %v262 = vld [vmem:[%s212 + $0x80] sm:$0xff]
        %v263 = vld [vmem:[%s212 + $0x88] sm:$0xff]
        %v264 = vld [vmem:[%s212 + $0x90] sm:$0xff]
        %v265 = vld [vmem:[%s212 + $0x98] sm:$0xff]
        %v266 = vld [vmem:[%s212 + $0xa0] sm:$0xff]
        %v267 = vld [vmem:[%s212 + $0xa8] sm:$0xff]
        %v268 = vld [vmem:[%s212 + $0xb0] sm:$0xff]
        %v269 = vld [vmem:[%s212 + $0xb8] sm:$0xff]
        %v270 = vld [vmem:[%s212 + $0xc0] sm:$0xff]
        %v271 = vld [vmem:[%s212 + $0xc8] sm:$0xff]
        %v272 = vld [vmem:[%s212 + $0xd0] sm:$0xff]
        %v273 = vld [vmem:[%s212 + $0xd8] sm:$0xff]
        %v274 = vld [vmem:[%s212 + $0xe0] sm:$0xff]
        %v275 = vld [vmem:[%s212 + $0xe8] sm:$0xff]
        %v276 = vld [vmem:[%s212 + $0xf0] sm:$0xff]
        %v277 = vld [vmem:[%s212 + $0xf8] sm:$0xff]
        %v278 = vld [vmem:[%s212 + $0x100] sm:$0xff]
        %v279 = vld [vmem:[%s212 + $0x108] sm:$0xff]
        %v280 = vld [vmem:[%s212 + $0x110] sm:$0xff]
        %v281 = vld [vmem:[%s212 + $0x118] sm:$0xff]
        %v282 = vld [vmem:[%s212 + $0x120] sm:$0xff]
        %v283 = vld [vmem:[%s212 + $0x128] sm:$0xff]
        %v284 = vld [vmem:[%s212 + $0x130] sm:$0xff]
        %v285 = vld [vmem:[%s212 + $0x138] sm:$0xff]
        %v286 = vld [vmem:[%s212 + $0x140] sm:$0xff]
        %v287 = vld [vmem:[%s212 + $0x148] sm:$0xff]
        %v288 = vld [vmem:[%s212 + $0x150] sm:$0xff]
        %v289 = vld [vmem:[%s212 + $0x158] sm:$0xff]
        %v290 = vld [vmem:[%s212 + $0x160] sm:$0xff]
        %v291 = vld [vmem:[%s212 + $0x168] sm:$0xff]
        %v292 = vld [vmem:[%s212 + $0x170] sm:$0xff]
        %v293 = vld [vmem:[%s212 + $0x178] sm:$0xff]
        %v294 = vpack.c.bf16 %v249, %v246
        %v295 = vpack.c.bf16 %v250, %v247
        %v296 = vpack.c.bf16 %v251, %v248
        %v297 = vpack.c.bf16 %v255, %v252
        %v298 = vpack.c.bf16 %v256, %v253
        %v299 = vpack.c.bf16 %v257, %v254
        %v300 = vpack.c.bf16 %v261, %v258
        %v301 = vpack.c.bf16 %v262, %v259
        %v302 = vpack.c.bf16 %v263, %v260
        %v303 = vpack.c.bf16 %v267, %v264
        %v304 = vpack.c.bf16 %v268, %v265
        %v305 = vpack.c.bf16 %v269, %v266
        %v306 = vpack.c.bf16 %v273, %v270
        %v307 = vpack.c.bf16 %v274, %v271
        %v308 = vpack.c.bf16 %v275, %v272
        %v309 = vpack.c.bf16 %v279, %v276
        %v310 = vpack.c.bf16 %v280, %v277
        %v311 = vpack.c.bf16 %v281, %v278
        %v312 = vpack.c.bf16 %v285, %v282
        %v313 = vpack.c.bf16 %v286, %v283
        %v314 = vpack.c.bf16 %v287, %v284
        %v315 = vpack.c.bf16 %v291, %v288
        %v316 = vpack.c.bf16 %v292, %v289
        %v317 = vpack.c.bf16 %v293, %v290
        %v318 = vld [vmem:[#allocation5] sm:$0xff]
        %v319 = vld [vmem:[#allocation5 + $0x8] sm:$0xff]
        %v320 = vld [vmem:[#allocation5 + $0x10] sm:$0xff]
        %v321 = vld [vmem:[#allocation5 + $0x18] sm:$0xff]
        %v322 = vld [vmem:[#allocation5 + $0x20] sm:$0xf]
        %v323 = vld [vmem:[#allocation5 + $0x24] sm:$0xff]
        %v324 = vld [vmem:[#allocation5 + $0x2c] sm:$0xff]
        %v325 = vld [vmem:[#allocation5 + $0x34] sm:$0xff]
        %v326 = vld [vmem:[#allocation5 + $0x3c] sm:$0xff]
        %v327 = vld [vmem:[#allocation5 + $0x44] sm:$0xf]
        %v328 = vld [vmem:[#allocation5 + $0x48] sm:$0xff]
        %v329 = vld [vmem:[#allocation5 + $0x50] sm:$0xff]
        %v330 = vld [vmem:[#allocation5 + $0x58] sm:$0xff]
        %v331 = vld [vmem:[#allocation5 + $0x60] sm:$0xff]
        %v332 = vld [vmem:[#allocation5 + $0x68] sm:$0xf]
        %v333 = vld [vmem:[#allocation5 + $0x6c] sm:$0xff]
        %v334 = vld [vmem:[#allocation5 + $0x74] sm:$0xff]
        %v335 = vld [vmem:[#allocation5 + $0x7c] sm:$0xff]
        %v336 = vld [vmem:[#allocation5 + $0x84] sm:$0xff]
        %v337 = vld [vmem:[#allocation5 + $0x8c] sm:$0xf]
        %v338 = vld [vmem:[#allocation5 + $0x90] sm:$0xff]
        %v339 = vld [vmem:[#allocation5 + $0x98] sm:$0xff]
        %v340 = vld [vmem:[#allocation5 + $0xa0] sm:$0xff]
        %v341 = vld [vmem:[#allocation5 + $0xa8] sm:$0xff]
        %v342 = vld [vmem:[#allocation5 + $0xb0] sm:$0xf]
        %v343 = vld [vmem:[#allocation5 + $0xb4] sm:$0xff]
        %v344 = vld [vmem:[#allocation5 + $0xbc] sm:$0xff]
        %v345 = vld [vmem:[#allocation5 + $0xc4] sm:$0xff]
        %v346 = vld [vmem:[#allocation5 + $0xcc] sm:$0xff]
        %v347 = vld [vmem:[#allocation5 + $0xd4] sm:$0xf]
        %v348 = vld [vmem:[#allocation5 + $0xd8] sm:$0xff]
        %v349 = vld [vmem:[#allocation5 + $0xe0] sm:$0xff]
        %v350 = vld [vmem:[#allocation5 + $0xe8] sm:$0xff]
        %v351 = vld [vmem:[#allocation5 + $0xf0] sm:$0xff]
        %v352 = vld [vmem:[#allocation5 + $0xf8] sm:$0xf]
        %v353 = vld [vmem:[#allocation5 + $0xfc] sm:$0xff]
        %v354 = vld [vmem:[#allocation5 + $0x104] sm:$0xff]
        %v355 = vld [vmem:[#allocation5 + $0x10c] sm:$0xff]
        %v356 = vld [vmem:[#allocation5 + $0x114] sm:$0xff]
        %v357 = vld [vmem:[#allocation5 + $0x11c] sm:$0xf]
        %v358 = vld [vmem:[#allocation5 + $0x120] sm:$0xff]
        %v359 = vld [vmem:[#allocation5 + $0x128] sm:$0xff]
        %v360 = vld [vmem:[#allocation5 + $0x130] sm:$0xff]
        %v361 = vld [vmem:[#allocation5 + $0x138] sm:$0xff]
        %v362 = vld [vmem:[#allocation5 + $0x140] sm:$0xf]
        %v363 = vld [vmem:[#allocation5 + $0x144] sm:$0xff]
        %v364 = vld [vmem:[#allocation5 + $0x14c] sm:$0xff]
        %v365 = vld [vmem:[#allocation5 + $0x154] sm:$0xff]
        %v366 = vld [vmem:[#allocation5 + $0x15c] sm:$0xff]
        %v367 = vld [vmem:[#allocation5 + $0x164] sm:$0xf]
        %v368 = vld [vmem:[#allocation5 + $0x168] sm:$0xff]
        %v369 = vld [vmem:[#allocation5 + $0x170] sm:$0xff]
        %v370 = vld [vmem:[#allocation5 + $0x178] sm:$0xff]
        %v371 = vld [vmem:[#allocation5 + $0x180] sm:$0xff]
        %v372 = vld [vmem:[#allocation5 + $0x188] sm:$0xf]
        %v373 = vld [vmem:[#allocation5 + $0x18c] sm:$0xff]
        %v374 = vld [vmem:[#allocation5 + $0x194] sm:$0xff]
        %v375 = vld [vmem:[#allocation5 + $0x19c] sm:$0xff]
        %v376 = vld [vmem:[#allocation5 + $0x1a4] sm:$0xff]
        %v377 = vld [vmem:[#allocation5 + $0x1ac] sm:$0xf]
        %v378 = vld [vmem:[#allocation5 + $0x1b0] sm:$0xff]
        %v379 = vld [vmem:[#allocation5 + $0x1b8] sm:$0xff]
        %v380 = vld [vmem:[#allocation5 + $0x1c0] sm:$0xff]
        %v381 = vld [vmem:[#allocation5 + $0x1c8] sm:$0xff]
        %v382 = vld [vmem:[#allocation5 + $0x1d0] sm:$0xf]
        %v383 = vld [vmem:[#allocation5 + $0x1d4] sm:$0xff]
        %v384 = vld [vmem:[#allocation5 + $0x1dc] sm:$0xff]
        %v385 = vld [vmem:[#allocation5 + $0x1e4] sm:$0xff]
        %v386 = vld [vmem:[#allocation5 + $0x1ec] sm:$0xff]
        %v387 = vld [vmem:[#allocation5 + $0x1f4] sm:$0xf]
        %v388 = vld [vmem:[#allocation5 + $0x1f8] sm:$0xff]
        %v389 = vld [vmem:[#allocation5 + $0x200] sm:$0xff]
        %v390 = vld [vmem:[#allocation5 + $0x208] sm:$0xff]
        %v391 = vld [vmem:[#allocation5 + $0x210] sm:$0xff]
        %v392 = vld [vmem:[#allocation5 + $0x218] sm:$0xf]
        %v393 = vld [vmem:[#allocation5 + $0x21c] sm:$0xff]
        %v394 = vld [vmem:[#allocation5 + $0x224] sm:$0xff]
        %v395 = vld [vmem:[#allocation5 + $0x22c] sm:$0xff]
        %v396 = vld [vmem:[#allocation5 + $0x234] sm:$0xff]
        %v397 = vld [vmem:[#allocation5 + $0x23c] sm:$0xf]
        %v398 = vld [vmem:[#allocation5 + $0x240] sm:$0xff]
        %v399 = vld [vmem:[#allocation5 + $0x248] sm:$0xff]
        %v400 = vld [vmem:[#allocation5 + $0x250] sm:$0xff]
        %v401 = vld [vmem:[#allocation5 + $0x258] sm:$0xff]
        %v402 = vld [vmem:[#allocation5 + $0x260] sm:$0xf]
        %v403 = vld [vmem:[#allocation5 + $0x264] sm:$0xff]
        %v404 = vld [vmem:[#allocation5 + $0x26c] sm:$0xff]
        %v405 = vld [vmem:[#allocation5 + $0x274] sm:$0xff]
        %v406 = vld [vmem:[#allocation5 + $0x27c] sm:$0xff]
        %v407 = vld [vmem:[#allocation5 + $0x284] sm:$0xf]
        %v408 = vld [vmem:[#allocation5 + $0x288] sm:$0xff]
        %v409 = vld [vmem:[#allocation5 + $0x290] sm:$0xff]
        %v410 = vld [vmem:[#allocation5 + $0x298] sm:$0xff]
        %v411 = vld [vmem:[#allocation5 + $0x2a0] sm:$0xff]
        %v412 = vld [vmem:[#allocation5 + $0x2a8] sm:$0xf]
        %v413 = vld [vmem:[#allocation5 + $0x2ac] sm:$0xff]
        %v414 = vld [vmem:[#allocation5 + $0x2b4] sm:$0xff]
        %v415 = vld [vmem:[#allocation5 + $0x2bc] sm:$0xff]
        %v416 = vld [vmem:[#allocation5 + $0x2c4] sm:$0xff]
        %v417 = vld [vmem:[#allocation5 + $0x2cc] sm:$0xf]
        %v418 = vld [vmem:[#allocation5 + $0x2d0] sm:$0xff]
        %v419 = vld [vmem:[#allocation5 + $0x2d8] sm:$0xff]
        %v420 = vld [vmem:[#allocation5 + $0x2e0] sm:$0xff]
        %v421 = vld [vmem:[#allocation5 + $0x2e8] sm:$0xff]
        %v422 = vld [vmem:[#allocation5 + $0x2f0] sm:$0xf]
        %v423 = vld [vmem:[#allocation5 + $0x2f4] sm:$0xff]
        %v424 = vld [vmem:[#allocation5 + $0x2fc] sm:$0xff]
        %v425 = vld [vmem:[#allocation5 + $0x304] sm:$0xff]
        %v426 = vld [vmem:[#allocation5 + $0x30c] sm:$0xff]
        %v427 = vld [vmem:[#allocation5 + $0x314] sm:$0xf]
        %v428 = vld [vmem:[#allocation5 + $0x318] sm:$0xff]
        %v429 = vld [vmem:[#allocation5 + $0x320] sm:$0xff]
        %v430 = vld [vmem:[#allocation5 + $0x328] sm:$0xff]
        %v431 = vld [vmem:[#allocation5 + $0x330] sm:$0xff]
        %v432 = vld [vmem:[#allocation5 + $0x338] sm:$0xf]
        %v433 = vld [vmem:[#allocation5 + $0x33c] sm:$0xff]
        %v434 = vld [vmem:[#allocation5 + $0x344] sm:$0xff]
        %v435 = vld [vmem:[#allocation5 + $0x34c] sm:$0xff]
        %v436 = vld [vmem:[#allocation5 + $0x354] sm:$0xff]
        %v437 = vld [vmem:[#allocation5 + $0x35c] sm:$0xf]
        %v438 = vld [vmem:[#allocation5 + $0x360] sm:$0xff]
        %v439 = vld [vmem:[#allocation5 + $0x368] sm:$0xff]
        %v440 = vld [vmem:[#allocation5 + $0x370] sm:$0xff]
        %v441 = vld [vmem:[#allocation5 + $0x378] sm:$0xff]
        %v442 = vld [vmem:[#allocation5 + $0x380] sm:$0xf]
        %v443 = vld [vmem:[#allocation5 + $0x384] sm:$0xff]
        %v444 = vld [vmem:[#allocation5 + $0x38c] sm:$0xff]
        %v445 = vld [vmem:[#allocation5 + $0x394] sm:$0xff]
        %v446 = vld [vmem:[#allocation5 + $0x39c] sm:$0xff]
        %v447 = vld [vmem:[#allocation5 + $0x3a4] sm:$0xf]
        %v448 = vld [vmem:[#allocation5 + $0x3a8] sm:$0xff]
        %v449 = vld [vmem:[#allocation5 + $0x3b0] sm:$0xff]
        %v450 = vld [vmem:[#allocation5 + $0x3b8] sm:$0xff]
        %v451 = vld [vmem:[#allocation5 + $0x3c0] sm:$0xff]
        %v452 = vld [vmem:[#allocation5 + $0x3c8] sm:$0xf]
        %v453 = vld [vmem:[#allocation5 + $0x3cc] sm:$0xff]
        %v454 = vld [vmem:[#allocation5 + $0x3d4] sm:$0xff]
        %v455 = vld [vmem:[#allocation5 + $0x3dc] sm:$0xff]
        %v456 = vld [vmem:[#allocation5 + $0x3e4] sm:$0xff]
        %v457 = vld [vmem:[#allocation5 + $0x3ec] sm:$0xf]
        %v458 = vld [vmem:[#allocation5 + $0x3f0] sm:$0xff]
        %v459 = vld [vmem:[#allocation5 + $0x3f8] sm:$0xff]
        %v460 = vld [vmem:[#allocation5 + $0x400] sm:$0xff]
        %v461 = vld [vmem:[#allocation5 + $0x408] sm:$0xff]
        %v462 = vld [vmem:[#allocation5 + $0x410] sm:$0xf]
        %v463 = vld [vmem:[#allocation5 + $0x414] sm:$0xff]
        %v464 = vld [vmem:[#allocation5 + $0x41c] sm:$0xff]
        %v465 = vld [vmem:[#allocation5 + $0x424] sm:$0xff]
        %v466 = vld [vmem:[#allocation5 + $0x42c] sm:$0xff]
        %v467 = vld [vmem:[#allocation5 + $0x434] sm:$0xf]
        %v468 = vld [vmem:[#allocation5 + $0x438] sm:$0xff]
        %v469 = vld [vmem:[#allocation5 + $0x440] sm:$0xff]
        %v470 = vld [vmem:[#allocation5 + $0x448] sm:$0xff]
        %v471 = vld [vmem:[#allocation5 + $0x450] sm:$0xff]
        %v472 = vld [vmem:[#allocation5 + $0x458] sm:$0xf]
        %v473 = vld [vmem:[#allocation5 + $0x45c] sm:$0xff]
        %v474 = vld [vmem:[#allocation5 + $0x464] sm:$0xff]
        %v475 = vld [vmem:[#allocation5 + $0x46c] sm:$0xff]
        %v476 = vld [vmem:[#allocation5 + $0x474] sm:$0xff]
        %v477 = vld [vmem:[#allocation5 + $0x47c] sm:$0xf]
        %v478 = vld [vmem:[#allocation5 + $0x480] sm:$0xff]
        %v479 = vld [vmem:[#allocation5 + $0x488] sm:$0xff]
        %v480 = vld [vmem:[#allocation5 + $0x490] sm:$0xff]
        %v481 = vld [vmem:[#allocation5 + $0x498] sm:$0xff]
        %v482 = vld [vmem:[#allocation5 + $0x4a0] sm:$0xf]
        %v483 = vld [vmem:[#allocation5 + $0x4a4] sm:$0xff]
        %v484 = vld [vmem:[#allocation5 + $0x4ac] sm:$0xff]
        %v485 = vld [vmem:[#allocation5 + $0x4b4] sm:$0xff]
        %v486 = vld [vmem:[#allocation5 + $0x4bc] sm:$0xff]
        %v487 = vld [vmem:[#allocation5 + $0x4c4] sm:$0xf]
        %v488 = vld [vmem:[#allocation5 + $0x4c8] sm:$0xff]
        %v489 = vld [vmem:[#allocation5 + $0x4d0] sm:$0xff]
        %v490 = vld [vmem:[#allocation5 + $0x4d8] sm:$0xff]
        %v491 = vld [vmem:[#allocation5 + $0x4e0] sm:$0xff]
        %v492 = vld [vmem:[#allocation5 + $0x4e8] sm:$0xf]
        %v493 = vld [vmem:[#allocation5 + $0x4ec] sm:$0xff]
        %v494 = vld [vmem:[#allocation5 + $0x4f4] sm:$0xff]
        %v495 = vld [vmem:[#allocation5 + $0x4fc] sm:$0xff]
        %v496 = vld [vmem:[#allocation5 + $0x504] sm:$0xff]
        %v497 = vld [vmem:[#allocation5 + $0x50c] sm:$0xf]
        %v498 = vld [vmem:[#allocation5 + $0x510] sm:$0xff]
        %v499 = vld [vmem:[#allocation5 + $0x518] sm:$0xff]
        %v500 = vld [vmem:[#allocation5 + $0x520] sm:$0xff]
        %v501 = vld [vmem:[#allocation5 + $0x528] sm:$0xff]
        %v502 = vld [vmem:[#allocation5 + $0x530] sm:$0xf]
        %v503 = vld [vmem:[#allocation5 + $0x534] sm:$0xff]
        %v504 = vld [vmem:[#allocation5 + $0x53c] sm:$0xff]
        %v505 = vld [vmem:[#allocation5 + $0x544] sm:$0xff]
        %v506 = vld [vmem:[#allocation5 + $0x54c] sm:$0xff]
        %v507 = vld [vmem:[#allocation5 + $0x554] sm:$0xf]
        %v508 = vld [vmem:[#allocation5 + $0x558] sm:$0xff]
        %v509 = vld [vmem:[#allocation5 + $0x560] sm:$0xff]
        %v510 = vld [vmem:[#allocation5 + $0x568] sm:$0xff]
        %v511 = vld [vmem:[#allocation5 + $0x570] sm:$0xff]
        %v512 = vld [vmem:[#allocation5 + $0x578] sm:$0xf]
        %v513 = vld [vmem:[#allocation5 + $0x57c] sm:$0xff]
        %v514 = vld [vmem:[#allocation5 + $0x584] sm:$0xff]
        %v515 = vld [vmem:[#allocation5 + $0x58c] sm:$0xff]
        %v516 = vld [vmem:[#allocation5 + $0x594] sm:$0xff]
        %v517 = vld [vmem:[#allocation5 + $0x59c] sm:$0xf]
        %v518 = vld [vmem:[#allocation5 + $0x5a0] sm:$0xff]
        %v519 = vld [vmem:[#allocation5 + $0x5a8] sm:$0xff]
        %v520 = vld [vmem:[#allocation5 + $0x5b0] sm:$0xff]
        %v521 = vld [vmem:[#allocation5 + $0x5b8] sm:$0xff]
        %v522 = vld [vmem:[#allocation5 + $0x5c0] sm:$0xf]
        %v523 = vld [vmem:[#allocation5 + $0x5c4] sm:$0xff]
        %v524 = vld [vmem:[#allocation5 + $0x5cc] sm:$0xff]
        %v525 = vld [vmem:[#allocation5 + $0x5d4] sm:$0xff]
        %v526 = vld [vmem:[#allocation5 + $0x5dc] sm:$0xff]
        %v527 = vld [vmem:[#allocation5 + $0x5e4] sm:$0xf]
        %v528 = vld [vmem:[#allocation5 + $0x5e8] sm:$0xff]
        %v529 = vld [vmem:[#allocation5 + $0x5f0] sm:$0xff]
        %v530 = vld [vmem:[#allocation5 + $0x5f8] sm:$0xff]
        %v531 = vld [vmem:[#allocation5 + $0x600] sm:$0xff]
        %v532 = vld [vmem:[#allocation5 + $0x608] sm:$0xf]
        %v533 = vld [vmem:[#allocation5 + $0x60c] sm:$0xff]
        %v534 = vld [vmem:[#allocation5 + $0x614] sm:$0xff]
        %v535 = vld [vmem:[#allocation5 + $0x61c] sm:$0xff]
        %v536 = vld [vmem:[#allocation5 + $0x624] sm:$0xff]
        %v537 = vld [vmem:[#allocation5 + $0x62c] sm:$0xf]
        %v538 = vld [vmem:[#allocation5 + $0x630] sm:$0xff]
        %v539 = vld [vmem:[#allocation5 + $0x638] sm:$0xff]
        %v540 = vld [vmem:[#allocation5 + $0x640] sm:$0xff]
        %v541 = vld [vmem:[#allocation5 + $0x648] sm:$0xff]
        %v542 = vld [vmem:[#allocation5 + $0x650] sm:$0xf]
        %v543 = vld [vmem:[#allocation5 + $0x654] sm:$0xff]
        %v544 = vld [vmem:[#allocation5 + $0x65c] sm:$0xff]
        %v545 = vld [vmem:[#allocation5 + $0x664] sm:$0xff]
        %v546 = vld [vmem:[#allocation5 + $0x66c] sm:$0xff]
        %v547 = vld [vmem:[#allocation5 + $0x674] sm:$0xf]
        %v548 = vld [vmem:[#allocation5 + $0x678] sm:$0xff]
        %v549 = vld [vmem:[#allocation5 + $0x680] sm:$0xff]
        %v550 = vld [vmem:[#allocation5 + $0x688] sm:$0xff]
        %v551 = vld [vmem:[#allocation5 + $0x690] sm:$0xff]
        %v552 = vld [vmem:[#allocation5 + $0x698] sm:$0xf]
        %v553 = vld [vmem:[#allocation5 + $0x69c] sm:$0xff]
        %v554 = vld [vmem:[#allocation5 + $0x6a4] sm:$0xff]
        %v555 = vld [vmem:[#allocation5 + $0x6ac] sm:$0xff]
        %v556 = vld [vmem:[#allocation5 + $0x6b4] sm:$0xff]
        %v557 = vld [vmem:[#allocation5 + $0x6bc] sm:$0xf]
        %v558 = vld [vmem:[#allocation7] sm:$0xff]
        %v559 = vld [vmem:[#allocation7 + $0x8] sm:$0xf]
        %v560 = vld [vmem:[#allocation7 + $0xc] sm:$0xff]
        %v561 = vld [vmem:[#allocation7 + $0x14] sm:$0xf]
        %v562 = vld [vmem:[#allocation7 + $0x18] sm:$0xff]
        %v563 = vld [vmem:[#allocation7 + $0x20] sm:$0xf]
        %v564 = vld [vmem:[#allocation7 + $0x24] sm:$0xff]
        %v565 = vld [vmem:[#allocation7 + $0x2c] sm:$0xf]
        %v566 = vld [vmem:[#allocation7 + $0x30] sm:$0xff]
        %v567 = vld [vmem:[#allocation7 + $0x38] sm:$0xf]
        %v568 = vld [vmem:[#allocation7 + $0x3c] sm:$0xff]
        %v569 = vld [vmem:[#allocation7 + $0x44] sm:$0xf]
        %v570 = vld [vmem:[#allocation7 + $0x48] sm:$0xff]
        %v571 = vld [vmem:[#allocation7 + $0x50] sm:$0xf]
        %v572 = vld [vmem:[#allocation7 + $0x54] sm:$0xff]
        %v573 = vld [vmem:[#allocation7 + $0x5c] sm:$0xf]
        %v574 = vld [vmem:[#allocation7 + $0x60] sm:$0xff]
        %v575 = vld [vmem:[#allocation7 + $0x68] sm:$0xf]
        %v576 = vld [vmem:[#allocation7 + $0x6c] sm:$0xff]
        %v577 = vld [vmem:[#allocation7 + $0x74] sm:$0xf]
        %v578 = vld [vmem:[#allocation7 + $0x78] sm:$0xff]
        %v579 = vld [vmem:[#allocation7 + $0x80] sm:$0xf]
        %v580 = vld [vmem:[#allocation7 + $0x84] sm:$0xff]
        %v581 = vld [vmem:[#allocation7 + $0x8c] sm:$0xf]
        %v582 = vld [vmem:[#allocation7 + $0x90] sm:$0xff]
        %v583 = vld [vmem:[#allocation7 + $0x98] sm:$0xf]
        %v584 = vld [vmem:[#allocation7 + $0x9c] sm:$0xff]
        %v585 = vld [vmem:[#allocation7 + $0xa4] sm:$0xf]
        %v586 = vld [vmem:[#allocation7 + $0xa8] sm:$0xff]
        %v587 = vld [vmem:[#allocation7 + $0xb0] sm:$0xf]
        %v588 = vld [vmem:[#allocation7 + $0xb4] sm:$0xff]
        %v589 = vld [vmem:[#allocation7 + $0xbc] sm:$0xf]
        %v590 = vld [vmem:[#allocation7 + $0xc0] sm:$0xff]
        %v591 = vld [vmem:[#allocation7 + $0xc8] sm:$0xf]
        %v592 = vld [vmem:[#allocation7 + $0xcc] sm:$0xff]
        %v593 = vld [vmem:[#allocation7 + $0xd4] sm:$0xf]
        %v594 = vld [vmem:[#allocation7 + $0xd8] sm:$0xff]
        %v595 = vld [vmem:[#allocation7 + $0xe0] sm:$0xf]
        %v596 = vld [vmem:[#allocation7 + $0xe4] sm:$0xff]
        %v597 = vld [vmem:[#allocation7 + $0xec] sm:$0xf]
        %v598 = vld [vmem:[#allocation7 + $0xf0] sm:$0xff]
        %v599 = vld [vmem:[#allocation7 + $0xf8] sm:$0xf]
        %v600 = vld [vmem:[#allocation7 + $0xfc] sm:$0xff]
        %v601 = vld [vmem:[#allocation7 + $0x104] sm:$0xf]
        %v602 = vld [vmem:[#allocation7 + $0x108] sm:$0xff]
        %v603 = vld [vmem:[#allocation7 + $0x110] sm:$0xf]
        %v604 = vld [vmem:[#allocation7 + $0x114] sm:$0xff]
        %v605 = vld [vmem:[#allocation7 + $0x11c] sm:$0xf]
        %v606 = vld [vmem:[#allocation7 + $0x120] sm:$0xff]
        %v607 = vld [vmem:[#allocation7 + $0x128] sm:$0xf]
        %v608 = vld [vmem:[#allocation7 + $0x12c] sm:$0xff]
        %v609 = vld [vmem:[#allocation7 + $0x134] sm:$0xf]
        %v610 = vld [vmem:[#allocation7 + $0x138] sm:$0xff]
        %v611 = vld [vmem:[#allocation7 + $0x140] sm:$0xf]
        %v612 = vld [vmem:[#allocation7 + $0x144] sm:$0xff]
        %v613 = vld [vmem:[#allocation7 + $0x14c] sm:$0xf]
        %v614 = vld [vmem:[#allocation7 + $0x150] sm:$0xff]
        %v615 = vld [vmem:[#allocation7 + $0x158] sm:$0xf]
        %v616 = vld [vmem:[#allocation7 + $0x15c] sm:$0xff]
        %v617 = vld [vmem:[#allocation7 + $0x164] sm:$0xf]
        %v618 = vld [vmem:[#allocation7 + $0x168] sm:$0xff]
        %v619 = vld [vmem:[#allocation7 + $0x170] sm:$0xf]
        %v620 = vld [vmem:[#allocation7 + $0x174] sm:$0xff]
        %v621 = vld [vmem:[#allocation7 + $0x17c] sm:$0xf]
        %v622 = vld [vmem:[#allocation7 + $0x180] sm:$0xff]
        %v623 = vld [vmem:[#allocation7 + $0x188] sm:$0xf]
        %v624 = vld [vmem:[#allocation7 + $0x18c] sm:$0xff]
        %v625 = vld [vmem:[#allocation7 + $0x194] sm:$0xf]
        %v626 = vld [vmem:[#allocation7 + $0x198] sm:$0xff]
        %v627 = vld [vmem:[#allocation7 + $0x1a0] sm:$0xf]
        %v628 = vld [vmem:[#allocation7 + $0x1a4] sm:$0xff]
        %v629 = vld [vmem:[#allocation7 + $0x1ac] sm:$0xf]
        %v630 = vld [vmem:[#allocation7 + $0x1b0] sm:$0xff]
        %v631 = vld [vmem:[#allocation7 + $0x1b8] sm:$0xf]
        %v632 = vld [vmem:[#allocation7 + $0x1bc] sm:$0xff]
        %v633 = vld [vmem:[#allocation7 + $0x1c4] sm:$0xf]
        %v634 = vld [vmem:[#allocation7 + $0x1c8] sm:$0xff]
        %v635 = vld [vmem:[#allocation7 + $0x1d0] sm:$0xf]
        %v636 = vld [vmem:[#allocation7 + $0x1d4] sm:$0xff]
        %v637 = vld [vmem:[#allocation7 + $0x1dc] sm:$0xf]
        %v638 = vld [vmem:[#allocation7 + $0x1e0] sm:$0xff]
        %v639 = vld [vmem:[#allocation7 + $0x1e8] sm:$0xf]
        %v640 = vld [vmem:[#allocation7 + $0x1ec] sm:$0xff]
        %v641 = vld [vmem:[#allocation7 + $0x1f4] sm:$0xf]
        %v642 = vld [vmem:[#allocation7 + $0x1f8] sm:$0xff]
        %v643 = vld [vmem:[#allocation7 + $0x200] sm:$0xf]
        %v644 = vld [vmem:[#allocation7 + $0x204] sm:$0xff]
        %v645 = vld [vmem:[#allocation7 + $0x20c] sm:$0xf]
        %v646 = vld [vmem:[#allocation7 + $0x210] sm:$0xff]
        %v647 = vld [vmem:[#allocation7 + $0x218] sm:$0xf]
        %v648 = vld [vmem:[#allocation7 + $0x21c] sm:$0xff]
        %v649 = vld [vmem:[#allocation7 + $0x224] sm:$0xf]
        %v650 = vld [vmem:[#allocation7 + $0x228] sm:$0xff]
        %v651 = vld [vmem:[#allocation7 + $0x230] sm:$0xf]
        %v652 = vld [vmem:[#allocation7 + $0x234] sm:$0xff]
        %v653 = vld [vmem:[#allocation7 + $0x23c] sm:$0xf]
        %v894 = vunpack.c.l.b16 %v318
        %v895 = vunpack.c.h.b16 %v318
        %v896 = vunpack.c.l.b16 %v319
        %v897 = vunpack.c.h.b16 %v319
        %v898 = vunpack.c.l.b16 %v320
        %v899 = vunpack.c.h.b16 %v320
        %v900 = vunpack.c.l.b16 %v321
        %v901 = vunpack.c.h.b16 %v321
        %v902 = vunpack.c.l.b16 %v322
        %v903 = vunpack.c.l.b16 %v323
        %v904 = vunpack.c.h.b16 %v323
        %v905 = vunpack.c.l.b16 %v324
        %v906 = vunpack.c.h.b16 %v324
        %v907 = vunpack.c.l.b16 %v325
        %v908 = vunpack.c.h.b16 %v325
        %v909 = vunpack.c.l.b16 %v326
        %v910 = vunpack.c.h.b16 %v326
        %v911 = vunpack.c.l.b16 %v327
        %v912 = vunpack.c.l.b16 %v328
        %v913 = vunpack.c.h.b16 %v328
        %v914 = vunpack.c.l.b16 %v329
        %v915 = vunpack.c.h.b16 %v329
        %v916 = vunpack.c.l.b16 %v330
        %v917 = vunpack.c.h.b16 %v330
        %v918 = vunpack.c.l.b16 %v331
        %v919 = vunpack.c.h.b16 %v331
        %v920 = vunpack.c.l.b16 %v332
        %v921 = vunpack.c.l.b16 %v333
        %v922 = vunpack.c.h.b16 %v333
        %v923 = vunpack.c.l.b16 %v334
        %v924 = vunpack.c.h.b16 %v334
        %v925 = vunpack.c.l.b16 %v335
        %v926 = vunpack.c.h.b16 %v335
        %v927 = vunpack.c.l.b16 %v336
        %v928 = vunpack.c.h.b16 %v336
        %v929 = vunpack.c.l.b16 %v337
        %v930 = vunpack.c.l.b16 %v338
        %v931 = vunpack.c.h.b16 %v338
        %v932 = vunpack.c.l.b16 %v339
        %v933 = vunpack.c.h.b16 %v339
        %v934 = vunpack.c.l.b16 %v340
        %v935 = vunpack.c.h.b16 %v340
        %v936 = vunpack.c.l.b16 %v341
        %v937 = vunpack.c.h.b16 %v341
        %v938 = vunpack.c.l.b16 %v342
        %v939 = vunpack.c.l.b16 %v343
        %v940 = vunpack.c.h.b16 %v343
        %v941 = vunpack.c.l.b16 %v344
        %v942 = vunpack.c.h.b16 %v344
        %v943 = vunpack.c.l.b16 %v345
        %v944 = vunpack.c.h.b16 %v345
        %v945 = vunpack.c.l.b16 %v346
        %v946 = vunpack.c.h.b16 %v346
        %v947 = vunpack.c.l.b16 %v347
        %v948 = vunpack.c.l.b16 %v348
        %v949 = vunpack.c.h.b16 %v348
        %v950 = vunpack.c.l.b16 %v349
        %v951 = vunpack.c.h.b16 %v349
        %v952 = vunpack.c.l.b16 %v350
        %v953 = vunpack.c.h.b16 %v350
        %v954 = vunpack.c.l.b16 %v351
        %v955 = vunpack.c.h.b16 %v351
        %v956 = vunpack.c.l.b16 %v352
        %v957 = vunpack.c.l.b16 %v353
        %v958 = vunpack.c.h.b16 %v353
        %v959 = vunpack.c.l.b16 %v354
        %v960 = vunpack.c.h.b16 %v354
        %v961 = vunpack.c.l.b16 %v355
        %v962 = vunpack.c.h.b16 %v355
        %v963 = vunpack.c.l.b16 %v356
        %v964 = vunpack.c.h.b16 %v356
        %v965 = vunpack.c.l.b16 %v357
        %v966 = vunpack.c.l.b16 %v358
        %v967 = vunpack.c.h.b16 %v358
        %v968 = vunpack.c.l.b16 %v359
        %v969 = vunpack.c.h.b16 %v359
        %v970 = vunpack.c.l.b16 %v360
        %v971 = vunpack.c.h.b16 %v360
        %v972 = vunpack.c.l.b16 %v361
        %v973 = vunpack.c.h.b16 %v361
        %v974 = vunpack.c.l.b16 %v362
        %v975 = vunpack.c.l.b16 %v363
        %v976 = vunpack.c.h.b16 %v363
        %v977 = vunpack.c.l.b16 %v364
        %v978 = vunpack.c.h.b16 %v364
        %v979 = vunpack.c.l.b16 %v365
        %v980 = vunpack.c.h.b16 %v365
        %v981 = vunpack.c.l.b16 %v366
        %v982 = vunpack.c.h.b16 %v366
        %v983 = vunpack.c.l.b16 %v367
        %v984 = vunpack.c.l.b16 %v368
        %v985 = vunpack.c.h.b16 %v368
        %v986 = vunpack.c.l.b16 %v369
        %v987 = vunpack.c.h.b16 %v369
        %v988 = vunpack.c.l.b16 %v370
        %v989 = vunpack.c.h.b16 %v370
        %v990 = vunpack.c.l.b16 %v371
        %v991 = vunpack.c.h.b16 %v371
        %v992 = vunpack.c.l.b16 %v372
        %v993 = vunpack.c.l.b16 %v373
        %v994 = vunpack.c.h.b16 %v373
        %v995 = vunpack.c.l.b16 %v374
        %v996 = vunpack.c.h.b16 %v374
        %v997 = vunpack.c.l.b16 %v375
        %v998 = vunpack.c.h.b16 %v375
        %v999 = vunpack.c.l.b16 %v376
        %v1000 = vunpack.c.h.b16 %v376
        %v1001 = vunpack.c.l.b16 %v377
        %v1002 = vunpack.c.l.b16 %v378
        %v1003 = vunpack.c.h.b16 %v378
        %v1004 = vunpack.c.l.b16 %v379
        %v1005 = vunpack.c.h.b16 %v379
        %v1006 = vunpack.c.l.b16 %v380
        %v1007 = vunpack.c.h.b16 %v380
        %v1008 = vunpack.c.l.b16 %v381
        %v1009 = vunpack.c.h.b16 %v381
        %v1010 = vunpack.c.l.b16 %v382
        %v1011 = vunpack.c.l.b16 %v383
        %v1012 = vunpack.c.h.b16 %v383
        %v1013 = vunpack.c.l.b16 %v384
        %v1014 = vunpack.c.h.b16 %v384
        %v1015 = vunpack.c.l.b16 %v385
        %v1016 = vunpack.c.h.b16 %v385
        %v1017 = vunpack.c.l.b16 %v386
        %v1018 = vunpack.c.h.b16 %v386
        %v1019 = vunpack.c.l.b16 %v387
        %v1020 = vunpack.c.l.b16 %v388
        %v1021 = vunpack.c.h.b16 %v388
        %v1022 = vunpack.c.l.b16 %v389
        %v1023 = vunpack.c.h.b16 %v389
        %v1024 = vunpack.c.l.b16 %v390
        %v1025 = vunpack.c.h.b16 %v390
        %v1026 = vunpack.c.l.b16 %v391
        %v1027 = vunpack.c.h.b16 %v391
        %v1028 = vunpack.c.l.b16 %v392
        %v1029 = vunpack.c.l.b16 %v393
        %v1030 = vunpack.c.h.b16 %v393
        %v1031 = vunpack.c.l.b16 %v394
        %v1032 = vunpack.c.h.b16 %v394
        %v1033 = vunpack.c.l.b16 %v395
        %v1034 = vunpack.c.h.b16 %v395
        %v1035 = vunpack.c.l.b16 %v396
        %v1036 = vunpack.c.h.b16 %v396
        %v1037 = vunpack.c.l.b16 %v397
        %v1038 = vunpack.c.l.b16 %v398
        %v1039 = vunpack.c.h.b16 %v398
        %v1040 = vunpack.c.l.b16 %v399
        %v1041 = vunpack.c.h.b16 %v399
        %v1042 = vunpack.c.l.b16 %v400
        %v1043 = vunpack.c.h.b16 %v400
        %v1044 = vunpack.c.l.b16 %v401
        %v1045 = vunpack.c.h.b16 %v401
        %v1046 = vunpack.c.l.b16 %v402
        %v1047 = vunpack.c.l.b16 %v403
        %v1048 = vunpack.c.h.b16 %v403
        %v1049 = vunpack.c.l.b16 %v404
        %v1050 = vunpack.c.h.b16 %v404
        %v1051 = vunpack.c.l.b16 %v405
        %v1052 = vunpack.c.h.b16 %v405
        %v1053 = vunpack.c.l.b16 %v406
        %v1054 = vunpack.c.h.b16 %v406
        %v1055 = vunpack.c.l.b16 %v407
        %v1056 = vunpack.c.l.b16 %v408
        %v1057 = vunpack.c.h.b16 %v408
        %v1058 = vunpack.c.l.b16 %v409
        %v1059 = vunpack.c.h.b16 %v409
        %v1060 = vunpack.c.l.b16 %v410
        %v1061 = vunpack.c.h.b16 %v410
        %v1062 = vunpack.c.l.b16 %v411
        %v1063 = vunpack.c.h.b16 %v411
        %v1064 = vunpack.c.l.b16 %v412
        %v1065 = vunpack.c.l.b16 %v413
        %v1066 = vunpack.c.h.b16 %v413
        %v1067 = vunpack.c.l.b16 %v414
        %v1068 = vunpack.c.h.b16 %v414
        %v1069 = vunpack.c.l.b16 %v415
        %v1070 = vunpack.c.h.b16 %v415
        %v1071 = vunpack.c.l.b16 %v416
        %v1072 = vunpack.c.h.b16 %v416
        %v1073 = vunpack.c.l.b16 %v417
        %v1074 = vunpack.c.l.b16 %v418
        %v1075 = vunpack.c.h.b16 %v418
        %v1076 = vunpack.c.l.b16 %v419
        %v1077 = vunpack.c.h.b16 %v419
        %v1078 = vunpack.c.l.b16 %v420
        %v1079 = vunpack.c.h.b16 %v420
        %v1080 = vunpack.c.l.b16 %v421
        %v1081 = vunpack.c.h.b16 %v421
        %v1082 = vunpack.c.l.b16 %v422
        %v1083 = vunpack.c.l.b16 %v423
        %v1084 = vunpack.c.h.b16 %v423
        %v1085 = vunpack.c.l.b16 %v424
        %v1086 = vunpack.c.h.b16 %v424
        %v1087 = vunpack.c.l.b16 %v425
        %v1088 = vunpack.c.h.b16 %v425
        %v1089 = vunpack.c.l.b16 %v426
        %v1090 = vunpack.c.h.b16 %v426
        %v1091 = vunpack.c.l.b16 %v427
        %v1092 = vunpack.c.l.b16 %v428
        %v1093 = vunpack.c.h.b16 %v428
        %v1094 = vunpack.c.l.b16 %v429
        %v1095 = vunpack.c.h.b16 %v429
        %v1096 = vunpack.c.l.b16 %v430
        %v1097 = vunpack.c.h.b16 %v430
        %v1098 = vunpack.c.l.b16 %v431
        %v1099 = vunpack.c.h.b16 %v431
        %v1100 = vunpack.c.l.b16 %v432
        %v1101 = vunpack.c.l.b16 %v433
        %v1102 = vunpack.c.h.b16 %v433
        %v1103 = vunpack.c.l.b16 %v434
        %v1104 = vunpack.c.h.b16 %v434
        %v1105 = vunpack.c.l.b16 %v435
        %v1106 = vunpack.c.h.b16 %v435
        %v1107 = vunpack.c.l.b16 %v436
        %v1108 = vunpack.c.h.b16 %v436
        %v1109 = vunpack.c.l.b16 %v437
        %v1110 = vunpack.c.l.b16 %v438
        %v1111 = vunpack.c.h.b16 %v438
        %v1112 = vunpack.c.l.b16 %v439
        %v1113 = vunpack.c.h.b16 %v439
        %v1114 = vunpack.c.l.b16 %v440
        %v1115 = vunpack.c.h.b16 %v440
        %v1116 = vunpack.c.l.b16 %v441
        %v1117 = vunpack.c.h.b16 %v441
        %v1118 = vunpack.c.l.b16 %v442
        %v1119 = vunpack.c.l.b16 %v443
        %v1120 = vunpack.c.h.b16 %v443
        %v1121 = vunpack.c.l.b16 %v444
        %v1122 = vunpack.c.h.b16 %v444
        %v1123 = vunpack.c.l.b16 %v445
        %v1124 = vunpack.c.h.b16 %v445
        %v1125 = vunpack.c.l.b16 %v446
        %v1126 = vunpack.c.h.b16 %v446
        %v1127 = vunpack.c.l.b16 %v447
        %v1128 = vunpack.c.l.b16 %v448
        %v1129 = vunpack.c.h.b16 %v448
        %v1130 = vunpack.c.l.b16 %v449
        %v1131 = vunpack.c.h.b16 %v449
        %v1132 = vunpack.c.l.b16 %v450
        %v1133 = vunpack.c.h.b16 %v450
        %v1134 = vunpack.c.l.b16 %v451
        %v1135 = vunpack.c.h.b16 %v451
        %v1136 = vunpack.c.l.b16 %v452
        %v1137 = vunpack.c.l.b16 %v453
        %v1138 = vunpack.c.h.b16 %v453
        %v1139 = vunpack.c.l.b16 %v454
        %v1140 = vunpack.c.h.b16 %v454
        %v1141 = vunpack.c.l.b16 %v455
        %v1142 = vunpack.c.h.b16 %v455
        %v1143 = vunpack.c.l.b16 %v456
        %v1144 = vunpack.c.h.b16 %v456
        %v1145 = vunpack.c.l.b16 %v457
        %v1146 = vunpack.c.l.b16 %v458
        %v1147 = vunpack.c.h.b16 %v458
        %v1148 = vunpack.c.l.b16 %v459
        %v1149 = vunpack.c.h.b16 %v459
        %v1150 = vunpack.c.l.b16 %v460
        %v1151 = vunpack.c.h.b16 %v460
        %v1152 = vunpack.c.l.b16 %v461
        %v1153 = vunpack.c.h.b16 %v461
        %v1154 = vunpack.c.l.b16 %v462
        %v1155 = vunpack.c.l.b16 %v463
        %v1156 = vunpack.c.h.b16 %v463
        %v1157 = vunpack.c.l.b16 %v464
        %v1158 = vunpack.c.h.b16 %v464
        %v1159 = vunpack.c.l.b16 %v465
        %v1160 = vunpack.c.h.b16 %v465
        %v1161 = vunpack.c.l.b16 %v466
        %v1162 = vunpack.c.h.b16 %v466
        %v1163 = vunpack.c.l.b16 %v467
        %v1164 = vunpack.c.l.b16 %v468
        %v1165 = vunpack.c.h.b16 %v468
        %v1166 = vunpack.c.l.b16 %v469
        %v1167 = vunpack.c.h.b16 %v469
        %v1168 = vunpack.c.l.b16 %v470
        %v1169 = vunpack.c.h.b16 %v470
        %v1170 = vunpack.c.l.b16 %v471
        %v1171 = vunpack.c.h.b16 %v471
        %v1172 = vunpack.c.l.b16 %v472
        %v1173 = vunpack.c.l.b16 %v473
        %v1174 = vunpack.c.h.b16 %v473
        %v1175 = vunpack.c.l.b16 %v474
        %v1176 = vunpack.c.h.b16 %v474
        %v1177 = vunpack.c.l.b16 %v475
        %v1178 = vunpack.c.h.b16 %v475
        %v1179 = vunpack.c.l.b16 %v476
        %v1180 = vunpack.c.h.b16 %v476
        %v1181 = vunpack.c.l.b16 %v477
        %v1182 = vunpack.c.l.b16 %v478
        %v1183 = vunpack.c.h.b16 %v478
        %v1184 = vunpack.c.l.b16 %v479
        %v1185 = vunpack.c.h.b16 %v479
        %v1186 = vunpack.c.l.b16 %v480
        %v1187 = vunpack.c.h.b16 %v480
        %v1188 = vunpack.c.l.b16 %v481
        %v1189 = vunpack.c.h.b16 %v481
        %v1190 = vunpack.c.l.b16 %v482
        %v1191 = vunpack.c.l.b16 %v483
        %v1192 = vunpack.c.h.b16 %v483
        %v1193 = vunpack.c.l.b16 %v484
        %v1194 = vunpack.c.h.b16 %v484
        %v1195 = vunpack.c.l.b16 %v485
        %v1196 = vunpack.c.h.b16 %v485
        %v1197 = vunpack.c.l.b16 %v486
        %v1198 = vunpack.c.h.b16 %v486
        %v1199 = vunpack.c.l.b16 %v487
        %v1200 = vunpack.c.l.b16 %v488
        %v1201 = vunpack.c.h.b16 %v488
        %v1202 = vunpack.c.l.b16 %v489
        %v1203 = vunpack.c.h.b16 %v489
        %v1204 = vunpack.c.l.b16 %v490
        %v1205 = vunpack.c.h.b16 %v490
        %v1206 = vunpack.c.l.b16 %v491
        %v1207 = vunpack.c.h.b16 %v491
        %v1208 = vunpack.c.l.b16 %v492
        %v1209 = vunpack.c.l.b16 %v493
        %v1210 = vunpack.c.h.b16 %v493
        %v1211 = vunpack.c.l.b16 %v494
        %v1212 = vunpack.c.h.b16 %v494
        %v1213 = vunpack.c.l.b16 %v495
        %v1214 = vunpack.c.h.b16 %v495
        %v1215 = vunpack.c.l.b16 %v496
        %v1216 = vunpack.c.h.b16 %v496
        %v1217 = vunpack.c.l.b16 %v497
        %v1218 = vunpack.c.l.b16 %v498
        %v1219 = vunpack.c.h.b16 %v498
        %v1220 = vunpack.c.l.b16 %v499
        %v1221 = vunpack.c.h.b16 %v499
        %v1222 = vunpack.c.l.b16 %v500
        %v1223 = vunpack.c.h.b16 %v500
        %v1224 = vunpack.c.l.b16 %v501
        %v1225 = vunpack.c.h.b16 %v501
        %v1226 = vunpack.c.l.b16 %v502
        %v1227 = vunpack.c.l.b16 %v503
        %v1228 = vunpack.c.h.b16 %v503
        %v1229 = vunpack.c.l.b16 %v504
        %v1230 = vunpack.c.h.b16 %v504
        %v1231 = vunpack.c.l.b16 %v505
        %v1232 = vunpack.c.h.b16 %v505
        %v1233 = vunpack.c.l.b16 %v506
        %v1234 = vunpack.c.h.b16 %v506
        %v1235 = vunpack.c.l.b16 %v507
        %v1236 = vunpack.c.l.b16 %v508
        %v1237 = vunpack.c.h.b16 %v508
        %v1238 = vunpack.c.l.b16 %v509
        %v1239 = vunpack.c.h.b16 %v509
        %v1240 = vunpack.c.l.b16 %v510
        %v1241 = vunpack.c.h.b16 %v510
        %v1242 = vunpack.c.l.b16 %v511
        %v1243 = vunpack.c.h.b16 %v511
        %v1244 = vunpack.c.l.b16 %v512
        %v1245 = vunpack.c.l.b16 %v513
        %v1246 = vunpack.c.h.b16 %v513
        %v1247 = vunpack.c.l.b16 %v514
        %v1248 = vunpack.c.h.b16 %v514
        %v1249 = vunpack.c.l.b16 %v515
        %v1250 = vunpack.c.h.b16 %v515
        %v1251 = vunpack.c.l.b16 %v516
        %v1252 = vunpack.c.h.b16 %v516
        %v1253 = vunpack.c.l.b16 %v517
        %v1254 = vunpack.c.l.b16 %v518
        %v1255 = vunpack.c.h.b16 %v518
        %v1256 = vunpack.c.l.b16 %v519
        %v1257 = vunpack.c.h.b16 %v519
        %v1258 = vunpack.c.l.b16 %v520
        %v1259 = vunpack.c.h.b16 %v520
        %v1260 = vunpack.c.l.b16 %v521
        %v1261 = vunpack.c.h.b16 %v521
        %v1262 = vunpack.c.l.b16 %v522
        %v1263 = vunpack.c.l.b16 %v523
        %v1264 = vunpack.c.h.b16 %v523
        %v1265 = vunpack.c.l.b16 %v524
        %v1266 = vunpack.c.h.b16 %v524
        %v1267 = vunpack.c.l.b16 %v525
        %v1268 = vunpack.c.h.b16 %v525
        %v1269 = vunpack.c.l.b16 %v526
        %v1270 = vunpack.c.h.b16 %v526
        %v1271 = vunpack.c.l.b16 %v527
        %v1272 = vunpack.c.l.b16 %v528
        %v1273 = vunpack.c.h.b16 %v528
        %v1274 = vunpack.c.l.b16 %v529
        %v1275 = vunpack.c.h.b16 %v529
        %v1276 = vunpack.c.l.b16 %v530
        %v1277 = vunpack.c.h.b16 %v530
        %v1278 = vunpack.c.l.b16 %v531
        %v1279 = vunpack.c.h.b16 %v531
        %v1280 = vunpack.c.l.b16 %v532
        %v1281 = vunpack.c.l.b16 %v533
        %v1282 = vunpack.c.h.b16 %v533
        %v1283 = vunpack.c.l.b16 %v534
        %v1284 = vunpack.c.h.b16 %v534
        %v1285 = vunpack.c.l.b16 %v535
        %v1286 = vunpack.c.h.b16 %v535
        %v1287 = vunpack.c.l.b16 %v536
        %v1288 = vunpack.c.h.b16 %v536
        %v1289 = vunpack.c.l.b16 %v537
        %v1290 = vunpack.c.l.b16 %v538
        %v1291 = vunpack.c.h.b16 %v538
        %v1292 = vunpack.c.l.b16 %v539
        %v1293 = vunpack.c.h.b16 %v539
        %v1294 = vunpack.c.l.b16 %v540
        %v1295 = vunpack.c.h.b16 %v540
        %v1296 = vunpack.c.l.b16 %v541
        %v1297 = vunpack.c.h.b16 %v541
        %v1298 = vunpack.c.l.b16 %v542
        %v1299 = vunpack.c.l.b16 %v543
        %v1300 = vunpack.c.h.b16 %v543
        %v1301 = vunpack.c.l.b16 %v544
        %v1302 = vunpack.c.h.b16 %v544
        %v1303 = vunpack.c.l.b16 %v545
        %v1304 = vunpack.c.h.b16 %v545
        %v1305 = vunpack.c.l.b16 %v546
        %v1306 = vunpack.c.h.b16 %v546
        %v1307 = vunpack.c.l.b16 %v547
        %v1308 = vunpack.c.l.b16 %v548
        %v1309 = vunpack.c.h.b16 %v548
        %v1310 = vunpack.c.l.b16 %v549
        %v1311 = vunpack.c.h.b16 %v549
        %v1312 = vunpack.c.l.b16 %v550
        %v1313 = vunpack.c.h.b16 %v550
        %v1314 = vunpack.c.l.b16 %v551
        %v1315 = vunpack.c.h.b16 %v551
        %v1316 = vunpack.c.l.b16 %v552
        %v1317 = vunpack.c.l.b16 %v553
        %v1318 = vunpack.c.h.b16 %v553
        %v1319 = vunpack.c.l.b16 %v554
        %v1320 = vunpack.c.h.b16 %v554
        %v1321 = vunpack.c.l.b16 %v555
        %v1322 = vunpack.c.h.b16 %v555
        %v1323 = vunpack.c.l.b16 %v556
        %v1324 = vunpack.c.h.b16 %v556
        %v1325 = vunpack.c.l.b16 %v557
        %v1326 = vpack.c.b16 %v903, %v894
        %v1327 = vpack.c.b16 %v904, %v895
        %v1328 = vpack.c.b16 %v905, %v896
        %v1329 = vpack.c.b16 %v906, %v897
        %v1330 = vpack.c.b16 %v907, %v898
        %v1331 = vpack.c.b16 %v908, %v899
        %v1332 = vpack.c.b16 %v909, %v900
        %v1333 = vpack.c.b16 %v910, %v901
        %v1334 = vpack.c.b16 %v911, %v902
        %v1335 = vpack.c.b16 %v921, %v912
        %v1336 = vpack.c.b16 %v922, %v913
        %v1337 = vpack.c.b16 %v923, %v914
        %v1338 = vpack.c.b16 %v924, %v915
        %v1339 = vpack.c.b16 %v925, %v916
        %v1340 = vpack.c.b16 %v926, %v917
        %v1341 = vpack.c.b16 %v927, %v918
        %v1342 = vpack.c.b16 %v928, %v919
        %v1343 = vpack.c.b16 %v929, %v920
        %v1344 = vpack.c.b16 %v939, %v930
        %v1345 = vpack.c.b16 %v940, %v931
        %v1346 = vpack.c.b16 %v941, %v932
        %v1347 = vpack.c.b16 %v942, %v933
        %v1348 = vpack.c.b16 %v943, %v934
        %v1349 = vpack.c.b16 %v944, %v935
        %v1350 = vpack.c.b16 %v945, %v936
        %v1351 = vpack.c.b16 %v946, %v937
        %v1352 = vpack.c.b16 %v947, %v938
        %v1353 = vpack.c.b16 %v957, %v948
        %v1354 = vpack.c.b16 %v958, %v949
        %v1355 = vpack.c.b16 %v959, %v950
        %v1356 = vpack.c.b16 %v960, %v951
        %v1357 = vpack.c.b16 %v961, %v952
        %v1358 = vpack.c.b16 %v962, %v953
        %v1359 = vpack.c.b16 %v963, %v954
        %v1360 = vpack.c.b16 %v964, %v955
        %v1361 = vpack.c.b16 %v965, %v956
        %v1362 = vpack.c.b16 %v975, %v966
        %v1363 = vpack.c.b16 %v976, %v967
        %v1364 = vpack.c.b16 %v977, %v968
        %v1365 = vpack.c.b16 %v978, %v969
        %v1366 = vpack.c.b16 %v979, %v970
        %v1367 = vpack.c.b16 %v980, %v971
        %v1368 = vpack.c.b16 %v981, %v972
        %v1369 = vpack.c.b16 %v982, %v973
        %v1370 = vpack.c.b16 %v983, %v974
        %v1371 = vpack.c.b16 %v993, %v984
        %v1372 = vpack.c.b16 %v994, %v985
        %v1373 = vpack.c.b16 %v995, %v986
        %v1374 = vpack.c.b16 %v996, %v987
        %v1375 = vpack.c.b16 %v997, %v988
        %v1376 = vpack.c.b16 %v998, %v989
        %v1377 = vpack.c.b16 %v999, %v990
        %v1378 = vpack.c.b16 %v1000, %v991
        %v1379 = vpack.c.b16 %v1001, %v992
        %v1380 = vpack.c.b16 %v1011, %v1002
        %v1381 = vpack.c.b16 %v1012, %v1003
        %v1382 = vpack.c.b16 %v1013, %v1004
        %v1383 = vpack.c.b16 %v1014, %v1005
        %v1384 = vpack.c.b16 %v1015, %v1006
        %v1385 = vpack.c.b16 %v1016, %v1007
        %v1386 = vpack.c.b16 %v1017, %v1008
        %v1387 = vpack.c.b16 %v1018, %v1009
        %v1388 = vpack.c.b16 %v1019, %v1010
        %v1389 = vpack.c.b16 %v1029, %v1020
        %v1390 = vpack.c.b16 %v1030, %v1021
        %v1391 = vpack.c.b16 %v1031, %v1022
        %v1392 = vpack.c.b16 %v1032, %v1023
        %v1393 = vpack.c.b16 %v1033, %v1024
        %v1394 = vpack.c.b16 %v1034, %v1025
        %v1395 = vpack.c.b16 %v1035, %v1026
        %v1396 = vpack.c.b16 %v1036, %v1027
        %v1397 = vpack.c.b16 %v1037, %v1028
        %v1398 = vpack.c.b16 %v1047, %v1038
        %v1399 = vpack.c.b16 %v1048, %v1039
        %v1400 = vpack.c.b16 %v1049, %v1040
        %v1401 = vpack.c.b16 %v1050, %v1041
        %v1402 = vpack.c.b16 %v1051, %v1042
        %v1403 = vpack.c.b16 %v1052, %v1043
        %v1404 = vpack.c.b16 %v1053, %v1044
        %v1405 = vpack.c.b16 %v1054, %v1045
        %v1406 = vpack.c.b16 %v1055, %v1046
        %v1407 = vpack.c.b16 %v1065, %v1056
        %v1408 = vpack.c.b16 %v1066, %v1057
        %v1409 = vpack.c.b16 %v1067, %v1058
        %v1410 = vpack.c.b16 %v1068, %v1059
        %v1411 = vpack.c.b16 %v1069, %v1060
        %v1412 = vpack.c.b16 %v1070, %v1061
        %v1413 = vpack.c.b16 %v1071, %v1062
        %v1414 = vpack.c.b16 %v1072, %v1063
        %v1415 = vpack.c.b16 %v1073, %v1064
        %v1416 = vpack.c.b16 %v1083, %v1074
        %v1417 = vpack.c.b16 %v1084, %v1075
        %v1418 = vpack.c.b16 %v1085, %v1076
        %v1419 = vpack.c.b16 %v1086, %v1077
        %v1420 = vpack.c.b16 %v1087, %v1078
        %v1421 = vpack.c.b16 %v1088, %v1079
        %v1422 = vpack.c.b16 %v1089, %v1080
        %v1423 = vpack.c.b16 %v1090, %v1081
        %v1424 = vpack.c.b16 %v1091, %v1082
        %v1425 = vpack.c.b16 %v1101, %v1092
        %v1426 = vpack.c.b16 %v1102, %v1093
        %v1427 = vpack.c.b16 %v1103, %v1094
        %v1428 = vpack.c.b16 %v1104, %v1095
        %v1429 = vpack.c.b16 %v1105, %v1096
        %v1430 = vpack.c.b16 %v1106, %v1097
        %v1431 = vpack.c.b16 %v1107, %v1098
        %v1432 = vpack.c.b16 %v1108, %v1099
        %v1433 = vpack.c.b16 %v1109, %v1100
        %v1434 = vpack.c.b16 %v1119, %v1110
        %v1435 = vpack.c.b16 %v1120, %v1111
        %v1436 = vpack.c.b16 %v1121, %v1112
        %v1437 = vpack.c.b16 %v1122, %v1113
        %v1438 = vpack.c.b16 %v1123, %v1114
        %v1439 = vpack.c.b16 %v1124, %v1115
        %v1440 = vpack.c.b16 %v1125, %v1116
        %v1441 = vpack.c.b16 %v1126, %v1117
        %v1442 = vpack.c.b16 %v1127, %v1118
        %v1443 = vpack.c.b16 %v1137, %v1128
        %v1444 = vpack.c.b16 %v1138, %v1129
        %v1445 = vpack.c.b16 %v1139, %v1130
        %v1446 = vpack.c.b16 %v1140, %v1131
        %v1447 = vpack.c.b16 %v1141, %v1132
        %v1448 = vpack.c.b16 %v1142, %v1133
        %v1449 = vpack.c.b16 %v1143, %v1134
        %v1450 = vpack.c.b16 %v1144, %v1135
        %v1451 = vpack.c.b16 %v1145, %v1136
        %v1452 = vpack.c.b16 %v1155, %v1146
        %v1453 = vpack.c.b16 %v1156, %v1147
        %v1454 = vpack.c.b16 %v1157, %v1148
        %v1455 = vpack.c.b16 %v1158, %v1149
        %v1456 = vpack.c.b16 %v1159, %v1150
        %v1457 = vpack.c.b16 %v1160, %v1151
        %v1458 = vpack.c.b16 %v1161, %v1152
        %v1459 = vpack.c.b16 %v1162, %v1153
        %v1460 = vpack.c.b16 %v1163, %v1154
        %v1461 = vpack.c.b16 %v1173, %v1164
        %v1462 = vpack.c.b16 %v1174, %v1165
        %v1463 = vpack.c.b16 %v1175, %v1166
        %v1464 = vpack.c.b16 %v1176, %v1167
        %v1465 = vpack.c.b16 %v1177, %v1168
        %v1466 = vpack.c.b16 %v1178, %v1169
        %v1467 = vpack.c.b16 %v1179, %v1170
        %v1468 = vpack.c.b16 %v1180, %v1171
        %v1469 = vpack.c.b16 %v1181, %v1172
        %v1470 = vpack.c.b16 %v1191, %v1182
        %v1471 = vpack.c.b16 %v1192, %v1183
        %v1472 = vpack.c.b16 %v1193, %v1184
        %v1473 = vpack.c.b16 %v1194, %v1185
        %v1474 = vpack.c.b16 %v1195, %v1186
        %v1475 = vpack.c.b16 %v1196, %v1187
        %v1476 = vpack.c.b16 %v1197, %v1188
        %v1477 = vpack.c.b16 %v1198, %v1189
        %v1478 = vpack.c.b16 %v1199, %v1190
        %v1479 = vpack.c.b16 %v1209, %v1200
        %v1480 = vpack.c.b16 %v1210, %v1201
        %v1481 = vpack.c.b16 %v1211, %v1202
        %v1482 = vpack.c.b16 %v1212, %v1203
        %v1483 = vpack.c.b16 %v1213, %v1204
        %v1484 = vpack.c.b16 %v1214, %v1205
        %v1485 = vpack.c.b16 %v1215, %v1206
        %v1486 = vpack.c.b16 %v1216, %v1207
        %v1487 = vpack.c.b16 %v1217, %v1208
        %v1488 = vpack.c.b16 %v1227, %v1218
        %v1489 = vpack.c.b16 %v1228, %v1219
        %v1490 = vpack.c.b16 %v1229, %v1220
        %v1491 = vpack.c.b16 %v1230, %v1221
        %v1492 = vpack.c.b16 %v1231, %v1222
        %v1493 = vpack.c.b16 %v1232, %v1223
        %v1494 = vpack.c.b16 %v1233, %v1224
        %v1495 = vpack.c.b16 %v1234, %v1225
        %v1496 = vpack.c.b16 %v1235, %v1226
        %v1497 = vpack.c.b16 %v1245, %v1236
        %v1498 = vpack.c.b16 %v1246, %v1237
        %v1499 = vpack.c.b16 %v1247, %v1238
        %v1500 = vpack.c.b16 %v1248, %v1239
        %v1501 = vpack.c.b16 %v1249, %v1240
        %v1502 = vpack.c.b16 %v1250, %v1241
        %v1503 = vpack.c.b16 %v1251, %v1242
        %v1504 = vpack.c.b16 %v1252, %v1243
        %v1505 = vpack.c.b16 %v1253, %v1244
        %v1506 = vpack.c.b16 %v1263, %v1254
        %v1507 = vpack.c.b16 %v1264, %v1255
        %v1508 = vpack.c.b16 %v1265, %v1256
        %v1509 = vpack.c.b16 %v1266, %v1257
        %v1510 = vpack.c.b16 %v1267, %v1258
        %v1511 = vpack.c.b16 %v1268, %v1259
        %v1512 = vpack.c.b16 %v1269, %v1260
        %v1513 = vpack.c.b16 %v1270, %v1261
        %v1514 = vpack.c.b16 %v1271, %v1262
        %v1515 = vpack.c.b16 %v1281, %v1272
        %v1516 = vpack.c.b16 %v1282, %v1273
        %v1517 = vpack.c.b16 %v1283, %v1274
        %v1518 = vpack.c.b16 %v1284, %v1275
        %v1519 = vpack.c.b16 %v1285, %v1276
        %v1520 = vpack.c.b16 %v1286, %v1277
        %v1521 = vpack.c.b16 %v1287, %v1278
        %v1522 = vpack.c.b16 %v1288, %v1279
        %v1523 = vpack.c.b16 %v1289, %v1280
        %v1524 = vpack.c.b16 %v1299, %v1290
        %v1525 = vpack.c.b16 %v1300, %v1291
        %v1526 = vpack.c.b16 %v1301, %v1292
        %v1527 = vpack.c.b16 %v1302, %v1293
        %v1528 = vpack.c.b16 %v1303, %v1294
        %v1529 = vpack.c.b16 %v1304, %v1295
        %v1530 = vpack.c.b16 %v1305, %v1296
        %v1531 = vpack.c.b16 %v1306, %v1297
        %v1532 = vpack.c.b16 %v1307, %v1298
        %v1533 = vpack.c.b16 %v1317, %v1308
        %v1534 = vpack.c.b16 %v1318, %v1309
        %v1535 = vpack.c.b16 %v1319, %v1310
        %v1536 = vpack.c.b16 %v1320, %v1311
        %v1537 = vpack.c.b16 %v1321, %v1312
        %v1538 = vpack.c.b16 %v1322, %v1313
        %v1539 = vpack.c.b16 %v1323, %v1314
        %v1540 = vpack.c.b16 %v1324, %v1315
        %v1541 = vpack.c.b16 %v1325, %v1316
        %1758 = vmatprep.subr.bf16.mxu0 %v1390
        %1759 = vmatpush1.bf16.msra.mxu0 %v1389
        %1760 = vmatprep.subr.bf16.mxu0 %v1381
        %1761 = vmatpush1.bf16.msra.mxu0 %v1380
        %1762 = vmatprep.subr.bf16.mxu0 %v1372
        %1763 = vmatpush1.bf16.msra.mxu0 %v1371
        %1764 = vmatprep.subr.bf16.mxu0 %v1363
        %1765 = vmatpush1.bf16.msra.mxu0 %v1362
        %1766 = vmatprep.subr.bf16.mxu0 %v1354
        %1767 = vmatpush1.bf16.msra.mxu0 %v1353
        %1768 = vmatprep.subr.bf16.mxu0 %v1345
        %1769 = vmatpush1.bf16.msra.mxu0 %v1344
        %1770 = vmatprep.subr.bf16.mxu0 %v1336
        %1771 = vmatpush1.bf16.msra.mxu0 %v1335
        %1772 = vmatprep.subr.bf16.mxu0 %v1327
        %1773 = vmatpush1.bf16.msra.mxu0 %v1326
        %1774 = vmatprep.subr.bf16.mxu0 %v1462
        %1775 = vmatpush2.bf16.msra.mxu0 %v1461
        %1776 = vmatprep.subr.bf16.mxu0 %v1453
        %1777 = vmatpush2.bf16.msra.mxu0 %v1452
        %1778 = vmatprep.subr.bf16.mxu0 %v1444
        %1779 = vmatpush2.bf16.msra.mxu0 %v1443
        %1780 = vmatprep.subr.bf16.mxu0 %v1435
        %1781 = vmatpush2.bf16.msra.mxu0 %v1434
        %1782 = vmatprep.subr.bf16.mxu0 %v1426
        %1783 = vmatpush2.bf16.msra.mxu0 %v1425
        %1784 = vmatprep.subr.bf16.mxu0 %v1417
        %1785 = vmatpush2.bf16.msra.mxu0 %v1416
        %1786 = vmatprep.subr.bf16.mxu0 %v1408
        %1787 = vmatpush2.bf16.msra.mxu0 %v1407
        %1788 = vmatprep.subr.bf16.mxu0 %v1399
        %1789 = vmatpush2.bf16.msra.mxu0 %v1398
        %1790 = vmatprep.mubr.bf16.mxu0 %v295
        %1791 = vmatmul.mubr.bf16.gmra.mxu0 %v294
        %v1792 = vpop.f32.mrf.mxu0
        %v1793 = vadd.f32 0.0, %v1792
        %v1794 = vpop.f32.mrf.mxu0
        %v1795 = vadd.f32 0.0, %v1794
        %v1796 = vpop.f32.mrf.mxu0
        %v1797 = vadd.f32 0.0, %v1796
        %v1798 = vpop.f32.mrf.mxu0
        %v1799 = vadd.f32 0.0, %v1798
        %1800 = vmatprep.mubr.bf16.mxu0 %v298
        %1801 = vmatmul.mubr.bf16.gmra.mxu0 %v297
        %v1802 = vpop.f32.mrf.mxu0
        %v1803 = vadd.f32 0.0, %v1802
        %v1804 = vpop.f32.mrf.mxu0
        %v1805 = vadd.f32 0.0, %v1804
        %v1806 = vpop.f32.mrf.mxu0
        %v1807 = vadd.f32 0.0, %v1806
        %v1808 = vpop.f32.mrf.mxu0
        %v1809 = vadd.f32 0.0, %v1808
        %1810 = vmatprep.mubr.bf16.mxu0 %v301
        %1811 = vmatmul.mubr.bf16.gmra.mxu0 %v300
        %v1812 = vpop.f32.mrf.mxu0
        %v1813 = vadd.f32 0.0, %v1812
        %v1814 = vpop.f32.mrf.mxu0
        %v1815 = vadd.f32 0.0, %v1814
        %v1816 = vpop.f32.mrf.mxu0
        %v1817 = vadd.f32 0.0, %v1816
        %v1818 = vpop.f32.mrf.mxu0
        %v1819 = vadd.f32 0.0, %v1818
        %1820 = vmatprep.mubr.bf16.mxu0 %v304
        %1821 = vmatmul.mubr.bf16.gmra.mxu0 %v303
        %v1822 = vpop.f32.mrf.mxu0
        %v1823 = vadd.f32 0.0, %v1822
        %v1824 = vpop.f32.mrf.mxu0
        %v1825 = vadd.f32 0.0, %v1824
        %v1826 = vpop.f32.mrf.mxu0
        %v1827 = vadd.f32 0.0, %v1826
        %v1828 = vpop.f32.mrf.mxu0
        %v1829 = vadd.f32 0.0, %v1828
        %1830 = vmatprep.mubr.bf16.mxu0 %v307
        %1831 = vmatmul.mubr.bf16.gmra.mxu0 %v306
        %v1832 = vpop.f32.mrf.mxu0
        %v1833 = vadd.f32 0.0, %v1832
        %v1834 = vpop.f32.mrf.mxu0
        %v1835 = vadd.f32 0.0, %v1834
        %v1836 = vpop.f32.mrf.mxu0
        %v1837 = vadd.f32 0.0, %v1836
        %v1838 = vpop.f32.mrf.mxu0
        %v1839 = vadd.f32 0.0, %v1838
        %1840 = vmatprep.mubr.bf16.mxu0 %v310
        %1841 = vmatmul.mubr.bf16.gmra.mxu0 %v309
        %v1842 = vpop.f32.mrf.mxu0
        %v1843 = vadd.f32 0.0, %v1842
        %v1844 = vpop.f32.mrf.mxu0
        %v1845 = vadd.f32 0.0, %v1844
        %v1846 = vpop.f32.mrf.mxu0
        %v1847 = vadd.f32 0.0, %v1846
        %v1848 = vpop.f32.mrf.mxu0
        %v1849 = vadd.f32 0.0, %v1848
        %1850 = vmatprep.mubr.bf16.mxu0 %v313
        %1851 = vmatmul.mubr.bf16.gmra.mxu0 %v312
        %v1852 = vpop.f32.mrf.mxu0
        %v1853 = vadd.f32 0.0, %v1852
        %v1854 = vpop.f32.mrf.mxu0
        %v1855 = vadd.f32 0.0, %v1854
        %v1856 = vpop.f32.mrf.mxu0
        %v1857 = vadd.f32 0.0, %v1856
        %v1858 = vpop.f32.mrf.mxu0
        %v1859 = vadd.f32 0.0, %v1858
        %1860 = vmatprep.mubr.bf16.mxu0 %v316
        %1861 = vmatmul.mubr.bf16.gmra.mxu0 %v315
        %v1862 = vpop.f32.mrf.mxu0
        %v1863 = vadd.f32 0.0, %v1862
        %v1864 = vpop.f32.mrf.mxu0
        %v1865 = vadd.f32 0.0, %v1864
        %v1866 = vpop.f32.mrf.mxu0
        %v1867 = vadd.f32 0.0, %v1866
        %v1868 = vpop.f32.mrf.mxu0
        %v1869 = vadd.f32 0.0, %v1868
        %1870 = vdwg.mxu0
        %1871 = vmatprep.subr.bf16.mxu0 %v1534
        %1872 = vmatpush1.bf16.msra.mxu0 %v1533
        %1873 = vmatprep.subr.bf16.mxu0 %v1525
        %1874 = vmatpush1.bf16.msra.mxu0 %v1524
        %1875 = vmatprep.subr.bf16.mxu0 %v1516
        %1876 = vmatpush1.bf16.msra.mxu0 %v1515
        %1877 = vmatprep.subr.bf16.mxu0 %v1507
        %1878 = vmatpush1.bf16.msra.mxu0 %v1506
        %1879 = vmatprep.subr.bf16.mxu0 %v1498
        %1880 = vmatpush1.bf16.msra.mxu0 %v1497
        %1881 = vmatprep.subr.bf16.mxu0 %v1489
        %1882 = vmatpush1.bf16.msra.mxu0 %v1488
        %1883 = vmatprep.subr.bf16.mxu0 %v1480
        %1884 = vmatpush1.bf16.msra.mxu0 %v1479
        %1885 = vmatprep.subr.bf16.mxu0 %v1471
        %1886 = vmatpush1.bf16.msra.mxu0 %v1470
        %1887 = vmatprep.subr.bf16.mxu0 0
        %1888 = vmatpush2.bf16.msra.mxu0 0
        %1889 = vmatprep.subr.bf16.mxu0 0
        %1890 = vmatpush2.bf16.msra.mxu0 0
        %1891 = vmatprep.subr.bf16.mxu0 0
        %1892 = vmatpush2.bf16.msra.mxu0 0
        %1893 = vmatprep.subr.bf16.mxu0 0
        %1894 = vmatpush2.bf16.msra.mxu0 0
        %1895 = vmatprep.subr.bf16.mxu0 0
        %1896 = vmatpush2.bf16.msra.mxu0 0
        %1897 = vmatprep.subr.bf16.mxu0 0
        %1898 = vmatpush2.bf16.msra.mxu0 0
        %1899 = vmatprep.subr.bf16.mxu0 0
        %1900 = vmatpush2.bf16.msra.mxu0 0
        %1901 = vmatprep.subr.bf16.mxu0 0
        %1902 = vmatpush2.bf16.msra.mxu0 0
        %1903 = vmatprep.mubr.bf16.mxu0 0
        %1904 = vmatmul.mubr.bf16.gmra.mxu0 %v296
        %v1905 = vpop.f32.mrf.mxu0
        %v1906 = vadd.f32 %v1793, %v1905
        %v1907 = vpop.f32.mrf.mxu0
        %v1908 = vadd.f32 %v1795, %v1907
        %v1909 = vpop.f32.mrf.mxu0
        %v1910 = vadd.f32 %v1797, %v1909
        %v1911 = vpop.f32.mrf.mxu0
        %v1912 = vadd.f32 %v1799, %v1911
        %1913 = vmatprep.mubr.bf16.mxu0 0
        %1914 = vmatmul.mubr.bf16.gmra.mxu0 %v299
        %v1915 = vpop.f32.mrf.mxu0
        %v1916 = vadd.f32 %v1803, %v1915
        %v1917 = vpop.f32.mrf.mxu0
        %v1918 = vadd.f32 %v1805, %v1917
        %v1919 = vpop.f32.mrf.mxu0
        %v1920 = vadd.f32 %v1807, %v1919
        %v1921 = vpop.f32.mrf.mxu0
        %v1922 = vadd.f32 %v1809, %v1921
        %1923 = vmatprep.mubr.bf16.mxu0 0
        %1924 = vmatmul.mubr.bf16.gmra.mxu0 %v302
        %v1925 = vpop.f32.mrf.mxu0
        %v1926 = vadd.f32 %v1813, %v1925
        %v1927 = vpop.f32.mrf.mxu0
        %v1928 = vadd.f32 %v1815, %v1927
        %v1929 = vpop.f32.mrf.mxu0
        %v1930 = vadd.f32 %v1817, %v1929
        %v1931 = vpop.f32.mrf.mxu0
        %v1932 = vadd.f32 %v1819, %v1931
        %1933 = vmatprep.mubr.bf16.mxu0 0
        %1934 = vmatmul.mubr.bf16.gmra.mxu0 %v305
        %v1935 = vpop.f32.mrf.mxu0
        %v1936 = vadd.f32 %v1823, %v1935
        %v1937 = vpop.f32.mrf.mxu0
        %v1938 = vadd.f32 %v1825, %v1937
        %v1939 = vpop.f32.mrf.mxu0
        %v1940 = vadd.f32 %v1827, %v1939
        %v1941 = vpop.f32.mrf.mxu0
        %v1942 = vadd.f32 %v1829, %v1941
        %1943 = vmatprep.mubr.bf16.mxu0 0
        %1944 = vmatmul.mubr.bf16.gmra.mxu0 %v308
        %v1945 = vpop.f32.mrf.mxu0
        %v1946 = vadd.f32 %v1833, %v1945
        %v1947 = vpop.f32.mrf.mxu0
        %v1948 = vadd.f32 %v1835, %v1947
        %v1949 = vpop.f32.mrf.mxu0
        %v1950 = vadd.f32 %v1837, %v1949
        %v1951 = vpop.f32.mrf.mxu0
        %v1952 = vadd.f32 %v1839, %v1951
        %1953 = vmatprep.mubr.bf16.mxu0 0
        %1954 = vmatmul.mubr.bf16.gmra.mxu0 %v311
        %v1955 = vpop.f32.mrf.mxu0
        %v1956 = vadd.f32 %v1843, %v1955
        %v1957 = vpop.f32.mrf.mxu0
        %v1958 = vadd.f32 %v1845, %v1957
        %v1959 = vpop.f32.mrf.mxu0
        %v1960 = vadd.f32 %v1847, %v1959
        %v1961 = vpop.f32.mrf.mxu0
        %v1962 = vadd.f32 %v1849, %v1961
        %1963 = vmatprep.mubr.bf16.mxu0 0
        %1964 = vmatmul.mubr.bf16.gmra.mxu0 %v314
        %v1965 = vpop.f32.mrf.mxu0
        %v1966 = vadd.f32 %v1853, %v1965
        %v1967 = vpop.f32.mrf.mxu0
        %v1968 = vadd.f32 %v1855, %v1967
        %v1969 = vpop.f32.mrf.mxu0
        %v1970 = vadd.f32 %v1857, %v1969
        %v1971 = vpop.f32.mrf.mxu0
        %v1972 = vadd.f32 %v1859, %v1971
        %1973 = vmatprep.mubr.bf16.mxu0 0
        %1974 = vmatmul.mubr.bf16.gmra.mxu0 %v317
        %v1975 = vpop.f32.mrf.mxu0
        %v1976 = vadd.f32 %v1863, %v1975
        %v1977 = vpop.f32.mrf.mxu0
        %v1978 = vadd.f32 %v1865, %v1977
        %v1979 = vpop.f32.mrf.mxu0
        %v1980 = vadd.f32 %v1867, %v1979
        %v1981 = vpop.f32.mrf.mxu0
        %v1982 = vadd.f32 %v1869, %v1981
        %1983 = vdwg.mxu0
        %1984 = vmatprep.subr.bf16.mxu0 %v1392
        %1985 = vmatpush1.bf16.msra.mxu0 %v1391
        %1986 = vmatprep.subr.bf16.mxu0 %v1383
        %1987 = vmatpush1.bf16.msra.mxu0 %v1382
        %1988 = vmatprep.subr.bf16.mxu0 %v1374
        %1989 = vmatpush1.bf16.msra.mxu0 %v1373
        %1990 = vmatprep.subr.bf16.mxu0 %v1365
        %1991 = vmatpush1.bf16.msra.mxu0 %v1364
        %1992 = vmatprep.subr.bf16.mxu0 %v1356
        %1993 = vmatpush1.bf16.msra.mxu0 %v1355
        %1994 = vmatprep.subr.bf16.mxu0 %v1347
        %1995 = vmatpush1.bf16.msra.mxu0 %v1346
        %1996 = vmatprep.subr.bf16.mxu0 %v1338
        %1997 = vmatpush1.bf16.msra.mxu0 %v1337
        %1998 = vmatprep.subr.bf16.mxu0 %v1329
        %1999 = vmatpush1.bf16.msra.mxu0 %v1328
        %2000 = vmatprep.subr.bf16.mxu0 %v1464
        %2001 = vmatpush2.bf16.msra.mxu0 %v1463
        %2002 = vmatprep.subr.bf16.mxu0 %v1455
        %2003 = vmatpush2.bf16.msra.mxu0 %v1454
        %2004 = vmatprep.subr.bf16.mxu0 %v1446
        %2005 = vmatpush2.bf16.msra.mxu0 %v1445
        %2006 = vmatprep.subr.bf16.mxu0 %v1437
        %2007 = vmatpush2.bf16.msra.mxu0 %v1436
        %2008 = vmatprep.subr.bf16.mxu0 %v1428
        %2009 = vmatpush2.bf16.msra.mxu0 %v1427
        %2010 = vmatprep.subr.bf16.mxu0 %v1419
        %2011 = vmatpush2.bf16.msra.mxu0 %v1418
        %2012 = vmatprep.subr.bf16.mxu0 %v1410
        %2013 = vmatpush2.bf16.msra.mxu0 %v1409
        %2014 = vmatprep.subr.bf16.mxu0 %v1401
        %2015 = vmatpush2.bf16.msra.mxu0 %v1400
        %2016 = vmatprep.mubr.bf16.mxu0 %v295
        %2017 = vmatmul.mubr.bf16.gmra.mxu0 %v294
        %v2018 = vpop.f32.mrf.mxu0
        %v2019 = vadd.f32 0.0, %v2018
        %v2020 = vpop.f32.mrf.mxu0
        %v2021 = vadd.f32 0.0, %v2020
        %v2022 = vpop.f32.mrf.mxu0
        %v2023 = vadd.f32 0.0, %v2022
        %v2024 = vpop.f32.mrf.mxu0
        %v2025 = vadd.f32 0.0, %v2024
        %2026 = vmatprep.mubr.bf16.mxu0 %v298
        %2027 = vmatmul.mubr.bf16.gmra.mxu0 %v297
        %v2028 = vpop.f32.mrf.mxu0
        %v2029 = vadd.f32 0.0, %v2028
        %v2030 = vpop.f32.mrf.mxu0
        %v2031 = vadd.f32 0.0, %v2030
        %v2032 = vpop.f32.mrf.mxu0
        %v2033 = vadd.f32 0.0, %v2032
        %v2034 = vpop.f32.mrf.mxu0
        %v2035 = vadd.f32 0.0, %v2034
        %2036 = vmatprep.mubr.bf16.mxu0 %v301
        %2037 = vmatmul.mubr.bf16.gmra.mxu0 %v300
        %v2038 = vpop.f32.mrf.mxu0
        %v2039 = vadd.f32 0.0, %v2038
        %v2040 = vpop.f32.mrf.mxu0
        %v2041 = vadd.f32 0.0, %v2040
        %v2042 = vpop.f32.mrf.mxu0
        %v2043 = vadd.f32 0.0, %v2042
        %v2044 = vpop.f32.mrf.mxu0
        %v2045 = vadd.f32 0.0, %v2044
        %2046 = vmatprep.mubr.bf16.mxu0 %v304
        %2047 = vmatmul.mubr.bf16.gmra.mxu0 %v303
        %v2048 = vpop.f32.mrf.mxu0
        %v2049 = vadd.f32 0.0, %v2048
        %v2050 = vpop.f32.mrf.mxu0
        %v2051 = vadd.f32 0.0, %v2050
        %v2052 = vpop.f32.mrf.mxu0
        %v2053 = vadd.f32 0.0, %v2052
        %v2054 = vpop.f32.mrf.mxu0
        %v2055 = vadd.f32 0.0, %v2054
        %2056 = vmatprep.mubr.bf16.mxu0 %v307
        %2057 = vmatmul.mubr.bf16.gmra.mxu0 %v306
        %v2058 = vpop.f32.mrf.mxu0
        %v2059 = vadd.f32 0.0, %v2058
        %v2060 = vpop.f32.mrf.mxu0
        %v2061 = vadd.f32 0.0, %v2060
        %v2062 = vpop.f32.mrf.mxu0
        %v2063 = vadd.f32 0.0, %v2062
        %v2064 = vpop.f32.mrf.mxu0
        %v2065 = vadd.f32 0.0, %v2064
        %2066 = vmatprep.mubr.bf16.mxu0 %v310
        %2067 = vmatmul.mubr.bf16.gmra.mxu0 %v309
        %v2068 = vpop.f32.mrf.mxu0
        %v2069 = vadd.f32 0.0, %v2068
        %v2070 = vpop.f32.mrf.mxu0
        %v2071 = vadd.f32 0.0, %v2070
        %v2072 = vpop.f32.mrf.mxu0
        %v2073 = vadd.f32 0.0, %v2072
        %v2074 = vpop.f32.mrf.mxu0
        %v2075 = vadd.f32 0.0, %v2074
        %2076 = vmatprep.mubr.bf16.mxu0 %v313
        %2077 = vmatmul.mubr.bf16.gmra.mxu0 %v312
        %v2078 = vpop.f32.mrf.mxu0
        %v2079 = vadd.f32 0.0, %v2078
        %v2080 = vpop.f32.mrf.mxu0
        %v2081 = vadd.f32 0.0, %v2080
        %v2082 = vpop.f32.mrf.mxu0
        %v2083 = vadd.f32 0.0, %v2082
        %v2084 = vpop.f32.mrf.mxu0
        %v2085 = vadd.f32 0.0, %v2084
        %2086 = vmatprep.mubr.bf16.mxu0 %v316
        %2087 = vmatmul.mubr.bf16.gmra.mxu0 %v315
        %v2088 = vpop.f32.mrf.mxu0
        %v2089 = vadd.f32 0.0, %v2088
        %v2090 = vpop.f32.mrf.mxu0
        %v2091 = vadd.f32 0.0, %v2090
        %v2092 = vpop.f32.mrf.mxu0
        %v2093 = vadd.f32 0.0, %v2092
        %v2094 = vpop.f32.mrf.mxu0
        %v2095 = vadd.f32 0.0, %v2094
        %2096 = vdwg.mxu0
        %2097 = vmatprep.subr.bf16.mxu0 %v1536
        %2098 = vmatpush1.bf16.msra.mxu0 %v1535
        %2099 = vmatprep.subr.bf16.mxu0 %v1527
        %2100 = vmatpush1.bf16.msra.mxu0 %v1526
        %2101 = vmatprep.subr.bf16.mxu0 %v1518
        %2102 = vmatpush1.bf16.msra.mxu0 %v1517
        %2103 = vmatprep.subr.bf16.mxu0 %v1509
        %2104 = vmatpush1.bf16.msra.mxu0 %v1508
        %2105 = vmatprep.subr.bf16.mxu0 %v1500
        %2106 = vmatpush1.bf16.msra.mxu0 %v1499
        %2107 = vmatprep.subr.bf16.mxu0 %v1491
        %2108 = vmatpush1.bf16.msra.mxu0 %v1490
        %2109 = vmatprep.subr.bf16.mxu0 %v1482
        %2110 = vmatpush1.bf16.msra.mxu0 %v1481
        %2111 = vmatprep.subr.bf16.mxu0 %v1473
        %2112 = vmatpush1.bf16.msra.mxu0 %v1472
        %2113 = vmatprep.subr.bf16.mxu0 0
        %2114 = vmatpush2.bf16.msra.mxu0 0
        %2115 = vmatprep.subr.bf16.mxu0 0
        %2116 = vmatpush2.bf16.msra.mxu0 0
        %2117 = vmatprep.subr.bf16.mxu0 0
        %2118 = vmatpush2.bf16.msra.mxu0 0
        %2119 = vmatprep.subr.bf16.mxu0 0
        %2120 = vmatpush2.bf16.msra.mxu0 0
        %2121 = vmatprep.subr.bf16.mxu0 0
        %2122 = vmatpush2.bf16.msra.mxu0 0
        %2123 = vmatprep.subr.bf16.mxu0 0
        %2124 = vmatpush2.bf16.msra.mxu0 0
        %2125 = vmatprep.subr.bf16.mxu0 0
        %2126 = vmatpush2.bf16.msra.mxu0 0
        %2127 = vmatprep.subr.bf16.mxu0 0
        %2128 = vmatpush2.bf16.msra.mxu0 0
        %2129 = vmatprep.mubr.bf16.mxu0 0
        %2130 = vmatmul.mubr.bf16.gmra.mxu0 %v296
        %v2131 = vpop.f32.mrf.mxu0
        %v2132 = vadd.f32 %v2019, %v2131
        %v2133 = vpop.f32.mrf.mxu0
        %v2134 = vadd.f32 %v2021, %v2133
        %v2135 = vpop.f32.mrf.mxu0
        %v2136 = vadd.f32 %v2023, %v2135
        %v2137 = vpop.f32.mrf.mxu0
        %v2138 = vadd.f32 %v2025, %v2137
        %2139 = vmatprep.mubr.bf16.mxu0 0
        %2140 = vmatmul.mubr.bf16.gmra.mxu0 %v299
        %v2141 = vpop.f32.mrf.mxu0
        %v2142 = vadd.f32 %v2029, %v2141
        %v2143 = vpop.f32.mrf.mxu0
        %v2144 = vadd.f32 %v2031, %v2143
        %v2145 = vpop.f32.mrf.mxu0
        %v2146 = vadd.f32 %v2033, %v2145
        %v2147 = vpop.f32.mrf.mxu0
        %v2148 = vadd.f32 %v2035, %v2147
        %2149 = vmatprep.mubr.bf16.mxu0 0
        %2150 = vmatmul.mubr.bf16.gmra.mxu0 %v302
        %v2151 = vpop.f32.mrf.mxu0
        %v2152 = vadd.f32 %v2039, %v2151
        %v2153 = vpop.f32.mrf.mxu0
        %v2154 = vadd.f32 %v2041, %v2153
        %v2155 = vpop.f32.mrf.mxu0
        %v2156 = vadd.f32 %v2043, %v2155
        %v2157 = vpop.f32.mrf.mxu0
        %v2158 = vadd.f32 %v2045, %v2157
        %2159 = vmatprep.mubr.bf16.mxu0 0
        %2160 = vmatmul.mubr.bf16.gmra.mxu0 %v305
        %v2161 = vpop.f32.mrf.mxu0
        %v2162 = vadd.f32 %v2049, %v2161
        %v2163 = vpop.f32.mrf.mxu0
        %v2164 = vadd.f32 %v2051, %v2163
        %v2165 = vpop.f32.mrf.mxu0
        %v2166 = vadd.f32 %v2053, %v2165
        %v2167 = vpop.f32.mrf.mxu0
        %v2168 = vadd.f32 %v2055, %v2167
        %2169 = vmatprep.mubr.bf16.mxu0 0
        %2170 = vmatmul.mubr.bf16.gmra.mxu0 %v308
        %v2171 = vpop.f32.mrf.mxu0
        %v2172 = vadd.f32 %v2059, %v2171
        %v2173 = vpop.f32.mrf.mxu0
        %v2174 = vadd.f32 %v2061, %v2173
        %v2175 = vpop.f32.mrf.mxu0
        %v2176 = vadd.f32 %v2063, %v2175
        %v2177 = vpop.f32.mrf.mxu0
        %v2178 = vadd.f32 %v2065, %v2177
        %2179 = vmatprep.mubr.bf16.mxu0 0
        %2180 = vmatmul.mubr.bf16.gmra.mxu0 %v311
        %v2181 = vpop.f32.mrf.mxu0
        %v2182 = vadd.f32 %v2069, %v2181
        %v2183 = vpop.f32.mrf.mxu0
        %v2184 = vadd.f32 %v2071, %v2183
        %v2185 = vpop.f32.mrf.mxu0
        %v2186 = vadd.f32 %v2073, %v2185
        %v2187 = vpop.f32.mrf.mxu0
        %v2188 = vadd.f32 %v2075, %v2187
        %2189 = vmatprep.mubr.bf16.mxu0 0
        %2190 = vmatmul.mubr.bf16.gmra.mxu0 %v314
        %v2191 = vpop.f32.mrf.mxu0
        %v2192 = vadd.f32 %v2079, %v2191
        %v2193 = vpop.f32.mrf.mxu0
        %v2194 = vadd.f32 %v2081, %v2193
        %v2195 = vpop.f32.mrf.mxu0
        %v2196 = vadd.f32 %v2083, %v2195
        %v2197 = vpop.f32.mrf.mxu0
        %v2198 = vadd.f32 %v2085, %v2197
        %2199 = vmatprep.mubr.bf16.mxu0 0
        %2200 = vmatmul.mubr.bf16.gmra.mxu0 %v317
        %v2201 = vpop.f32.mrf.mxu0
        %v2202 = vadd.f32 %v2089, %v2201
        %v2203 = vpop.f32.mrf.mxu0
        %v2204 = vadd.f32 %v2091, %v2203
        %v2205 = vpop.f32.mrf.mxu0
        %v2206 = vadd.f32 %v2093, %v2205
        %v2207 = vpop.f32.mrf.mxu0
        %v2208 = vadd.f32 %v2095, %v2207
        %2209 = vdwg.mxu0
        %2210 = vmatprep.subr.bf16.mxu0 %v1394
        %2211 = vmatpush1.bf16.msra.mxu0 %v1393
        %2212 = vmatprep.subr.bf16.mxu0 %v1385
        %2213 = vmatpush1.bf16.msra.mxu0 %v1384
        %2214 = vmatprep.subr.bf16.mxu0 %v1376
        %2215 = vmatpush1.bf16.msra.mxu0 %v1375
        %2216 = vmatprep.subr.bf16.mxu0 %v1367
        %2217 = vmatpush1.bf16.msra.mxu0 %v1366
        %2218 = vmatprep.subr.bf16.mxu0 %v1358
        %2219 = vmatpush1.bf16.msra.mxu0 %v1357
        %2220 = vmatprep.subr.bf16.mxu0 %v1349
        %2221 = vmatpush1.bf16.msra.mxu0 %v1348
        %2222 = vmatprep.subr.bf16.mxu0 %v1340
        %2223 = vmatpush1.bf16.msra.mxu0 %v1339
        %2224 = vmatprep.subr.bf16.mxu0 %v1331
        %2225 = vmatpush1.bf16.msra.mxu0 %v1330
        %2226 = vmatprep.subr.bf16.mxu0 %v1466
        %2227 = vmatpush2.bf16.msra.mxu0 %v1465
        %2228 = vmatprep.subr.bf16.mxu0 %v1457
        %2229 = vmatpush2.bf16.msra.mxu0 %v1456
        %2230 = vmatprep.subr.bf16.mxu0 %v1448
        %2231 = vmatpush2.bf16.msra.mxu0 %v1447
        %2232 = vmatprep.subr.bf16.mxu0 %v1439
        %2233 = vmatpush2.bf16.msra.mxu0 %v1438
        %2234 = vmatprep.subr.bf16.mxu0 %v1430
        %2235 = vmatpush2.bf16.msra.mxu0 %v1429
        %2236 = vmatprep.subr.bf16.mxu0 %v1421
        %2237 = vmatpush2.bf16.msra.mxu0 %v1420
        %2238 = vmatprep.subr.bf16.mxu0 %v1412
        %2239 = vmatpush2.bf16.msra.mxu0 %v1411
        %2240 = vmatprep.subr.bf16.mxu0 %v1403
        %2241 = vmatpush2.bf16.msra.mxu0 %v1402
        %2242 = vmatprep.mubr.bf16.mxu0 %v295
        %2243 = vmatmul.mubr.bf16.gmra.mxu0 %v294
        %v2244 = vpop.f32.mrf.mxu0
        %v2245 = vadd.f32 0.0, %v2244
        %v2246 = vpop.f32.mrf.mxu0
        %v2247 = vadd.f32 0.0, %v2246
        %v2248 = vpop.f32.mrf.mxu0
        %v2249 = vadd.f32 0.0, %v2248
        %v2250 = vpop.f32.mrf.mxu0
        %v2251 = vadd.f32 0.0, %v2250
        %2252 = vmatprep.mubr.bf16.mxu0 %v298
        %2253 = vmatmul.mubr.bf16.gmra.mxu0 %v297
        %v2254 = vpop.f32.mrf.mxu0
        %v2255 = vadd.f32 0.0, %v2254
        %v2256 = vpop.f32.mrf.mxu0
        %v2257 = vadd.f32 0.0, %v2256
        %v2258 = vpop.f32.mrf.mxu0
        %v2259 = vadd.f32 0.0, %v2258
        %v2260 = vpop.f32.mrf.mxu0
        %v2261 = vadd.f32 0.0, %v2260
        %2262 = vmatprep.mubr.bf16.mxu0 %v301
        %2263 = vmatmul.mubr.bf16.gmra.mxu0 %v300
        %v2264 = vpop.f32.mrf.mxu0
        %v2265 = vadd.f32 0.0, %v2264
        %v2266 = vpop.f32.mrf.mxu0
        %v2267 = vadd.f32 0.0, %v2266
        %v2268 = vpop.f32.mrf.mxu0
        %v2269 = vadd.f32 0.0, %v2268
        %v2270 = vpop.f32.mrf.mxu0
        %v2271 = vadd.f32 0.0, %v2270
        %2272 = vmatprep.mubr.bf16.mxu0 %v304
        %2273 = vmatmul.mubr.bf16.gmra.mxu0 %v303
        %v2274 = vpop.f32.mrf.mxu0
        %v2275 = vadd.f32 0.0, %v2274
        %v2276 = vpop.f32.mrf.mxu0
        %v2277 = vadd.f32 0.0, %v2276
        %v2278 = vpop.f32.mrf.mxu0
        %v2279 = vadd.f32 0.0, %v2278
        %v2280 = vpop.f32.mrf.mxu0
        %v2281 = vadd.f32 0.0, %v2280
        %2282 = vmatprep.mubr.bf16.mxu0 %v307
        %2283 = vmatmul.mubr.bf16.gmra.mxu0 %v306
        %v2284 = vpop.f32.mrf.mxu0
        %v2285 = vadd.f32 0.0, %v2284
        %v2286 = vpop.f32.mrf.mxu0
        %v2287 = vadd.f32 0.0, %v2286
        %v2288 = vpop.f32.mrf.mxu0
        %v2289 = vadd.f32 0.0, %v2288
        %v2290 = vpop.f32.mrf.mxu0
        %v2291 = vadd.f32 0.0, %v2290
        %2292 = vmatprep.mubr.bf16.mxu0 %v310
        %2293 = vmatmul.mubr.bf16.gmra.mxu0 %v309
        %v2294 = vpop.f32.mrf.mxu0
        %v2295 = vadd.f32 0.0, %v2294
        %v2296 = vpop.f32.mrf.mxu0
        %v2297 = vadd.f32 0.0, %v2296
        %v2298 = vpop.f32.mrf.mxu0
        %v2299 = vadd.f32 0.0, %v2298
        %v2300 = vpop.f32.mrf.mxu0
        %v2301 = vadd.f32 0.0, %v2300
        %2302 = vmatprep.mubr.bf16.mxu0 %v313
        %2303 = vmatmul.mubr.bf16.gmra.mxu0 %v312
        %v2304 = vpop.f32.mrf.mxu0
        %v2305 = vadd.f32 0.0, %v2304
        %v2306 = vpop.f32.mrf.mxu0
        %v2307 = vadd.f32 0.0, %v2306
        %v2308 = vpop.f32.mrf.mxu0
        %v2309 = vadd.f32 0.0, %v2308
        %v2310 = vpop.f32.mrf.mxu0
        %v2311 = vadd.f32 0.0, %v2310
        %2312 = vmatprep.mubr.bf16.mxu0 %v316
        %2313 = vmatmul.mubr.bf16.gmra.mxu0 %v315
        %v2314 = vpop.f32.mrf.mxu0
        %v2315 = vadd.f32 0.0, %v2314
        %v2316 = vpop.f32.mrf.mxu0
        %v2317 = vadd.f32 0.0, %v2316
        %v2318 = vpop.f32.mrf.mxu0
        %v2319 = vadd.f32 0.0, %v2318
        %v2320 = vpop.f32.mrf.mxu0
        %v2321 = vadd.f32 0.0, %v2320
        %2322 = vdwg.mxu0
        %2323 = vmatprep.subr.bf16.mxu0 %v1538
        %2324 = vmatpush1.bf16.msra.mxu0 %v1537
        %2325 = vmatprep.subr.bf16.mxu0 %v1529
        %2326 = vmatpush1.bf16.msra.mxu0 %v1528
        %2327 = vmatprep.subr.bf16.mxu0 %v1520
        %2328 = vmatpush1.bf16.msra.mxu0 %v1519
        %2329 = vmatprep.subr.bf16.mxu0 %v1511
        %2330 = vmatpush1.bf16.msra.mxu0 %v1510
        %2331 = vmatprep.subr.bf16.mxu0 %v1502
        %2332 = vmatpush1.bf16.msra.mxu0 %v1501
        %2333 = vmatprep.subr.bf16.mxu0 %v1493
        %2334 = vmatpush1.bf16.msra.mxu0 %v1492
        %2335 = vmatprep.subr.bf16.mxu0 %v1484
        %2336 = vmatpush1.bf16.msra.mxu0 %v1483
        %2337 = vmatprep.subr.bf16.mxu0 %v1475
        %2338 = vmatpush1.bf16.msra.mxu0 %v1474
        %2339 = vmatprep.subr.bf16.mxu0 0
        %2340 = vmatpush2.bf16.msra.mxu0 0
        %2341 = vmatprep.subr.bf16.mxu0 0
        %2342 = vmatpush2.bf16.msra.mxu0 0
        %2343 = vmatprep.subr.bf16.mxu0 0
        %2344 = vmatpush2.bf16.msra.mxu0 0
        %2345 = vmatprep.subr.bf16.mxu0 0
        %2346 = vmatpush2.bf16.msra.mxu0 0
        %2347 = vmatprep.subr.bf16.mxu0 0
        %2348 = vmatpush2.bf16.msra.mxu0 0
        %2349 = vmatprep.subr.bf16.mxu0 0
        %2350 = vmatpush2.bf16.msra.mxu0 0
        %2351 = vmatprep.subr.bf16.mxu0 0
        %2352 = vmatpush2.bf16.msra.mxu0 0
        %2353 = vmatprep.subr.bf16.mxu0 0
        %2354 = vmatpush2.bf16.msra.mxu0 0
        %2355 = vmatprep.mubr.bf16.mxu0 0
        %2356 = vmatmul.mubr.bf16.gmra.mxu0 %v296
        %v2357 = vpop.f32.mrf.mxu0
        %v2358 = vadd.f32 %v2245, %v2357
        %v2359 = vpop.f32.mrf.mxu0
        %v2360 = vadd.f32 %v2247, %v2359
        %v2361 = vpop.f32.mrf.mxu0
        %v2362 = vadd.f32 %v2249, %v2361
        %v2363 = vpop.f32.mrf.mxu0
        %v2364 = vadd.f32 %v2251, %v2363
        %2365 = vmatprep.mubr.bf16.mxu0 0
        %2366 = vmatmul.mubr.bf16.gmra.mxu0 %v299
        %v2367 = vpop.f32.mrf.mxu0
        %v2368 = vadd.f32 %v2255, %v2367
        %v2369 = vpop.f32.mrf.mxu0
        %v2370 = vadd.f32 %v2257, %v2369
        %v2371 = vpop.f32.mrf.mxu0
        %v2372 = vadd.f32 %v2259, %v2371
        %v2373 = vpop.f32.mrf.mxu0
        %v2374 = vadd.f32 %v2261, %v2373
        %2375 = vmatprep.mubr.bf16.mxu0 0
        %2376 = vmatmul.mubr.bf16.gmra.mxu0 %v302
        %v2377 = vpop.f32.mrf.mxu0
        %v2378 = vadd.f32 %v2265, %v2377
        %v2379 = vpop.f32.mrf.mxu0
        %v2380 = vadd.f32 %v2267, %v2379
        %v2381 = vpop.f32.mrf.mxu0
        %v2382 = vadd.f32 %v2269, %v2381
        %v2383 = vpop.f32.mrf.mxu0
        %v2384 = vadd.f32 %v2271, %v2383
        %2385 = vmatprep.mubr.bf16.mxu0 0
        %2386 = vmatmul.mubr.bf16.gmra.mxu0 %v305
        %v2387 = vpop.f32.mrf.mxu0
        %v2388 = vadd.f32 %v2275, %v2387
        %v2389 = vpop.f32.mrf.mxu0
        %v2390 = vadd.f32 %v2277, %v2389
        %v2391 = vpop.f32.mrf.mxu0
        %v2392 = vadd.f32 %v2279, %v2391
        %v2393 = vpop.f32.mrf.mxu0
        %v2394 = vadd.f32 %v2281, %v2393
        %2395 = vmatprep.mubr.bf16.mxu0 0
        %2396 = vmatmul.mubr.bf16.gmra.mxu0 %v308
        %v2397 = vpop.f32.mrf.mxu0
        %v2398 = vadd.f32 %v2285, %v2397
        %v2399 = vpop.f32.mrf.mxu0
        %v2400 = vadd.f32 %v2287, %v2399
        %v2401 = vpop.f32.mrf.mxu0
        %v2402 = vadd.f32 %v2289, %v2401
        %v2403 = vpop.f32.mrf.mxu0
        %v2404 = vadd.f32 %v2291, %v2403
        %2405 = vmatprep.mubr.bf16.mxu0 0
        %2406 = vmatmul.mubr.bf16.gmra.mxu0 %v311
        %v2407 = vpop.f32.mrf.mxu0
        %v2408 = vadd.f32 %v2295, %v2407
        %v2409 = vpop.f32.mrf.mxu0
        %v2410 = vadd.f32 %v2297, %v2409
        %v2411 = vpop.f32.mrf.mxu0
        %v2412 = vadd.f32 %v2299, %v2411
        %v2413 = vpop.f32.mrf.mxu0
        %v2414 = vadd.f32 %v2301, %v2413
        %2415 = vmatprep.mubr.bf16.mxu0 0
        %2416 = vmatmul.mubr.bf16.gmra.mxu0 %v314
        %v2417 = vpop.f32.mrf.mxu0
        %v2418 = vadd.f32 %v2305, %v2417
        %v2419 = vpop.f32.mrf.mxu0
        %v2420 = vadd.f32 %v2307, %v2419
        %v2421 = vpop.f32.mrf.mxu0
        %v2422 = vadd.f32 %v2309, %v2421
        %v2423 = vpop.f32.mrf.mxu0
        %v2424 = vadd.f32 %v2311, %v2423
        %2425 = vmatprep.mubr.bf16.mxu0 0
        %2426 = vmatmul.mubr.bf16.gmra.mxu0 %v317
        %v2427 = vpop.f32.mrf.mxu0
        %v2428 = vadd.f32 %v2315, %v2427
        %v2429 = vpop.f32.mrf.mxu0
        %v2430 = vadd.f32 %v2317, %v2429
        %v2431 = vpop.f32.mrf.mxu0
        %v2432 = vadd.f32 %v2319, %v2431
        %v2433 = vpop.f32.mrf.mxu0
        %v2434 = vadd.f32 %v2321, %v2433
        %2435 = vdwg.mxu0
        %2436 = vmatprep.subr.bf16.mxu0 %v1396
        %2437 = vmatpush1.bf16.msra.mxu0 %v1395
        %2438 = vmatprep.subr.bf16.mxu0 %v1387
        %2439 = vmatpush1.bf16.msra.mxu0 %v1386
        %2440 = vmatprep.subr.bf16.mxu0 %v1378
        %2441 = vmatpush1.bf16.msra.mxu0 %v1377
        %2442 = vmatprep.subr.bf16.mxu0 %v1369
        %2443 = vmatpush1.bf16.msra.mxu0 %v1368
        %2444 = vmatprep.subr.bf16.mxu0 %v1360
        %2445 = vmatpush1.bf16.msra.mxu0 %v1359
        %2446 = vmatprep.subr.bf16.mxu0 %v1351
        %2447 = vmatpush1.bf16.msra.mxu0 %v1350
        %2448 = vmatprep.subr.bf16.mxu0 %v1342
        %2449 = vmatpush1.bf16.msra.mxu0 %v1341
        %2450 = vmatprep.subr.bf16.mxu0 %v1333
        %2451 = vmatpush1.bf16.msra.mxu0 %v1332
        %2452 = vmatprep.subr.bf16.mxu0 %v1468
        %2453 = vmatpush2.bf16.msra.mxu0 %v1467
        %2454 = vmatprep.subr.bf16.mxu0 %v1459
        %2455 = vmatpush2.bf16.msra.mxu0 %v1458
        %2456 = vmatprep.subr.bf16.mxu0 %v1450
        %2457 = vmatpush2.bf16.msra.mxu0 %v1449
        %2458 = vmatprep.subr.bf16.mxu0 %v1441
        %2459 = vmatpush2.bf16.msra.mxu0 %v1440
        %2460 = vmatprep.subr.bf16.mxu0 %v1432
        %2461 = vmatpush2.bf16.msra.mxu0 %v1431
        %2462 = vmatprep.subr.bf16.mxu0 %v1423
        %2463 = vmatpush2.bf16.msra.mxu0 %v1422
        %2464 = vmatprep.subr.bf16.mxu0 %v1414
        %2465 = vmatpush2.bf16.msra.mxu0 %v1413
        %2466 = vmatprep.subr.bf16.mxu0 %v1405
        %2467 = vmatpush2.bf16.msra.mxu0 %v1404
        %2468 = vmatprep.mubr.bf16.mxu0 %v295
        %2469 = vmatmul.mubr.bf16.gmra.mxu0 %v294
        %v2470 = vpop.f32.mrf.mxu0
        %v2471 = vadd.f32 0.0, %v2470
        %v2472 = vpop.f32.mrf.mxu0
        %v2473 = vadd.f32 0.0, %v2472
        %v2474 = vpop.f32.mrf.mxu0
        %v2475 = vadd.f32 0.0, %v2474
        %v2476 = vpop.f32.mrf.mxu0
        %v2477 = vadd.f32 0.0, %v2476
        %2478 = vmatprep.mubr.bf16.mxu0 %v298
        %2479 = vmatmul.mubr.bf16.gmra.mxu0 %v297
        %v2480 = vpop.f32.mrf.mxu0
        %v2481 = vadd.f32 0.0, %v2480
        %v2482 = vpop.f32.mrf.mxu0
        %v2483 = vadd.f32 0.0, %v2482
        %v2484 = vpop.f32.mrf.mxu0
        %v2485 = vadd.f32 0.0, %v2484
        %v2486 = vpop.f32.mrf.mxu0
        %v2487 = vadd.f32 0.0, %v2486
        %2488 = vmatprep.mubr.bf16.mxu0 %v301
        %2489 = vmatmul.mubr.bf16.gmra.mxu0 %v300
        %v2490 = vpop.f32.mrf.mxu0
        %v2491 = vadd.f32 0.0, %v2490
        %v2492 = vpop.f32.mrf.mxu0
        %v2493 = vadd.f32 0.0, %v2492
        %v2494 = vpop.f32.mrf.mxu0
        %v2495 = vadd.f32 0.0, %v2494
        %v2496 = vpop.f32.mrf.mxu0
        %v2497 = vadd.f32 0.0, %v2496
        %2498 = vmatprep.mubr.bf16.mxu0 %v304
        %2499 = vmatmul.mubr.bf16.gmra.mxu0 %v303
        %v2500 = vpop.f32.mrf.mxu0
        %v2501 = vadd.f32 0.0, %v2500
        %v2502 = vpop.f32.mrf.mxu0
        %v2503 = vadd.f32 0.0, %v2502
        %v2504 = vpop.f32.mrf.mxu0
        %v2505 = vadd.f32 0.0, %v2504
        %v2506 = vpop.f32.mrf.mxu0
        %v2507 = vadd.f32 0.0, %v2506
        %2508 = vmatprep.mubr.bf16.mxu0 %v307
        %2509 = vmatmul.mubr.bf16.gmra.mxu0 %v306
        %v2510 = vpop.f32.mrf.mxu0
        %v2511 = vadd.f32 0.0, %v2510
        %v2512 = vpop.f32.mrf.mxu0
        %v2513 = vadd.f32 0.0, %v2512
        %v2514 = vpop.f32.mrf.mxu0
        %v2515 = vadd.f32 0.0, %v2514
        %v2516 = vpop.f32.mrf.mxu0
        %v2517 = vadd.f32 0.0, %v2516
        %2518 = vmatprep.mubr.bf16.mxu0 %v310
        %2519 = vmatmul.mubr.bf16.gmra.mxu0 %v309
        %v2520 = vpop.f32.mrf.mxu0
        %v2521 = vadd.f32 0.0, %v2520
        %v2522 = vpop.f32.mrf.mxu0
        %v2523 = vadd.f32 0.0, %v2522
        %v2524 = vpop.f32.mrf.mxu0
        %v2525 = vadd.f32 0.0, %v2524
        %v2526 = vpop.f32.mrf.mxu0
        %v2527 = vadd.f32 0.0, %v2526
        %2528 = vmatprep.mubr.bf16.mxu0 %v313
        %2529 = vmatmul.mubr.bf16.gmra.mxu0 %v312
        %v2530 = vpop.f32.mrf.mxu0
        %v2531 = vadd.f32 0.0, %v2530
        %v2532 = vpop.f32.mrf.mxu0
        %v2533 = vadd.f32 0.0, %v2532
        %v2534 = vpop.f32.mrf.mxu0
        %v2535 = vadd.f32 0.0, %v2534
        %v2536 = vpop.f32.mrf.mxu0
        %v2537 = vadd.f32 0.0, %v2536
        %2538 = vmatprep.mubr.bf16.mxu0 %v316
        %2539 = vmatmul.mubr.bf16.gmra.mxu0 %v315
        %v2540 = vpop.f32.mrf.mxu0
        %v2541 = vadd.f32 0.0, %v2540
        %v2542 = vpop.f32.mrf.mxu0
        %v2543 = vadd.f32 0.0, %v2542
        %v2544 = vpop.f32.mrf.mxu0
        %v2545 = vadd.f32 0.0, %v2544
        %v2546 = vpop.f32.mrf.mxu0
        %v2547 = vadd.f32 0.0, %v2546
        %2548 = vdwg.mxu0
        %2549 = vmatprep.subr.bf16.mxu0 %v1540
        %2550 = vmatpush1.bf16.msra.mxu0 %v1539
        %2551 = vmatprep.subr.bf16.mxu0 %v1531
        %2552 = vmatpush1.bf16.msra.mxu0 %v1530
        %2553 = vmatprep.subr.bf16.mxu0 %v1522
        %2554 = vmatpush1.bf16.msra.mxu0 %v1521
        %2555 = vmatprep.subr.bf16.mxu0 %v1513
        %2556 = vmatpush1.bf16.msra.mxu0 %v1512
        %2557 = vmatprep.subr.bf16.mxu0 %v1504
        %2558 = vmatpush1.bf16.msra.mxu0 %v1503
        %2559 = vmatprep.subr.bf16.mxu0 %v1495
        %2560 = vmatpush1.bf16.msra.mxu0 %v1494
        %2561 = vmatprep.subr.bf16.mxu0 %v1486
        %2562 = vmatpush1.bf16.msra.mxu0 %v1485
        %2563 = vmatprep.subr.bf16.mxu0 %v1477
        %2564 = vmatpush1.bf16.msra.mxu0 %v1476
        %2565 = vmatprep.subr.bf16.mxu0 0
        %2566 = vmatpush2.bf16.msra.mxu0 0
        %2567 = vmatprep.subr.bf16.mxu0 0
        %2568 = vmatpush2.bf16.msra.mxu0 0
        %2569 = vmatprep.subr.bf16.mxu0 0
        %2570 = vmatpush2.bf16.msra.mxu0 0
        %2571 = vmatprep.subr.bf16.mxu0 0
        %2572 = vmatpush2.bf16.msra.mxu0 0
        %2573 = vmatprep.subr.bf16.mxu0 0
        %2574 = vmatpush2.bf16.msra.mxu0 0
        %2575 = vmatprep.subr.bf16.mxu0 0
        %2576 = vmatpush2.bf16.msra.mxu0 0
        %2577 = vmatprep.subr.bf16.mxu0 0
        %2578 = vmatpush2.bf16.msra.mxu0 0
        %2579 = vmatprep.subr.bf16.mxu0 0
        %2580 = vmatpush2.bf16.msra.mxu0 0
        %2581 = vmatprep.mubr.bf16.mxu0 0
        %2582 = vmatmul.mubr.bf16.gmra.mxu0 %v296
        %v2583 = vpop.f32.mrf.mxu0
        %v2584 = vadd.f32 %v2471, %v2583
        %v2585 = vpop.f32.mrf.mxu0
        %v2586 = vadd.f32 %v2473, %v2585
        %v2587 = vpop.f32.mrf.mxu0
        %v2588 = vadd.f32 %v2475, %v2587
        %v2589 = vpop.f32.mrf.mxu0
        %v2590 = vadd.f32 %v2477, %v2589
        %2591 = vmatprep.mubr.bf16.mxu0 0
        %2592 = vmatmul.mubr.bf16.gmra.mxu0 %v299
        %v2593 = vpop.f32.mrf.mxu0
        %v2594 = vadd.f32 %v2481, %v2593
        %v2595 = vpop.f32.mrf.mxu0
        %v2596 = vadd.f32 %v2483, %v2595
        %v2597 = vpop.f32.mrf.mxu0
        %v2598 = vadd.f32 %v2485, %v2597
        %v2599 = vpop.f32.mrf.mxu0
        %v2600 = vadd.f32 %v2487, %v2599
        %2601 = vmatprep.mubr.bf16.mxu0 0
        %2602 = vmatmul.mubr.bf16.gmra.mxu0 %v302
        %v2603 = vpop.f32.mrf.mxu0
        %v2604 = vadd.f32 %v2491, %v2603
        %v2605 = vpop.f32.mrf.mxu0
        %v2606 = vadd.f32 %v2493, %v2605
        %v2607 = vpop.f32.mrf.mxu0
        %v2608 = vadd.f32 %v2495, %v2607
        %v2609 = vpop.f32.mrf.mxu0
        %v2610 = vadd.f32 %v2497, %v2609
        %2611 = vmatprep.mubr.bf16.mxu0 0
        %2612 = vmatmul.mubr.bf16.gmra.mxu0 %v305
        %v2613 = vpop.f32.mrf.mxu0
        %v2614 = vadd.f32 %v2501, %v2613
        %v2615 = vpop.f32.mrf.mxu0
        %v2616 = vadd.f32 %v2503, %v2615
        %v2617 = vpop.f32.mrf.mxu0
        %v2618 = vadd.f32 %v2505, %v2617
        %v2619 = vpop.f32.mrf.mxu0
        %v2620 = vadd.f32 %v2507, %v2619
        %2621 = vmatprep.mubr.bf16.mxu0 0
        %2622 = vmatmul.mubr.bf16.gmra.mxu0 %v308
        %v2623 = vpop.f32.mrf.mxu0
        %v2624 = vadd.f32 %v2511, %v2623
        %v2625 = vpop.f32.mrf.mxu0
        %v2626 = vadd.f32 %v2513, %v2625
        %v2627 = vpop.f32.mrf.mxu0
        %v2628 = vadd.f32 %v2515, %v2627
        %v2629 = vpop.f32.mrf.mxu0
        %v2630 = vadd.f32 %v2517, %v2629
        %2631 = vmatprep.mubr.bf16.mxu0 0
        %2632 = vmatmul.mubr.bf16.gmra.mxu0 %v311
        %v2633 = vpop.f32.mrf.mxu0
        %v2634 = vadd.f32 %v2521, %v2633
        %v2635 = vpop.f32.mrf.mxu0
        %v2636 = vadd.f32 %v2523, %v2635
        %v2637 = vpop.f32.mrf.mxu0
        %v2638 = vadd.f32 %v2525, %v2637
        %v2639 = vpop.f32.mrf.mxu0
        %v2640 = vadd.f32 %v2527, %v2639
        %2641 = vmatprep.mubr.bf16.mxu0 0
        %2642 = vmatmul.mubr.bf16.gmra.mxu0 %v314
        %v2643 = vpop.f32.mrf.mxu0
        %v2644 = vadd.f32 %v2531, %v2643
        %v2645 = vpop.f32.mrf.mxu0
        %v2646 = vadd.f32 %v2533, %v2645
        %v2647 = vpop.f32.mrf.mxu0
        %v2648 = vadd.f32 %v2535, %v2647
        %v2649 = vpop.f32.mrf.mxu0
        %v2650 = vadd.f32 %v2537, %v2649
        %2651 = vmatprep.mubr.bf16.mxu0 0
        %2652 = vmatmul.mubr.bf16.gmra.mxu0 %v317
        %v2653 = vpop.f32.mrf.mxu0
        %v2654 = vadd.f32 %v2541, %v2653
        %v2655 = vpop.f32.mrf.mxu0
        %v2656 = vadd.f32 %v2543, %v2655
        %v2657 = vpop.f32.mrf.mxu0
        %v2658 = vadd.f32 %v2545, %v2657
        %v2659 = vpop.f32.mrf.mxu0
        %v2660 = vadd.f32 %v2547, %v2659
        %2661 = vdwg.mxu0
        %2662 = vmatprep.subr.bf16.mxu0 0
        %2663 = vmatpush1.bf16.msra.mxu0 %v1397
        %2664 = vmatprep.subr.bf16.mxu0 0
        %2665 = vmatpush1.bf16.msra.mxu0 %v1388
        %2666 = vmatprep.subr.bf16.mxu0 0
        %2667 = vmatpush1.bf16.msra.mxu0 %v1379
        %2668 = vmatprep.subr.bf16.mxu0 0
        %2669 = vmatpush1.bf16.msra.mxu0 %v1370
        %2670 = vmatprep.subr.bf16.mxu0 0
        %2671 = vmatpush1.bf16.msra.mxu0 %v1361
        %2672 = vmatprep.subr.bf16.mxu0 0
        %2673 = vmatpush1.bf16.msra.mxu0 %v1352
        %2674 = vmatprep.subr.bf16.mxu0 0
        %2675 = vmatpush1.bf16.msra.mxu0 %v1343
        %2676 = vmatprep.subr.bf16.mxu0 0
        %2677 = vmatpush1.bf16.msra.mxu0 %v1334
        %2678 = vmatprep.subr.bf16.mxu0 0
        %2679 = vmatpush2.bf16.msra.mxu0 %v1469
        %2680 = vmatprep.subr.bf16.mxu0 0
        %2681 = vmatpush2.bf16.msra.mxu0 %v1460
        %2682 = vmatprep.subr.bf16.mxu0 0
        %2683 = vmatpush2.bf16.msra.mxu0 %v1451
        %2684 = vmatprep.subr.bf16.mxu0 0
        %2685 = vmatpush2.bf16.msra.mxu0 %v1442
        %2686 = vmatprep.subr.bf16.mxu0 0
        %2687 = vmatpush2.bf16.msra.mxu0 %v1433
        %2688 = vmatprep.subr.bf16.mxu0 0
        %2689 = vmatpush2.bf16.msra.mxu0 %v1424
        %2690 = vmatprep.subr.bf16.mxu0 0
        %2691 = vmatpush2.bf16.msra.mxu0 %v1415
        %2692 = vmatprep.subr.bf16.mxu0 0
        %2693 = vmatpush2.bf16.msra.mxu0 %v1406
        %2694 = vmatprep.mubr.bf16.mxu0 %v295
        %2695 = vmatmul.mubr.bf16.gmra.mxu0 %v294
        %v2696 = vpop.f32.mrf.mxu0
        %v2697 = vadd.f32 0.0, %v2696
        %v2698 = vpop.f32.mrf.mxu0
        %v2699 = vpop.f32.mrf.mxu0
        %v2700 = vadd.f32 0.0, %v2699
        %v2701 = vpop.f32.mrf.mxu0
        %2702 = vmatprep.mubr.bf16.mxu0 %v298
        %2703 = vmatmul.mubr.bf16.gmra.mxu0 %v297
        %v2704 = vpop.f32.mrf.mxu0
        %v2705 = vadd.f32 0.0, %v2704
        %v2706 = vpop.f32.mrf.mxu0
        %v2707 = vpop.f32.mrf.mxu0
        %v2708 = vadd.f32 0.0, %v2707
        %v2709 = vpop.f32.mrf.mxu0
        %2710 = vmatprep.mubr.bf16.mxu0 %v301
        %2711 = vmatmul.mubr.bf16.gmra.mxu0 %v300
        %v2712 = vpop.f32.mrf.mxu0
        %v2713 = vadd.f32 0.0, %v2712
        %v2714 = vpop.f32.mrf.mxu0
        %v2715 = vpop.f32.mrf.mxu0
        %v2716 = vadd.f32 0.0, %v2715
        %v2717 = vpop.f32.mrf.mxu0
        %2718 = vmatprep.mubr.bf16.mxu0 %v304
        %2719 = vmatmul.mubr.bf16.gmra.mxu0 %v303
        %v2720 = vpop.f32.mrf.mxu0
        %v2721 = vadd.f32 0.0, %v2720
        %v2722 = vpop.f32.mrf.mxu0
        %v2723 = vpop.f32.mrf.mxu0
        %v2724 = vadd.f32 0.0, %v2723
        %v2725 = vpop.f32.mrf.mxu0
        %2726 = vmatprep.mubr.bf16.mxu0 %v307
        %2727 = vmatmul.mubr.bf16.gmra.mxu0 %v306
        %v2728 = vpop.f32.mrf.mxu0
        %v2729 = vadd.f32 0.0, %v2728
        %v2730 = vpop.f32.mrf.mxu0
        %v2731 = vpop.f32.mrf.mxu0
        %v2732 = vadd.f32 0.0, %v2731
        %v2733 = vpop.f32.mrf.mxu0
        %2734 = vmatprep.mubr.bf16.mxu0 %v310
        %2735 = vmatmul.mubr.bf16.gmra.mxu0 %v309
        %v2736 = vpop.f32.mrf.mxu0
        %v2737 = vadd.f32 0.0, %v2736
        %v2738 = vpop.f32.mrf.mxu0
        %v2739 = vpop.f32.mrf.mxu0
        %v2740 = vadd.f32 0.0, %v2739
        %v2741 = vpop.f32.mrf.mxu0
        %2742 = vmatprep.mubr.bf16.mxu0 %v313
        %2743 = vmatmul.mubr.bf16.gmra.mxu0 %v312
        %v2744 = vpop.f32.mrf.mxu0
        %v2745 = vadd.f32 0.0, %v2744
        %v2746 = vpop.f32.mrf.mxu0
        %v2747 = vpop.f32.mrf.mxu0
        %v2748 = vadd.f32 0.0, %v2747
        %v2749 = vpop.f32.mrf.mxu0
        %2750 = vmatprep.mubr.bf16.mxu0 %v316
        %2751 = vmatmul.mubr.bf16.gmra.mxu0 %v315
        %v2752 = vpop.f32.mrf.mxu0
        %v2753 = vadd.f32 0.0, %v2752
        %v2754 = vpop.f32.mrf.mxu0
        %v2755 = vpop.f32.mrf.mxu0
        %v2756 = vadd.f32 0.0, %v2755
        %v2757 = vpop.f32.mrf.mxu0
        %2758 = vdwg.mxu0
        %2759 = vmatprep.subr.bf16.mxu0 0
        %2760 = vmatpush1.bf16.msra.mxu0 %v1541
        %2761 = vmatprep.subr.bf16.mxu0 0
        %2762 = vmatpush1.bf16.msra.mxu0 %v1532
        %2763 = vmatprep.subr.bf16.mxu0 0
        %2764 = vmatpush1.bf16.msra.mxu0 %v1523
        %2765 = vmatprep.subr.bf16.mxu0 0
        %2766 = vmatpush1.bf16.msra.mxu0 %v1514
        %2767 = vmatprep.subr.bf16.mxu0 0
        %2768 = vmatpush1.bf16.msra.mxu0 %v1505
        %2769 = vmatprep.subr.bf16.mxu0 0
        %2770 = vmatpush1.bf16.msra.mxu0 %v1496
        %2771 = vmatprep.subr.bf16.mxu0 0
        %2772 = vmatpush1.bf16.msra.mxu0 %v1487
        %2773 = vmatprep.subr.bf16.mxu0 0
        %2774 = vmatpush1.bf16.msra.mxu0 %v1478
        %2775 = vmatprep.subr.bf16.mxu0 0
        %2776 = vmatpush2.bf16.msra.mxu0 0
        %2777 = vmatprep.subr.bf16.mxu0 0
        %2778 = vmatpush2.bf16.msra.mxu0 0
        %2779 = vmatprep.subr.bf16.mxu0 0
        %2780 = vmatpush2.bf16.msra.mxu0 0
        %2781 = vmatprep.subr.bf16.mxu0 0
        %2782 = vmatpush2.bf16.msra.mxu0 0
        %2783 = vmatprep.subr.bf16.mxu0 0
        %2784 = vmatpush2.bf16.msra.mxu0 0
        %2785 = vmatprep.subr.bf16.mxu0 0
        %2786 = vmatpush2.bf16.msra.mxu0 0
        %2787 = vmatprep.subr.bf16.mxu0 0
        %2788 = vmatpush2.bf16.msra.mxu0 0
        %2789 = vmatprep.subr.bf16.mxu0 0
        %2790 = vmatpush2.bf16.msra.mxu0 0
        %2791 = vmatprep.mubr.bf16.mxu0 0
        %2792 = vmatmul.mubr.bf16.gmra.mxu0 %v296
        %v2793 = vpop.f32.mrf.mxu0
        %v2794 = vadd.f32 %v2697, %v2793
        %v2795 = vpop.f32.mrf.mxu0
        %v2796 = vpop.f32.mrf.mxu0
        %v2797 = vadd.f32 %v2700, %v2796
        %v2798 = vpop.f32.mrf.mxu0
        %2799 = vmatprep.mubr.bf16.mxu0 0
        %2800 = vmatmul.mubr.bf16.gmra.mxu0 %v299
        %v2801 = vpop.f32.mrf.mxu0
        %v2802 = vadd.f32 %v2705, %v2801
        %v2803 = vpop.f32.mrf.mxu0
        %v2804 = vpop.f32.mrf.mxu0
        %v2805 = vadd.f32 %v2708, %v2804
        %v2806 = vpop.f32.mrf.mxu0
        %2807 = vmatprep.mubr.bf16.mxu0 0
        %2808 = vmatmul.mubr.bf16.gmra.mxu0 %v302
        %v2809 = vpop.f32.mrf.mxu0
        %v2810 = vadd.f32 %v2713, %v2809
        %v2811 = vpop.f32.mrf.mxu0
        %v2812 = vpop.f32.mrf.mxu0
        %v2813 = vadd.f32 %v2716, %v2812
        %v2814 = vpop.f32.mrf.mxu0
        %2815 = vmatprep.mubr.bf16.mxu0 0
        %2816 = vmatmul.mubr.bf16.gmra.mxu0 %v305
        %v2817 = vpop.f32.mrf.mxu0
        %v2818 = vadd.f32 %v2721, %v2817
        %v2819 = vpop.f32.mrf.mxu0
        %v2820 = vpop.f32.mrf.mxu0
        %v2821 = vadd.f32 %v2724, %v2820
        %v2822 = vpop.f32.mrf.mxu0
        %2823 = vmatprep.mubr.bf16.mxu0 0
        %2824 = vmatmul.mubr.bf16.gmra.mxu0 %v308
        %v2825 = vpop.f32.mrf.mxu0
        %v2826 = vadd.f32 %v2729, %v2825
        %v2827 = vpop.f32.mrf.mxu0
        %v2828 = vpop.f32.mrf.mxu0
        %v2829 = vadd.f32 %v2732, %v2828
        %v2830 = vpop.f32.mrf.mxu0
        %2831 = vmatprep.mubr.bf16.mxu0 0
        %2832 = vmatmul.mubr.bf16.gmra.mxu0 %v311
        %v2833 = vpop.f32.mrf.mxu0
        %v2834 = vadd.f32 %v2737, %v2833
        %v2835 = vpop.f32.mrf.mxu0
        %v2836 = vpop.f32.mrf.mxu0
        %v2837 = vadd.f32 %v2740, %v2836
        %v2838 = vpop.f32.mrf.mxu0
        %2839 = vmatprep.mubr.bf16.mxu0 0
        %2840 = vmatmul.mubr.bf16.gmra.mxu0 %v314
        %v2841 = vpop.f32.mrf.mxu0
        %v2842 = vadd.f32 %v2745, %v2841
        %v2843 = vpop.f32.mrf.mxu0
        %v2844 = vpop.f32.mrf.mxu0
        %v2845 = vadd.f32 %v2748, %v2844
        %v2846 = vpop.f32.mrf.mxu0
        %2847 = vmatprep.mubr.bf16.mxu0 0
        %2848 = vmatmul.mubr.bf16.gmra.mxu0 %v317
        %v2849 = vpop.f32.mrf.mxu0
        %v2850 = vadd.f32 %v2753, %v2849
        %v2851 = vpop.f32.mrf.mxu0
        %v2852 = vpop.f32.mrf.mxu0
        %v2853 = vadd.f32 %v2756, %v2852
        %v2854 = vpop.f32.mrf.mxu0
        %2855 = vdwg.mxu0
        %v2856 = vpack.c.bf16 %v1910, %v1906
        %v2857 = vpack.c.bf16 %v1912, %v1908
        %v2858 = vpack.c.bf16 %v2136, %v2132
        %v2859 = vpack.c.bf16 %v2138, %v2134
        %v2860 = vpack.c.bf16 %v2362, %v2358
        %v2861 = vpack.c.bf16 %v2364, %v2360
        %v2862 = vpack.c.bf16 %v2588, %v2584
        %v2863 = vpack.c.bf16 %v2590, %v2586
        %v2864 = vpack.c.bf16 %v2797, %v2794
        %v2865 = vpack.c.bf16 %v1920, %v1916
        %v2866 = vpack.c.bf16 %v1922, %v1918
        %v2867 = vpack.c.bf16 %v2146, %v2142
        %v2868 = vpack.c.bf16 %v2148, %v2144
        %v2869 = vpack.c.bf16 %v2372, %v2368
        %v2870 = vpack.c.bf16 %v2374, %v2370
        %v2871 = vpack.c.bf16 %v2598, %v2594
        %v2872 = vpack.c.bf16 %v2600, %v2596
        %v2873 = vpack.c.bf16 %v2805, %v2802
        %v2874 = vpack.c.bf16 %v1930, %v1926
        %v2875 = vpack.c.bf16 %v1932, %v1928
        %v2876 = vpack.c.bf16 %v2156, %v2152
        %v2877 = vpack.c.bf16 %v2158, %v2154
        %v2878 = vpack.c.bf16 %v2382, %v2378
        %v2879 = vpack.c.bf16 %v2384, %v2380
        %v2880 = vpack.c.bf16 %v2608, %v2604
        %v2881 = vpack.c.bf16 %v2610, %v2606
        %v2882 = vpack.c.bf16 %v2813, %v2810
        %v2883 = vpack.c.bf16 %v1940, %v1936
        %v2884 = vpack.c.bf16 %v1942, %v1938
        %v2885 = vpack.c.bf16 %v2166, %v2162
        %v2886 = vpack.c.bf16 %v2168, %v2164
        %v2887 = vpack.c.bf16 %v2392, %v2388
        %v2888 = vpack.c.bf16 %v2394, %v2390
        %v2889 = vpack.c.bf16 %v2618, %v2614
        %v2890 = vpack.c.bf16 %v2620, %v2616
        %v2891 = vpack.c.bf16 %v2821, %v2818
        %v2892 = vpack.c.bf16 %v1950, %v1946
        %v2893 = vpack.c.bf16 %v1952, %v1948
        %v2894 = vpack.c.bf16 %v2176, %v2172
        %v2895 = vpack.c.bf16 %v2178, %v2174
        %v2896 = vpack.c.bf16 %v2402, %v2398
        %v2897 = vpack.c.bf16 %v2404, %v2400
        %v2898 = vpack.c.bf16 %v2628, %v2624
        %v2899 = vpack.c.bf16 %v2630, %v2626
        %v2900 = vpack.c.bf16 %v2829, %v2826
        %v2901 = vpack.c.bf16 %v1960, %v1956
        %v2902 = vpack.c.bf16 %v1962, %v1958
        %v2903 = vpack.c.bf16 %v2186, %v2182
        %v2904 = vpack.c.bf16 %v2188, %v2184
        %v2905 = vpack.c.bf16 %v2412, %v2408
        %v2906 = vpack.c.bf16 %v2414, %v2410
        %v2907 = vpack.c.bf16 %v2638, %v2634
        %v2908 = vpack.c.bf16 %v2640, %v2636
        %v2909 = vpack.c.bf16 %v2837, %v2834
        %v2910 = vpack.c.bf16 %v1970, %v1966
        %v2911 = vpack.c.bf16 %v1972, %v1968
        %v2912 = vpack.c.bf16 %v2196, %v2192
        %v2913 = vpack.c.bf16 %v2198, %v2194
        %v2914 = vpack.c.bf16 %v2422, %v2418
        %v2915 = vpack.c.bf16 %v2424, %v2420
        %v2916 = vpack.c.bf16 %v2648, %v2644
        %v2917 = vpack.c.bf16 %v2650, %v2646
        %v2918 = vpack.c.bf16 %v2845, %v2842
        %v2919 = vpack.c.bf16 %v1980, %v1976
        %v2920 = vpack.c.bf16 %v1982, %v1978
        %v2921 = vpack.c.bf16 %v2206, %v2202
        %v2922 = vpack.c.bf16 %v2208, %v2204
        %v2923 = vpack.c.bf16 %v2432, %v2428
        %v2924 = vpack.c.bf16 %v2434, %v2430
        %v2925 = vpack.c.bf16 %v2658, %v2654
        %v2926 = vpack.c.bf16 %v2660, %v2656
        %v2927 = vpack.c.bf16 %v2853, %v2850
        %v2928 = vlaneseq
        %v2929 = vshrl.u32 %v2928, 7
        %v2930 = vadd.s32 %v2929, 8
        %v2931 = vadd.s32 %v2929, 16
        %v2932 = vadd.s32 %v2929, 24
        %v2933 = vadd.s32 %v2929, 32
        %v2934 = vadd.s32 %v2929, 40
        %v2935 = vadd.s32 %v2929, 48
        %v2936 = vadd.s32 %v2929, 56
        %v2937 = vadd.s32 %v2929, 64
        %v2938 = vadd.s32 %v2929, 72
        %v2939 = vadd.s32 %v2929, 80
        %v2940 = vadd.s32 %v2929, 88
        %v2941 = vadd.s32 %v2929, 96
        %v2942 = vadd.s32 %v2929, 104
        %v2943 = vadd.s32 %v2929, 112
        %v2944 = vadd.s32 %v2929, 120
        %v2945 = vlaneseq
        %v2946 = vand.u32 %v2945, 127
        %vm2947 = vcmp.le.s32.totalorder %v2946, %v2929
        %vm2948 = vcmp.le.s32.totalorder %v2946, %v2930
        %vm2949 = vcmp.le.s32.totalorder %v2946, %v2931
        %vm2950 = vcmp.le.s32.totalorder %v2946, %v2932
        %vm2951 = vcmp.le.s32.totalorder %v2946, %v2933
        %vm2952 = vcmp.le.s32.totalorder %v2946, %v2934
        %vm2953 = vcmp.le.s32.totalorder %v2946, %v2935
        %vm2954 = vcmp.le.s32.totalorder %v2946, %v2936
        %vm2955 = vcmp.le.s32.totalorder %v2946, %v2937
        %vm2956 = vcmp.le.s32.totalorder %v2946, %v2938
        %vm2957 = vcmp.le.s32.totalorder %v2946, %v2939
        %vm2958 = vcmp.le.s32.totalorder %v2946, %v2940
        %vm2959 = vcmp.le.s32.totalorder %v2946, %v2941
        %vm2960 = vcmp.le.s32.totalorder %v2946, %v2942
        %vm2961 = vcmp.le.s32.totalorder %v2946, %v2943
        %vm2962 = vcmp.le.s32.totalorder %v2946, %v2944
        %v2963 = vsel %vm2947, 0.0, -1e+30
        %v2964 = vsel %vm2948, 0.0, -1e+30
        %v2965 = vsel %vm2949, 0.0, -1e+30
        %v2966 = vsel %vm2950, 0.0, -1e+30
        %v2967 = vsel %vm2951, 0.0, -1e+30
        %v2968 = vsel %vm2952, 0.0, -1e+30
        %v2969 = vsel %vm2953, 0.0, -1e+30
        %v2970 = vsel %vm2954, 0.0, -1e+30
        %v2971 = vsel %vm2955, 0.0, -1e+30
        %v2972 = vsel %vm2956, 0.0, -1e+30
        %v2973 = vsel %vm2957, 0.0, -1e+30
        %v2974 = vsel %vm2958, 0.0, -1e+30
        %v2975 = vsel %vm2959, 0.0, -1e+30
        %v2976 = vsel %vm2960, 0.0, -1e+30
        %v2977 = vsel %vm2961, 0.0, -1e+30
        %v2978 = vsel %vm2962, 0.0, -1e+30
        %vm2979 = vcmask 523264
        %v2981 = vsel %vm2979, %v2856, 0
        %v2984 = vsel %vm2979, %v2865, 0
        %v2987 = vsel %vm2979, %v2874, 0
        %v2990 = vsel %vm2979, %v2883, 0
        %v2993 = vsel %vm2979, %v2892, 0
        %v2996 = vsel %vm2979, %v2901, 0
        %v2999 = vsel %vm2979, %v2910, 0
        %v3002 = vsel %vm2979, %v2919, 0
        %v3005 = vsel %vm2979, %v2859, 0
        %v3008 = vsel %vm2979, %v2868, 0
        %v3011 = vsel %vm2979, %v2877, 0
        %v3014 = vsel %vm2979, %v2886, 0
        %v3017 = vsel %vm2979, %v2895, 0
        %v3020 = vsel %vm2979, %v2904, 0
        %v3023 = vsel %vm2979, %v2913, 0
        %v3026 = vsel %vm2979, %v2922, 0
        %3028 = vmatprep.subr.bf16.mxu0 0
        %3029 = vmatpush1.bf16.xpose.msra.mxu0 %v3026
        %3030 = vmatprep.subr.bf16.mxu0 0
        %3031 = vmatpush1.bf16.xpose.msra.mxu0 %v3023
        %3032 = vmatprep.subr.bf16.mxu0 0
        %3033 = vmatpush1.bf16.xpose.msra.mxu0 %v3020
        %3034 = vmatprep.subr.bf16.mxu0 0
        %3035 = vmatpush1.bf16.xpose.msra.mxu0 %v3017
        %3036 = vmatprep.subr.bf16.mxu0 0
        %3037 = vmatpush1.bf16.xpose.msra.mxu0 %v3014
        %3038 = vmatprep.subr.bf16.mxu0 0
        %3039 = vmatpush1.bf16.xpose.msra.mxu0 %v3011
        %3040 = vmatprep.subr.bf16.mxu0 0
        %3041 = vmatpush1.bf16.xpose.msra.mxu0 %v3008
        %3042 = vmatprep.subr.bf16.mxu0 0
        %3043 = vmatpush1.bf16.xpose.msra.mxu0 %v3005
        %3044 = vmatprep.subr.bf16.mxu0 0
        %3045 = vmatpush2.bf16.xpose.msra.mxu0 0
        %3046 = vmatprep.subr.bf16.mxu0 0
        %3047 = vmatpush2.bf16.xpose.msra.mxu0 0
        %3048 = vmatprep.subr.bf16.mxu0 0
        %3049 = vmatpush2.bf16.xpose.msra.mxu0 0
        %3050 = vmatprep.subr.bf16.mxu0 0
        %3051 = vmatpush2.bf16.xpose.msra.mxu0 0
        %3052 = vmatprep.subr.bf16.mxu0 0
        %3053 = vmatpush2.bf16.xpose.msra.mxu0 0
        %3054 = vmatprep.subr.bf16.mxu0 0
        %3055 = vmatpush2.bf16.xpose.msra.mxu0 0
        %3056 = vmatprep.subr.bf16.mxu0 0
        %3057 = vmatpush2.bf16.xpose.msra.mxu0 0
        %3058 = vmatprep.subr.bf16.mxu0 0
        %3059 = vmatpush2.bf16.xpose.msra.mxu0 0
        %3060 = vmatprep.mubr.bf16.mxu0 0
        %3061 = vmatmul.mubr.bf16.gmra.mxu0 %v2981
        %v3062 = vpop.f32.mrf.mxu0
        %v3063 = vadd.f32 %v2963, %v3062
        %v3064 = vpop.f32.mrf.mxu0
        %v3065 = vpop.f32.mrf.mxu0
        %v3066 = vadd.f32 %v2964, %v3065
        %v3067 = vpop.f32.mrf.mxu0
        %3068 = vmatprep.mubr.bf16.mxu0 0
        %3069 = vmatmul.mubr.bf16.gmra.mxu0 %v2984
        %v3070 = vpop.f32.mrf.mxu0
        %v3071 = vadd.f32 %v2965, %v3070
        %v3072 = vpop.f32.mrf.mxu0
        %v3073 = vpop.f32.mrf.mxu0
        %v3074 = vadd.f32 %v2966, %v3073
        %v3075 = vpop.f32.mrf.mxu0
        %3076 = vmatprep.mubr.bf16.mxu0 0
        %3077 = vmatmul.mubr.bf16.gmra.mxu0 %v2987
        %v3078 = vpop.f32.mrf.mxu0
        %v3079 = vadd.f32 %v2967, %v3078
        %v3080 = vpop.f32.mrf.mxu0
        %v3081 = vpop.f32.mrf.mxu0
        %v3082 = vadd.f32 %v2968, %v3081
        %v3083 = vpop.f32.mrf.mxu0
        %3084 = vmatprep.mubr.bf16.mxu0 0
        %3085 = vmatmul.mubr.bf16.gmra.mxu0 %v2990
        %v3086 = vpop.f32.mrf.mxu0
        %v3087 = vadd.f32 %v2969, %v3086
        %v3088 = vpop.f32.mrf.mxu0
        %v3089 = vpop.f32.mrf.mxu0
        %v3090 = vadd.f32 %v2970, %v3089
        %v3091 = vpop.f32.mrf.mxu0
        %3092 = vmatprep.mubr.bf16.mxu0 0
        %3093 = vmatmul.mubr.bf16.gmra.mxu0 %v2993
        %v3094 = vpop.f32.mrf.mxu0
        %v3095 = vadd.f32 %v2971, %v3094
        %v3096 = vpop.f32.mrf.mxu0
        %v3097 = vpop.f32.mrf.mxu0
        %v3098 = vadd.f32 %v2972, %v3097
        %v3099 = vpop.f32.mrf.mxu0
        %3100 = vmatprep.mubr.bf16.mxu0 0
        %3101 = vmatmul.mubr.bf16.gmra.mxu0 %v2996
        %v3102 = vpop.f32.mrf.mxu0
        %v3103 = vadd.f32 %v2973, %v3102
        %v3104 = vpop.f32.mrf.mxu0
        %v3105 = vpop.f32.mrf.mxu0
        %v3106 = vadd.f32 %v2974, %v3105
        %v3107 = vpop.f32.mrf.mxu0
        %3108 = vmatprep.mubr.bf16.mxu0 0
        %3109 = vmatmul.mubr.bf16.gmra.mxu0 %v2999
        %v3110 = vpop.f32.mrf.mxu0
        %v3111 = vadd.f32 %v2975, %v3110
        %v3112 = vpop.f32.mrf.mxu0
        %v3113 = vpop.f32.mrf.mxu0
        %v3114 = vadd.f32 %v2976, %v3113
        %v3115 = vpop.f32.mrf.mxu0
        %3116 = vmatprep.mubr.bf16.mxu0 0
        %3117 = vmatmul.mubr.bf16.gmra.mxu0 %v3002
        %v3118 = vpop.f32.mrf.mxu0
        %v3119 = vadd.f32 %v2977, %v3118
        %v3120 = vpop.f32.mrf.mxu0
        %v3121 = vpop.f32.mrf.mxu0
        %v3122 = vadd.f32 %v2978, %v3121
        %v3123 = vpop.f32.mrf.mxu0
        %3124 = vdwg.mxu0
        %3125 = vmax.xlane.f32.xlu0 %v3063
        %v3126 = vpop.xlane.xlu0 %3125
        %3127 = vmax.xlane.f32.xlu0 %v3066
        %v3128 = vpop.xlane.xlu0 %3127
        %3129 = vmax.xlane.f32.xlu0 %v3071
        %v3130 = vpop.xlane.xlu0 %3129
        %3131 = vmax.xlane.f32.xlu0 %v3074
        %v3132 = vpop.xlane.xlu0 %3131
        %3133 = vmax.xlane.f32.xlu0 %v3079
        %v3134 = vpop.xlane.xlu0 %3133
        %3135 = vmax.xlane.f32.xlu0 %v3082
        %v3136 = vpop.xlane.xlu0 %3135
        %3137 = vmax.xlane.f32.xlu0 %v3087
        %v3138 = vpop.xlane.xlu0 %3137
        %3139 = vmax.xlane.f32.xlu0 %v3090
        %v3140 = vpop.xlane.xlu0 %3139
        %3141 = vmax.xlane.f32.xlu0 %v3095
        %v3142 = vpop.xlane.xlu0 %3141
        %3143 = vmax.xlane.f32.xlu0 %v3098
        %v3144 = vpop.xlane.xlu0 %3143
        %3145 = vmax.xlane.f32.xlu0 %v3103
        %v3146 = vpop.xlane.xlu0 %3145
        %3147 = vmax.xlane.f32.xlu0 %v3106
        %v3148 = vpop.xlane.xlu0 %3147
        %3149 = vmax.xlane.f32.xlu0 %v3111
        %v3150 = vpop.xlane.xlu0 %3149
        %3151 = vmax.xlane.f32.xlu0 %v3114
        %v3152 = vpop.xlane.xlu0 %3151
        %3153 = vmax.xlane.f32.xlu0 %v3119
        %v3154 = vpop.xlane.xlu0 %3153
        %3155 = vmax.xlane.f32.xlu0 %v3122
        %v3156 = vpop.xlane.xlu0 %3155
        %v3157 = vsub.f32 %v3063, %v3126
        %v3158 = vsub.f32 %v3066, %v3128
        %v3159 = vsub.f32 %v3071, %v3130
        %v3160 = vsub.f32 %v3074, %v3132
        %v3161 = vsub.f32 %v3079, %v3134
        %v3162 = vsub.f32 %v3082, %v3136
        %v3163 = vsub.f32 %v3087, %v3138
        %v3164 = vsub.f32 %v3090, %v3140
        %v3165 = vsub.f32 %v3095, %v3142
        %v3166 = vsub.f32 %v3098, %v3144
        %v3167 = vsub.f32 %v3103, %v3146
        %v3168 = vsub.f32 %v3106, %v3148
        %v3169 = vsub.f32 %v3111, %v3150
        %v3170 = vsub.f32 %v3114, %v3152
        %v3171 = vsub.f32 %v3119, %v3154
        %v3172 = vsub.f32 %v3122, %v3156
        %v3173 = vmul.f32 %v3157, 1.442695
        %v3174 = vpow.pop %v3173
        %v3175 = vmul.f32 %v3158, 1.442695
        %v3176 = vpow.pop %v3175
        %v3177 = vmul.f32 %v3159, 1.442695
        %v3178 = vpow.pop %v3177
        %v3179 = vmul.f32 %v3160, 1.442695
        %v3180 = vpow.pop %v3179
        %v3181 = vmul.f32 %v3161, 1.442695
        %v3182 = vpow.pop %v3181
        %v3183 = vmul.f32 %v3162, 1.442695
        %v3184 = vpow.pop %v3183
        %v3185 = vmul.f32 %v3163, 1.442695
        %v3186 = vpow.pop %v3185
        %v3187 = vmul.f32 %v3164, 1.442695
        %v3188 = vpow.pop %v3187
        %v3189 = vmul.f32 %v3165, 1.442695
        %v3190 = vpow.pop %v3189
        %v3191 = vmul.f32 %v3166, 1.442695
        %v3192 = vpow.pop %v3191
        %v3193 = vmul.f32 %v3167, 1.442695
        %v3194 = vpow.pop %v3193
        %v3195 = vmul.f32 %v3168, 1.442695
        %v3196 = vpow.pop %v3195
        %v3197 = vmul.f32 %v3169, 1.442695
        %v3198 = vpow.pop %v3197
        %v3199 = vmul.f32 %v3170, 1.442695
        %v3200 = vpow.pop %v3199
        %v3201 = vmul.f32 %v3171, 1.442695
        %v3202 = vpow.pop %v3201
        %v3203 = vmul.f32 %v3172, 1.442695
        %v3204 = vpow.pop %v3203
        %3205 = vadd.xlane.f32.xlu0 %v3174
        %v3206 = vpop.xlane.xlu0 %3205
        %3207 = vadd.xlane.f32.xlu0 %v3176
        %v3208 = vpop.xlane.xlu0 %3207
        %3209 = vadd.xlane.f32.xlu0 %v3178
        %v3210 = vpop.xlane.xlu0 %3209
        %3211 = vadd.xlane.f32.xlu0 %v3180
        %v3212 = vpop.xlane.xlu0 %3211
        %3213 = vadd.xlane.f32.xlu0 %v3182
        %v3214 = vpop.xlane.xlu0 %3213
        %3215 = vadd.xlane.f32.xlu0 %v3184
        %v3216 = vpop.xlane.xlu0 %3215
        %3217 = vadd.xlane.f32.xlu0 %v3186
        %v3218 = vpop.xlane.xlu0 %3217
        %3219 = vadd.xlane.f32.xlu0 %v3188
        %v3220 = vpop.xlane.xlu0 %3219
        %3221 = vadd.xlane.f32.xlu0 %v3190
        %v3222 = vpop.xlane.xlu0 %3221
        %3223 = vadd.xlane.f32.xlu0 %v3192
        %v3224 = vpop.xlane.xlu0 %3223
        %3225 = vadd.xlane.f32.xlu0 %v3194
        %v3226 = vpop.xlane.xlu0 %3225
        %3227 = vadd.xlane.f32.xlu0 %v3196
        %v3228 = vpop.xlane.xlu0 %3227
        %3229 = vadd.xlane.f32.xlu0 %v3198
        %v3230 = vpop.xlane.xlu0 %3229
        %3231 = vadd.xlane.f32.xlu0 %v3200
        %v3232 = vpop.xlane.xlu0 %3231
        %3233 = vadd.xlane.f32.xlu0 %v3202
        %v3234 = vpop.xlane.xlu0 %3233
        %3235 = vadd.xlane.f32.xlu0 %v3204
        %v3236 = vpop.xlane.xlu0 %3235
        %v3237 = vrcp.pop %v3206
        %v3238 = vrcp.pop %v3208
        %v3239 = vrcp.pop %v3210
        %v3240 = vrcp.pop %v3212
        %v3241 = vrcp.pop %v3214
        %v3242 = vrcp.pop %v3216
        %v3243 = vrcp.pop %v3218
        %v3244 = vrcp.pop %v3220
        %v3245 = vrcp.pop %v3222
        %v3246 = vrcp.pop %v3224
        %v3247 = vrcp.pop %v3226
        %v3248 = vrcp.pop %v3228
        %v3249 = vrcp.pop %v3230
        %v3250 = vrcp.pop %v3232
        %v3251 = vrcp.pop %v3234
        %v3252 = vrcp.pop %v3236
        %v3253 = vpack.c.bf16 %v3176, %v3174
        %v3254 = vpack.c.bf16 %v3180, %v3178
        %v3255 = vpack.c.bf16 %v3184, %v3182
        %v3256 = vpack.c.bf16 %v3188, %v3186
        %v3257 = vpack.c.bf16 %v3192, %v3190
        %v3258 = vpack.c.bf16 %v3196, %v3194
        %v3259 = vpack.c.bf16 %v3200, %v3198
        %v3260 = vpack.c.bf16 %v3204, %v3202
        %3261 = vmatprep.subr.bf16.mxu0 0
        %3262 = vmatpush1.bf16.msra.mxu0 %v2925
        %3263 = vmatprep.subr.bf16.mxu0 0
        %3264 = vmatpush1.bf16.msra.mxu0 %v2916
        %3265 = vmatprep.subr.bf16.mxu0 0
        %3266 = vmatpush1.bf16.msra.mxu0 %v2907
        %3267 = vmatprep.subr.bf16.mxu0 0
        %3268 = vmatpush1.bf16.msra.mxu0 %v2898
        %3269 = vmatprep.subr.bf16.mxu0 0
        %3270 = vmatpush1.bf16.msra.mxu0 %v2889
        %3271 = vmatprep.subr.bf16.mxu0 0
        %3272 = vmatpush1.bf16.msra.mxu0 %v2880
        %3273 = vmatprep.subr.bf16.mxu0 0
        %3274 = vmatpush1.bf16.msra.mxu0 %v2871
        %3275 = vmatprep.subr.bf16.mxu0 0
        %3276 = vmatpush1.bf16.msra.mxu0 %v2862
        %3277 = vmatprep.subr.bf16.mxu0 0
        %3278 = vmatpush2.bf16.msra.mxu0 0
        %3279 = vmatprep.subr.bf16.mxu0 0
        %3280 = vmatpush2.bf16.msra.mxu0 0
        %3281 = vmatprep.subr.bf16.mxu0 0
        %3282 = vmatpush2.bf16.msra.mxu0 0
        %3283 = vmatprep.subr.bf16.mxu0 0
        %3284 = vmatpush2.bf16.msra.mxu0 0
        %3285 = vmatprep.subr.bf16.mxu0 0
        %3286 = vmatpush2.bf16.msra.mxu0 0
        %3287 = vmatprep.subr.bf16.mxu0 0
        %3288 = vmatpush2.bf16.msra.mxu0 0
        %3289 = vmatprep.subr.bf16.mxu0 0
        %3290 = vmatpush2.bf16.msra.mxu0 0
        %3291 = vmatprep.subr.bf16.mxu0 0
        %3292 = vmatpush2.bf16.msra.mxu0 0
        %3293 = vmatprep.mubr.bf16.mxu0 0
        %3294 = vmatmul.mubr.bf16.gmra.mxu0 %v3253
        %v3295 = vpop.f32.mrf.mxu0
        %v3296 = vadd.f32 0.0, %v3295
        %v3297 = vpop.f32.mrf.mxu0
        %v3298 = vpop.f32.mrf.mxu0
        %v3299 = vadd.f32 0.0, %v3298
        %v3300 = vpop.f32.mrf.mxu0
        %3301 = vmatprep.mubr.bf16.mxu0 0
        %3302 = vmatmul.mubr.bf16.gmra.mxu0 %v3254
        %v3303 = vpop.f32.mrf.mxu0
        %v3304 = vadd.f32 0.0, %v3303
        %v3305 = vpop.f32.mrf.mxu0
        %v3306 = vpop.f32.mrf.mxu0
        %v3307 = vadd.f32 0.0, %v3306
        %v3308 = vpop.f32.mrf.mxu0
        %3309 = vmatprep.mubr.bf16.mxu0 0
        %3310 = vmatmul.mubr.bf16.gmra.mxu0 %v3255
        %v3311 = vpop.f32.mrf.mxu0
        %v3312 = vadd.f32 0.0, %v3311
        %v3313 = vpop.f32.mrf.mxu0
        %v3314 = vpop.f32.mrf.mxu0
        %v3315 = vadd.f32 0.0, %v3314
        %v3316 = vpop.f32.mrf.mxu0
        %3317 = vmatprep.mubr.bf16.mxu0 0
        %3318 = vmatmul.mubr.bf16.gmra.mxu0 %v3256
        %v3319 = vpop.f32.mrf.mxu0
        %v3320 = vadd.f32 0.0, %v3319
        %v3321 = vpop.f32.mrf.mxu0
        %v3322 = vpop.f32.mrf.mxu0
        %v3323 = vadd.f32 0.0, %v3322
        %v3324 = vpop.f32.mrf.mxu0
        %3325 = vmatprep.mubr.bf16.mxu0 0
        %3326 = vmatmul.mubr.bf16.gmra.mxu0 %v3257
        %v3327 = vpop.f32.mrf.mxu0
        %v3328 = vadd.f32 0.0, %v3327
        %v3329 = vpop.f32.mrf.mxu0
        %v3330 = vpop.f32.mrf.mxu0
        %v3331 = vadd.f32 0.0, %v3330
        %v3332 = vpop.f32.mrf.mxu0
        %3333 = vmatprep.mubr.bf16.mxu0 0
        %3334 = vmatmul.mubr.bf16.gmra.mxu0 %v3258
        %v3335 = vpop.f32.mrf.mxu0
        %v3336 = vadd.f32 0.0, %v3335
        %v3337 = vpop.f32.mrf.mxu0
        %v3338 = vpop.f32.mrf.mxu0
        %v3339 = vadd.f32 0.0, %v3338
        %v3340 = vpop.f32.mrf.mxu0
        %3341 = vmatprep.mubr.bf16.mxu0 0
        %3342 = vmatmul.mubr.bf16.gmra.mxu0 %v3259
        %v3343 = vpop.f32.mrf.mxu0
        %v3344 = vadd.f32 0.0, %v3343
        %v3345 = vpop.f32.mrf.mxu0
        %v3346 = vpop.f32.mrf.mxu0
        %v3347 = vadd.f32 0.0, %v3346
        %v3348 = vpop.f32.mrf.mxu0
        %3349 = vmatprep.mubr.bf16.mxu0 0
        %3350 = vmatmul.mubr.bf16.gmra.mxu0 %v3260
        %v3351 = vpop.f32.mrf.mxu0
        %v3352 = vadd.f32 0.0, %v3351
        %v3353 = vpop.f32.mrf.mxu0
        %v3354 = vpop.f32.mrf.mxu0
        %v3355 = vadd.f32 0.0, %v3354
        %v3356 = vpop.f32.mrf.mxu0
        %3357 = vdwg.mxu0
        %v3358 = vmul.f32 %v3296, %v3237
        %v3359 = vmul.f32 %v3299, %v3238
        %v3360 = vmul.f32 %v3304, %v3239
        %v3361 = vmul.f32 %v3307, %v3240
        %v3362 = vmul.f32 %v3312, %v3241
        %v3363 = vmul.f32 %v3315, %v3242
        %v3364 = vmul.f32 %v3320, %v3243
        %v3365 = vmul.f32 %v3323, %v3244
        %v3366 = vmul.f32 %v3328, %v3245
        %v3367 = vmul.f32 %v3331, %v3246
        %v3368 = vmul.f32 %v3336, %v3247
        %v3369 = vmul.f32 %v3339, %v3248
        %v3370 = vmul.f32 %v3344, %v3249
        %v3371 = vmul.f32 %v3347, %v3250
        %v3372 = vmul.f32 %v3352, %v3251
        %v3373 = vmul.f32 %v3355, %v3252
        %v3374 = vpack.c.bf16 %v3359, %v3358
        %v3375 = vpack.c.bf16 %v3361, %v3360
        %v3376 = vpack.c.bf16 %v3363, %v3362
        %v3377 = vpack.c.bf16 %v3365, %v3364
        %v3378 = vpack.c.bf16 %v3367, %v3366
        %v3379 = vpack.c.bf16 %v3369, %v3368
        %v3380 = vpack.c.bf16 %v3371, %v3370
        %v3381 = vpack.c.bf16 %v3373, %v3372
        %3390 = vrot.lane.b32.xlu0 %v2856, 64
        %v3391 = vpop.permute.xlu0 %3390
        %3392 = vrot.lane.b32.xlu0 %v2865, 64
        %v3393 = vpop.permute.xlu0 %3392
        %3394 = vrot.lane.b32.xlu0 %v2874, 64
        %v3395 = vpop.permute.xlu0 %3394
        %3396 = vrot.lane.b32.xlu0 %v2883, 64
        %v3397 = vpop.permute.xlu0 %3396
        %3398 = vrot.lane.b32.xlu0 %v2892, 64
        %v3399 = vpop.permute.xlu0 %3398
        %3400 = vrot.lane.b32.xlu0 %v2901, 64
        %v3401 = vpop.permute.xlu0 %3400
        %3402 = vrot.lane.b32.xlu0 %v2910, 64
        %v3403 = vpop.permute.xlu0 %3402
        %3404 = vrot.lane.b32.xlu0 %v2919, 64
        %v3405 = vpop.permute.xlu0 %3404
        %3414 = vrot.lane.b32.xlu0 %v2859, 64
        %v3415 = vpop.permute.xlu0 %3414
        %3416 = vrot.lane.b32.xlu0 %v2868, 64
        %v3417 = vpop.permute.xlu0 %3416
        %3418 = vrot.lane.b32.xlu0 %v2877, 64
        %v3419 = vpop.permute.xlu0 %3418
        %3420 = vrot.lane.b32.xlu0 %v2886, 64
        %v3421 = vpop.permute.xlu0 %3420
        %3422 = vrot.lane.b32.xlu0 %v2895, 64
        %v3423 = vpop.permute.xlu0 %3422
        %3424 = vrot.lane.b32.xlu0 %v2904, 64
        %v3425 = vpop.permute.xlu0 %3424
        %3426 = vrot.lane.b32.xlu0 %v2913, 64
        %v3427 = vpop.permute.xlu0 %3426
        %3428 = vrot.lane.b32.xlu0 %v2922, 64
        %v3429 = vpop.permute.xlu0 %3428
        %v3431 = vsel %vm2979, %v3391, 0
        %v3434 = vsel %vm2979, %v3393, 0
        %v3437 = vsel %vm2979, %v3395, 0
        %v3440 = vsel %vm2979, %v3397, 0
        %v3443 = vsel %vm2979, %v3399, 0
        %v3446 = vsel %vm2979, %v3401, 0
        %v3449 = vsel %vm2979, %v3403, 0
        %v3452 = vsel %vm2979, %v3405, 0
        %v3455 = vsel %vm2979, %v3415, 0
        %v3458 = vsel %vm2979, %v3417, 0
        %v3461 = vsel %vm2979, %v3419, 0
        %v3464 = vsel %vm2979, %v3421, 0
        %v3467 = vsel %vm2979, %v3423, 0
        %v3470 = vsel %vm2979, %v3425, 0
        %v3473 = vsel %vm2979, %v3427, 0
        %v3476 = vsel %vm2979, %v3429, 0
        %3478 = vmatprep.subr.bf16.mxu0 0
        %3479 = vmatpush1.bf16.xpose.msra.mxu0 %v3476
        %3480 = vmatprep.subr.bf16.mxu0 0
        %3481 = vmatpush1.bf16.xpose.msra.mxu0 %v3473
        %3482 = vmatprep.subr.bf16.mxu0 0
        %3483 = vmatpush1.bf16.xpose.msra.mxu0 %v3470
        %3484 = vmatprep.subr.bf16.mxu0 0
        %3485 = vmatpush1.bf16.xpose.msra.mxu0 %v3467
        %3486 = vmatprep.subr.bf16.mxu0 0
        %3487 = vmatpush1.bf16.xpose.msra.mxu0 %v3464
        %3488 = vmatprep.subr.bf16.mxu0 0
        %3489 = vmatpush1.bf16.xpose.msra.mxu0 %v3461
        %3490 = vmatprep.subr.bf16.mxu0 0
        %3491 = vmatpush1.bf16.xpose.msra.mxu0 %v3458
        %3492 = vmatprep.subr.bf16.mxu0 0
        %3493 = vmatpush1.bf16.xpose.msra.mxu0 %v3455
        %3494 = vmatprep.subr.bf16.mxu0 0
        %3495 = vmatpush2.bf16.xpose.msra.mxu0 0
        %3496 = vmatprep.subr.bf16.mxu0 0
        %3497 = vmatpush2.bf16.xpose.msra.mxu0 0
        %3498 = vmatprep.subr.bf16.mxu0 0
        %3499 = vmatpush2.bf16.xpose.msra.mxu0 0
        %3500 = vmatprep.subr.bf16.mxu0 0
        %3501 = vmatpush2.bf16.xpose.msra.mxu0 0
        %3502 = vmatprep.subr.bf16.mxu0 0
        %3503 = vmatpush2.bf16.xpose.msra.mxu0 0
        %3504 = vmatprep.subr.bf16.mxu0 0
        %3505 = vmatpush2.bf16.xpose.msra.mxu0 0
        %3506 = vmatprep.subr.bf16.mxu0 0
        %3507 = vmatpush2.bf16.xpose.msra.mxu0 0
        %3508 = vmatprep.subr.bf16.mxu0 0
        %3509 = vmatpush2.bf16.xpose.msra.mxu0 0
        %3510 = vmatprep.mubr.bf16.mxu0 0
        %3511 = vmatmul.mubr.bf16.gmra.mxu0 %v3431
        %v3512 = vpop.f32.mrf.mxu0
        %v3513 = vadd.f32 %v2963, %v3512
        %v3514 = vpop.f32.mrf.mxu0
        %v3515 = vpop.f32.mrf.mxu0
        %v3516 = vadd.f32 %v2964, %v3515
        %v3517 = vpop.f32.mrf.mxu0
        %3518 = vmatprep.mubr.bf16.mxu0 0
        %3519 = vmatmul.mubr.bf16.gmra.mxu0 %v3434
        %v3520 = vpop.f32.mrf.mxu0
        %v3521 = vadd.f32 %v2965, %v3520
        %v3522 = vpop.f32.mrf.mxu0
        %v3523 = vpop.f32.mrf.mxu0
        %v3524 = vadd.f32 %v2966, %v3523
        %v3525 = vpop.f32.mrf.mxu0
        %3526 = vmatprep.mubr.bf16.mxu0 0
        %3527 = vmatmul.mubr.bf16.gmra.mxu0 %v3437
        %v3528 = vpop.f32.mrf.mxu0
        %v3529 = vadd.f32 %v2967, %v3528
        %v3530 = vpop.f32.mrf.mxu0
        %v3531 = vpop.f32.mrf.mxu0
        %v3532 = vadd.f32 %v2968, %v3531
        %v3533 = vpop.f32.mrf.mxu0
        %3534 = vmatprep.mubr.bf16.mxu0 0
        %3535 = vmatmul.mubr.bf16.gmra.mxu0 %v3440
        %v3536 = vpop.f32.mrf.mxu0
        %v3537 = vadd.f32 %v2969, %v3536
        %v3538 = vpop.f32.mrf.mxu0
        %v3539 = vpop.f32.mrf.mxu0
        %v3540 = vadd.f32 %v2970, %v3539
        %v3541 = vpop.f32.mrf.mxu0
        %3542 = vmatprep.mubr.bf16.mxu0 0
        %3543 = vmatmul.mubr.bf16.gmra.mxu0 %v3443
        %v3544 = vpop.f32.mrf.mxu0
        %v3545 = vadd.f32 %v2971, %v3544
        %v3546 = vpop.f32.mrf.mxu0
        %v3547 = vpop.f32.mrf.mxu0
        %v3548 = vadd.f32 %v2972, %v3547
        %v3549 = vpop.f32.mrf.mxu0
        %3550 = vmatprep.mubr.bf16.mxu0 0
        %3551 = vmatmul.mubr.bf16.gmra.mxu0 %v3446
        %v3552 = vpop.f32.mrf.mxu0
        %v3553 = vadd.f32 %v2973, %v3552
        %v3554 = vpop.f32.mrf.mxu0
        %v3555 = vpop.f32.mrf.mxu0
        %v3556 = vadd.f32 %v2974, %v3555
        %v3557 = vpop.f32.mrf.mxu0
        %3558 = vmatprep.mubr.bf16.mxu0 0
        %3559 = vmatmul.mubr.bf16.gmra.mxu0 %v3449
        %v3560 = vpop.f32.mrf.mxu0
        %v3561 = vadd.f32 %v2975, %v3560
        %v3562 = vpop.f32.mrf.mxu0
        %v3563 = vpop.f32.mrf.mxu0
        %v3564 = vadd.f32 %v2976, %v3563
        %v3565 = vpop.f32.mrf.mxu0
        %3566 = vmatprep.mubr.bf16.mxu0 0
        %3567 = vmatmul.mubr.bf16.gmra.mxu0 %v3452
        %v3568 = vpop.f32.mrf.mxu0
        %v3569 = vadd.f32 %v2977, %v3568
        %v3570 = vpop.f32.mrf.mxu0
        %v3571 = vpop.f32.mrf.mxu0
        %v3572 = vadd.f32 %v2978, %v3571
        %v3573 = vpop.f32.mrf.mxu0
        %3574 = vdwg.mxu0
        %3575 = vmax.xlane.f32.xlu0 %v3513
        %v3576 = vpop.xlane.xlu0 %3575
        %3577 = vmax.xlane.f32.xlu0 %v3516
        %v3578 = vpop.xlane.xlu0 %3577
        %3579 = vmax.xlane.f32.xlu0 %v3521
        %v3580 = vpop.xlane.xlu0 %3579
        %3581 = vmax.xlane.f32.xlu0 %v3524
        %v3582 = vpop.xlane.xlu0 %3581
        %3583 = vmax.xlane.f32.xlu0 %v3529
        %v3584 = vpop.xlane.xlu0 %3583
        %3585 = vmax.xlane.f32.xlu0 %v3532
        %v3586 = vpop.xlane.xlu0 %3585
        %3587 = vmax.xlane.f32.xlu0 %v3537
        %v3588 = vpop.xlane.xlu0 %3587
        %3589 = vmax.xlane.f32.xlu0 %v3540
        %v3590 = vpop.xlane.xlu0 %3589
        %3591 = vmax.xlane.f32.xlu0 %v3545
        %v3592 = vpop.xlane.xlu0 %3591
        %3593 = vmax.xlane.f32.xlu0 %v3548
        %v3594 = vpop.xlane.xlu0 %3593
        %3595 = vmax.xlane.f32.xlu0 %v3553
        %v3596 = vpop.xlane.xlu0 %3595
        %3597 = vmax.xlane.f32.xlu0 %v3556
        %v3598 = vpop.xlane.xlu0 %3597
        %3599 = vmax.xlane.f32.xlu0 %v3561
        %v3600 = vpop.xlane.xlu0 %3599
        %3601 = vmax.xlane.f32.xlu0 %v3564
        %v3602 = vpop.xlane.xlu0 %3601
        %3603 = vmax.xlane.f32.xlu0 %v3569
        %v3604 = vpop.xlane.xlu0 %3603
        %3605 = vmax.xlane.f32.xlu0 %v3572
        %v3606 = vpop.xlane.xlu0 %3605
        %v3607 = vsub.f32 %v3513, %v3576
        %v3608 = vsub.f32 %v3516, %v3578
        %v3609 = vsub.f32 %v3521, %v3580
        %v3610 = vsub.f32 %v3524, %v3582
        %v3611 = vsub.f32 %v3529, %v3584
        %v3612 = vsub.f32 %v3532, %v3586
        %v3613 = vsub.f32 %v3537, %v3588
        %v3614 = vsub.f32 %v3540, %v3590
        %v3615 = vsub.f32 %v3545, %v3592
        %v3616 = vsub.f32 %v3548, %v3594
        %v3617 = vsub.f32 %v3553, %v3596
        %v3618 = vsub.f32 %v3556, %v3598
        %v3619 = vsub.f32 %v3561, %v3600
        %v3620 = vsub.f32 %v3564, %v3602
        %v3621 = vsub.f32 %v3569, %v3604
        %v3622 = vsub.f32 %v3572, %v3606
        %v3623 = vmul.f32 %v3607, 1.442695
        %v3624 = vpow.pop %v3623
        %v3625 = vmul.f32 %v3608, 1.442695
        %v3626 = vpow.pop %v3625
        %v3627 = vmul.f32 %v3609, 1.442695
        %v3628 = vpow.pop %v3627
        %v3629 = vmul.f32 %v3610, 1.442695
        %v3630 = vpow.pop %v3629
        %v3631 = vmul.f32 %v3611, 1.442695
        %v3632 = vpow.pop %v3631
        %v3633 = vmul.f32 %v3612, 1.442695
        %v3634 = vpow.pop %v3633
        %v3635 = vmul.f32 %v3613, 1.442695
        %v3636 = vpow.pop %v3635
        %v3637 = vmul.f32 %v3614, 1.442695
        %v3638 = vpow.pop %v3637
        %v3639 = vmul.f32 %v3615, 1.442695
        %v3640 = vpow.pop %v3639
        %v3641 = vmul.f32 %v3616, 1.442695
        %v3642 = vpow.pop %v3641
        %v3643 = vmul.f32 %v3617, 1.442695
        %v3644 = vpow.pop %v3643
        %v3645 = vmul.f32 %v3618, 1.442695
        %v3646 = vpow.pop %v3645
        %v3647 = vmul.f32 %v3619, 1.442695
        %v3648 = vpow.pop %v3647
        %v3649 = vmul.f32 %v3620, 1.442695
        %v3650 = vpow.pop %v3649
        %v3651 = vmul.f32 %v3621, 1.442695
        %v3652 = vpow.pop %v3651
        %v3653 = vmul.f32 %v3622, 1.442695
        %v3654 = vpow.pop %v3653
        %3655 = vadd.xlane.f32.xlu0 %v3624
        %v3656 = vpop.xlane.xlu0 %3655
        %3657 = vadd.xlane.f32.xlu0 %v3626
        %v3658 = vpop.xlane.xlu0 %3657
        %3659 = vadd.xlane.f32.xlu0 %v3628
        %v3660 = vpop.xlane.xlu0 %3659
        %3661 = vadd.xlane.f32.xlu0 %v3630
        %v3662 = vpop.xlane.xlu0 %3661
        %3663 = vadd.xlane.f32.xlu0 %v3632
        %v3664 = vpop.xlane.xlu0 %3663
        %3665 = vadd.xlane.f32.xlu0 %v3634
        %v3666 = vpop.xlane.xlu0 %3665
        %3667 = vadd.xlane.f32.xlu0 %v3636
        %v3668 = vpop.xlane.xlu0 %3667
        %3669 = vadd.xlane.f32.xlu0 %v3638
        %v3670 = vpop.xlane.xlu0 %3669
        %3671 = vadd.xlane.f32.xlu0 %v3640
        %v3672 = vpop.xlane.xlu0 %3671
        %3673 = vadd.xlane.f32.xlu0 %v3642
        %v3674 = vpop.xlane.xlu0 %3673
        %3675 = vadd.xlane.f32.xlu0 %v3644
        %v3676 = vpop.xlane.xlu0 %3675
        %3677 = vadd.xlane.f32.xlu0 %v3646
        %v3678 = vpop.xlane.xlu0 %3677
        %3679 = vadd.xlane.f32.xlu0 %v3648
        %v3680 = vpop.xlane.xlu0 %3679
        %3681 = vadd.xlane.f32.xlu0 %v3650
        %v3682 = vpop.xlane.xlu0 %3681
        %3683 = vadd.xlane.f32.xlu0 %v3652
        %v3684 = vpop.xlane.xlu0 %3683
        %3685 = vadd.xlane.f32.xlu0 %v3654
        %v3686 = vpop.xlane.xlu0 %3685
        %v3687 = vrcp.pop %v3656
        %v3688 = vrcp.pop %v3658
        %v3689 = vrcp.pop %v3660
        %v3690 = vrcp.pop %v3662
        %v3691 = vrcp.pop %v3664
        %v3692 = vrcp.pop %v3666
        %v3693 = vrcp.pop %v3668
        %v3694 = vrcp.pop %v3670
        %v3695 = vrcp.pop %v3672
        %v3696 = vrcp.pop %v3674
        %v3697 = vrcp.pop %v3676
        %v3698 = vrcp.pop %v3678
        %v3699 = vrcp.pop %v3680
        %v3700 = vrcp.pop %v3682
        %v3701 = vrcp.pop %v3684
        %v3702 = vrcp.pop %v3686
        %v3703 = vpack.c.bf16 %v3626, %v3624
        %v3704 = vpack.c.bf16 %v3630, %v3628
        %v3705 = vpack.c.bf16 %v3634, %v3632
        %v3706 = vpack.c.bf16 %v3638, %v3636
        %v3707 = vpack.c.bf16 %v3642, %v3640
        %v3708 = vpack.c.bf16 %v3646, %v3644
        %v3709 = vpack.c.bf16 %v3650, %v3648
        %v3710 = vpack.c.bf16 %v3654, %v3652
        %3719 = vrot.lane.b32.xlu0 %v2862, 64
        %v3720 = vpop.permute.xlu0 %3719
        %3721 = vrot.lane.b32.xlu0 %v2871, 64
        %v3722 = vpop.permute.xlu0 %3721
        %3723 = vrot.lane.b32.xlu0 %v2880, 64
        %v3724 = vpop.permute.xlu0 %3723
        %3725 = vrot.lane.b32.xlu0 %v2889, 64
        %v3726 = vpop.permute.xlu0 %3725
        %3727 = vrot.lane.b32.xlu0 %v2898, 64
        %v3728 = vpop.permute.xlu0 %3727
        %3729 = vrot.lane.b32.xlu0 %v2907, 64
        %v3730 = vpop.permute.xlu0 %3729
        %3731 = vrot.lane.b32.xlu0 %v2916, 64
        %v3732 = vpop.permute.xlu0 %3731
        %3733 = vrot.lane.b32.xlu0 %v2925, 64
        %v3734 = vpop.permute.xlu0 %3733
        %3743 = vmatprep.subr.bf16.mxu0 0
        %3744 = vmatpush1.bf16.msra.mxu0 %v3734
        %3745 = vmatprep.subr.bf16.mxu0 0
        %3746 = vmatpush1.bf16.msra.mxu0 %v3732
        %3747 = vmatprep.subr.bf16.mxu0 0
        %3748 = vmatpush1.bf16.msra.mxu0 %v3730
        %3749 = vmatprep.subr.bf16.mxu0 0
        %3750 = vmatpush1.bf16.msra.mxu0 %v3728
        %3751 = vmatprep.subr.bf16.mxu0 0
        %3752 = vmatpush1.bf16.msra.mxu0 %v3726
        %3753 = vmatprep.subr.bf16.mxu0 0
        %3754 = vmatpush1.bf16.msra.mxu0 %v3724
        %3755 = vmatprep.subr.bf16.mxu0 0
        %3756 = vmatpush1.bf16.msra.mxu0 %v3722
        %3757 = vmatprep.subr.bf16.mxu0 0
        %3758 = vmatpush1.bf16.msra.mxu0 %v3720
        %3759 = vmatprep.subr.bf16.mxu0 0
        %3760 = vmatpush2.bf16.msra.mxu0 0
        %3761 = vmatprep.subr.bf16.mxu0 0
        %3762 = vmatpush2.bf16.msra.mxu0 0
        %3763 = vmatprep.subr.bf16.mxu0 0
        %3764 = vmatpush2.bf16.msra.mxu0 0
        %3765 = vmatprep.subr.bf16.mxu0 0
        %3766 = vmatpush2.bf16.msra.mxu0 0
        %3767 = vmatprep.subr.bf16.mxu0 0
        %3768 = vmatpush2.bf16.msra.mxu0 0
        %3769 = vmatprep.subr.bf16.mxu0 0
        %3770 = vmatpush2.bf16.msra.mxu0 0
        %3771 = vmatprep.subr.bf16.mxu0 0
        %3772 = vmatpush2.bf16.msra.mxu0 0
        %3773 = vmatprep.subr.bf16.mxu0 0
        %3774 = vmatpush2.bf16.msra.mxu0 0
        %3775 = vmatprep.mubr.bf16.mxu0 0
        %3776 = vmatmul.mubr.bf16.gmra.mxu0 %v3703
        %v3777 = vpop.f32.mrf.mxu0
        %v3778 = vadd.f32 0.0, %v3777
        %v3779 = vpop.f32.mrf.mxu0
        %v3780 = vpop.f32.mrf.mxu0
        %v3781 = vadd.f32 0.0, %v3780
        %v3782 = vpop.f32.mrf.mxu0
        %3783 = vmatprep.mubr.bf16.mxu0 0
        %3784 = vmatmul.mubr.bf16.gmra.mxu0 %v3704
        %v3785 = vpop.f32.mrf.mxu0
        %v3786 = vadd.f32 0.0, %v3785
        %v3787 = vpop.f32.mrf.mxu0
        %v3788 = vpop.f32.mrf.mxu0
        %v3789 = vadd.f32 0.0, %v3788
        %v3790 = vpop.f32.mrf.mxu0
        %3791 = vmatprep.mubr.bf16.mxu0 0
        %3792 = vmatmul.mubr.bf16.gmra.mxu0 %v3705
        %v3793 = vpop.f32.mrf.mxu0
        %v3794 = vadd.f32 0.0, %v3793
        %v3795 = vpop.f32.mrf.mxu0
        %v3796 = vpop.f32.mrf.mxu0
        %v3797 = vadd.f32 0.0, %v3796
        %v3798 = vpop.f32.mrf.mxu0
        %3799 = vmatprep.mubr.bf16.mxu0 0
        %3800 = vmatmul.mubr.bf16.gmra.mxu0 %v3706
        %v3801 = vpop.f32.mrf.mxu0
        %v3802 = vadd.f32 0.0, %v3801
        %v3803 = vpop.f32.mrf.mxu0
        %v3804 = vpop.f32.mrf.mxu0
        %v3805 = vadd.f32 0.0, %v3804
        %v3806 = vpop.f32.mrf.mxu0
        %3807 = vmatprep.mubr.bf16.mxu0 0
        %3808 = vmatmul.mubr.bf16.gmra.mxu0 %v3707
        %v3809 = vpop.f32.mrf.mxu0
        %v3810 = vadd.f32 0.0, %v3809
        %v3811 = vpop.f32.mrf.mxu0
        %v3812 = vpop.f32.mrf.mxu0
        %v3813 = vadd.f32 0.0, %v3812
        %v3814 = vpop.f32.mrf.mxu0
        %3815 = vmatprep.mubr.bf16.mxu0 0
        %3816 = vmatmul.mubr.bf16.gmra.mxu0 %v3708
        %v3817 = vpop.f32.mrf.mxu0
        %v3818 = vadd.f32 0.0, %v3817
        %v3819 = vpop.f32.mrf.mxu0
        %v3820 = vpop.f32.mrf.mxu0
        %v3821 = vadd.f32 0.0, %v3820
        %v3822 = vpop.f32.mrf.mxu0
        %3823 = vmatprep.mubr.bf16.mxu0 0
        %3824 = vmatmul.mubr.bf16.gmra.mxu0 %v3709
        %v3825 = vpop.f32.mrf.mxu0
        %v3826 = vadd.f32 0.0, %v3825
        %v3827 = vpop.f32.mrf.mxu0
        %v3828 = vpop.f32.mrf.mxu0
        %v3829 = vadd.f32 0.0, %v3828
        %v3830 = vpop.f32.mrf.mxu0
        %3831 = vmatprep.mubr.bf16.mxu0 0
        %3832 = vmatmul.mubr.bf16.gmra.mxu0 %v3710
        %v3833 = vpop.f32.mrf.mxu0
        %v3834 = vadd.f32 0.0, %v3833
        %v3835 = vpop.f32.mrf.mxu0
        %v3836 = vpop.f32.mrf.mxu0
        %v3837 = vadd.f32 0.0, %v3836
        %v3838 = vpop.f32.mrf.mxu0
        %3839 = vdwg.mxu0
        %v3840 = vmul.f32 %v3778, %v3687
        %v3841 = vmul.f32 %v3781, %v3688
        %v3842 = vmul.f32 %v3786, %v3689
        %v3843 = vmul.f32 %v3789, %v3690
        %v3844 = vmul.f32 %v3794, %v3691
        %v3845 = vmul.f32 %v3797, %v3692
        %v3846 = vmul.f32 %v3802, %v3693
        %v3847 = vmul.f32 %v3805, %v3694
        %v3848 = vmul.f32 %v3810, %v3695
        %v3849 = vmul.f32 %v3813, %v3696
        %v3850 = vmul.f32 %v3818, %v3697
        %v3851 = vmul.f32 %v3821, %v3698
        %v3852 = vmul.f32 %v3826, %v3699
        %v3853 = vmul.f32 %v3829, %v3700
        %v3854 = vmul.f32 %v3834, %v3701
        %v3855 = vmul.f32 %v3837, %v3702
        %v3856 = vpack.c.bf16 %v3841, %v3840
        %v3857 = vpack.c.bf16 %v3843, %v3842
        %v3858 = vpack.c.bf16 %v3845, %v3844
        %v3859 = vpack.c.bf16 %v3847, %v3846
        %v3860 = vpack.c.bf16 %v3849, %v3848
        %v3861 = vpack.c.bf16 %v3851, %v3850
        %v3862 = vpack.c.bf16 %v3853, %v3852
        %v3863 = vpack.c.bf16 %v3855, %v3854
        %v3865 = vsel %vm2979, %v2857, 0
        %v3868 = vsel %vm2979, %v2866, 0
        %v3871 = vsel %vm2979, %v2875, 0
        %v3874 = vsel %vm2979, %v2884, 0
        %v3877 = vsel %vm2979, %v2893, 0
        %v3880 = vsel %vm2979, %v2902, 0
        %v3883 = vsel %vm2979, %v2911, 0
        %v3886 = vsel %vm2979, %v2920, 0
        %v3889 = vsel %vm2979, %v2860, 0
        %v3892 = vsel %vm2979, %v2869, 0
        %v3895 = vsel %vm2979, %v2878, 0
        %v3898 = vsel %vm2979, %v2887, 0
        %v3901 = vsel %vm2979, %v2896, 0
        %v3904 = vsel %vm2979, %v2905, 0
        %v3907 = vsel %vm2979, %v2914, 0
        %v3910 = vsel %vm2979, %v2923, 0
        %3912 = vmatprep.subr.bf16.mxu0 0
        %3913 = vmatpush1.bf16.xpose.msra.mxu0 %v3910
        %3914 = vmatprep.subr.bf16.mxu0 0
        %3915 = vmatpush1.bf16.xpose.msra.mxu0 %v3907
        %3916 = vmatprep.subr.bf16.mxu0 0
        %3917 = vmatpush1.bf16.xpose.msra.mxu0 %v3904
        %3918 = vmatprep.subr.bf16.mxu0 0
        %3919 = vmatpush1.bf16.xpose.msra.mxu0 %v3901
        %3920 = vmatprep.subr.bf16.mxu0 0
        %3921 = vmatpush1.bf16.xpose.msra.mxu0 %v3898
        %3922 = vmatprep.subr.bf16.mxu0 0
        %3923 = vmatpush1.bf16.xpose.msra.mxu0 %v3895
        %3924 = vmatprep.subr.bf16.mxu0 0
        %3925 = vmatpush1.bf16.xpose.msra.mxu0 %v3892
        %3926 = vmatprep.subr.bf16.mxu0 0
        %3927 = vmatpush1.bf16.xpose.msra.mxu0 %v3889
        %3928 = vmatprep.subr.bf16.mxu0 0
        %3929 = vmatpush2.bf16.xpose.msra.mxu0 0
        %3930 = vmatprep.subr.bf16.mxu0 0
        %3931 = vmatpush2.bf16.xpose.msra.mxu0 0
        %3932 = vmatprep.subr.bf16.mxu0 0
        %3933 = vmatpush2.bf16.xpose.msra.mxu0 0
        %3934 = vmatprep.subr.bf16.mxu0 0
        %3935 = vmatpush2.bf16.xpose.msra.mxu0 0
        %3936 = vmatprep.subr.bf16.mxu0 0
        %3937 = vmatpush2.bf16.xpose.msra.mxu0 0
        %3938 = vmatprep.subr.bf16.mxu0 0
        %3939 = vmatpush2.bf16.xpose.msra.mxu0 0
        %3940 = vmatprep.subr.bf16.mxu0 0
        %3941 = vmatpush2.bf16.xpose.msra.mxu0 0
        %3942 = vmatprep.subr.bf16.mxu0 0
        %3943 = vmatpush2.bf16.xpose.msra.mxu0 0
        %3944 = vmatprep.mubr.bf16.mxu0 0
        %3945 = vmatmul.mubr.bf16.gmra.mxu0 %v3865
        %v3946 = vpop.f32.mrf.mxu0
        %v3947 = vadd.f32 %v2963, %v3946
        %v3948 = vpop.f32.mrf.mxu0
        %v3949 = vpop.f32.mrf.mxu0
        %v3950 = vadd.f32 %v2964, %v3949
        %v3951 = vpop.f32.mrf.mxu0
        %3952 = vmatprep.mubr.bf16.mxu0 0
        %3953 = vmatmul.mubr.bf16.gmra.mxu0 %v3868
        %v3954 = vpop.f32.mrf.mxu0
        %v3955 = vadd.f32 %v2965, %v3954
        %v3956 = vpop.f32.mrf.mxu0
        %v3957 = vpop.f32.mrf.mxu0
        %v3958 = vadd.f32 %v2966, %v3957
        %v3959 = vpop.f32.mrf.mxu0
        %3960 = vmatprep.mubr.bf16.mxu0 0
        %3961 = vmatmul.mubr.bf16.gmra.mxu0 %v3871
        %v3962 = vpop.f32.mrf.mxu0
        %v3963 = vadd.f32 %v2967, %v3962
        %v3964 = vpop.f32.mrf.mxu0
        %v3965 = vpop.f32.mrf.mxu0
        %v3966 = vadd.f32 %v2968, %v3965
        %v3967 = vpop.f32.mrf.mxu0
        %3968 = vmatprep.mubr.bf16.mxu0 0
        %3969 = vmatmul.mubr.bf16.gmra.mxu0 %v3874
        %v3970 = vpop.f32.mrf.mxu0
        %v3971 = vadd.f32 %v2969, %v3970
        %v3972 = vpop.f32.mrf.mxu0
        %v3973 = vpop.f32.mrf.mxu0
        %v3974 = vadd.f32 %v2970, %v3973
        %v3975 = vpop.f32.mrf.mxu0
        %3976 = vmatprep.mubr.bf16.mxu0 0
        %3977 = vmatmul.mubr.bf16.gmra.mxu0 %v3877
        %v3978 = vpop.f32.mrf.mxu0
        %v3979 = vadd.f32 %v2971, %v3978
        %v3980 = vpop.f32.mrf.mxu0
        %v3981 = vpop.f32.mrf.mxu0
        %v3982 = vadd.f32 %v2972, %v3981
        %v3983 = vpop.f32.mrf.mxu0
        %3984 = vmatprep.mubr.bf16.mxu0 0
        %3985 = vmatmul.mubr.bf16.gmra.mxu0 %v3880
        %v3986 = vpop.f32.mrf.mxu0
        %v3987 = vadd.f32 %v2973, %v3986
        %v3988 = vpop.f32.mrf.mxu0
        %v3989 = vpop.f32.mrf.mxu0
        %v3990 = vadd.f32 %v2974, %v3989
        %v3991 = vpop.f32.mrf.mxu0
        %3992 = vmatprep.mubr.bf16.mxu0 0
        %3993 = vmatmul.mubr.bf16.gmra.mxu0 %v3883
        %v3994 = vpop.f32.mrf.mxu0
        %v3995 = vadd.f32 %v2975, %v3994
        %v3996 = vpop.f32.mrf.mxu0
        %v3997 = vpop.f32.mrf.mxu0
        %v3998 = vadd.f32 %v2976, %v3997
        %v3999 = vpop.f32.mrf.mxu0
        %4000 = vmatprep.mubr.bf16.mxu0 0
        %4001 = vmatmul.mubr.bf16.gmra.mxu0 %v3886
        %v4002 = vpop.f32.mrf.mxu0
        %v4003 = vadd.f32 %v2977, %v4002
        %v4004 = vpop.f32.mrf.mxu0
        %v4005 = vpop.f32.mrf.mxu0
        %v4006 = vadd.f32 %v2978, %v4005
        %v4007 = vpop.f32.mrf.mxu0
        %4008 = vdwg.mxu0
        %4009 = vmax.xlane.f32.xlu0 %v3947
        %v4010 = vpop.xlane.xlu0 %4009
        %4011 = vmax.xlane.f32.xlu0 %v3950
        %v4012 = vpop.xlane.xlu0 %4011
        %4013 = vmax.xlane.f32.xlu0 %v3955
        %v4014 = vpop.xlane.xlu0 %4013
        %4015 = vmax.xlane.f32.xlu0 %v3958
        %v4016 = vpop.xlane.xlu0 %4015
        %4017 = vmax.xlane.f32.xlu0 %v3963
        %v4018 = vpop.xlane.xlu0 %4017
        %4019 = vmax.xlane.f32.xlu0 %v3966
        %v4020 = vpop.xlane.xlu0 %4019
        %4021 = vmax.xlane.f32.xlu0 %v3971
        %v4022 = vpop.xlane.xlu0 %4021
        %4023 = vmax.xlane.f32.xlu0 %v3974
        %v4024 = vpop.xlane.xlu0 %4023
        %4025 = vmax.xlane.f32.xlu0 %v3979
        %v4026 = vpop.xlane.xlu0 %4025
        %4027 = vmax.xlane.f32.xlu0 %v3982
        %v4028 = vpop.xlane.xlu0 %4027
        %4029 = vmax.xlane.f32.xlu0 %v3987
        %v4030 = vpop.xlane.xlu0 %4029
        %4031 = vmax.xlane.f32.xlu0 %v3990
        %v4032 = vpop.xlane.xlu0 %4031
        %4033 = vmax.xlane.f32.xlu0 %v3995
        %v4034 = vpop.xlane.xlu0 %4033
        %4035 = vmax.xlane.f32.xlu0 %v3998
        %v4036 = vpop.xlane.xlu0 %4035
        %4037 = vmax.xlane.f32.xlu0 %v4003
        %v4038 = vpop.xlane.xlu0 %4037
        %4039 = vmax.xlane.f32.xlu0 %v4006
        %v4040 = vpop.xlane.xlu0 %4039
        %v4041 = vsub.f32 %v3947, %v4010
        %v4042 = vsub.f32 %v3950, %v4012
        %v4043 = vsub.f32 %v3955, %v4014
        %v4044 = vsub.f32 %v3958, %v4016
        %v4045 = vsub.f32 %v3963, %v4018
        %v4046 = vsub.f32 %v3966, %v4020
        %v4047 = vsub.f32 %v3971, %v4022
        %v4048 = vsub.f32 %v3974, %v4024
        %v4049 = vsub.f32 %v3979, %v4026
        %v4050 = vsub.f32 %v3982, %v4028
        %v4051 = vsub.f32 %v3987, %v4030
        %v4052 = vsub.f32 %v3990, %v4032
        %v4053 = vsub.f32 %v3995, %v4034
        %v4054 = vsub.f32 %v3998, %v4036
        %v4055 = vsub.f32 %v4003, %v4038
        %v4056 = vsub.f32 %v4006, %v4040
        %v4057 = vmul.f32 %v4041, 1.442695
        %v4058 = vpow.pop %v4057
        %v4059 = vmul.f32 %v4042, 1.442695
        %v4060 = vpow.pop %v4059
        %v4061 = vmul.f32 %v4043, 1.442695
        %v4062 = vpow.pop %v4061
        %v4063 = vmul.f32 %v4044, 1.442695
        %v4064 = vpow.pop %v4063
        %v4065 = vmul.f32 %v4045, 1.442695
        %v4066 = vpow.pop %v4065
        %v4067 = vmul.f32 %v4046, 1.442695
        %v4068 = vpow.pop %v4067
        %v4069 = vmul.f32 %v4047, 1.442695
        %v4070 = vpow.pop %v4069
        %v4071 = vmul.f32 %v4048, 1.442695
        %v4072 = vpow.pop %v4071
        %v4073 = vmul.f32 %v4049, 1.442695
        %v4074 = vpow.pop %v4073
        %v4075 = vmul.f32 %v4050, 1.442695
        %v4076 = vpow.pop %v4075
        %v4077 = vmul.f32 %v4051, 1.442695
        %v4078 = vpow.pop %v4077
        %v4079 = vmul.f32 %v4052, 1.442695
        %v4080 = vpow.pop %v4079
        %v4081 = vmul.f32 %v4053, 1.442695
        %v4082 = vpow.pop %v4081
        %v4083 = vmul.f32 %v4054, 1.442695
        %v4084 = vpow.pop %v4083
        %v4085 = vmul.f32 %v4055, 1.442695
        %v4086 = vpow.pop %v4085
        %v4087 = vmul.f32 %v4056, 1.442695
        %v4088 = vpow.pop %v4087
        %4089 = vadd.xlane.f32.xlu0 %v4058
        %v4090 = vpop.xlane.xlu0 %4089
        %4091 = vadd.xlane.f32.xlu0 %v4060
        %v4092 = vpop.xlane.xlu0 %4091
        %4093 = vadd.xlane.f32.xlu0 %v4062
        %v4094 = vpop.xlane.xlu0 %4093
        %4095 = vadd.xlane.f32.xlu0 %v4064
        %v4096 = vpop.xlane.xlu0 %4095
        %4097 = vadd.xlane.f32.xlu0 %v4066
        %v4098 = vpop.xlane.xlu0 %4097
        %4099 = vadd.xlane.f32.xlu0 %v4068
        %v4100 = vpop.xlane.xlu0 %4099
        %4101 = vadd.xlane.f32.xlu0 %v4070
        %v4102 = vpop.xlane.xlu0 %4101
        %4103 = vadd.xlane.f32.xlu0 %v4072
        %v4104 = vpop.xlane.xlu0 %4103
        %4105 = vadd.xlane.f32.xlu0 %v4074
        %v4106 = vpop.xlane.xlu0 %4105
        %4107 = vadd.xlane.f32.xlu0 %v4076
        %v4108 = vpop.xlane.xlu0 %4107
        %4109 = vadd.xlane.f32.xlu0 %v4078
        %v4110 = vpop.xlane.xlu0 %4109
        %4111 = vadd.xlane.f32.xlu0 %v4080
        %v4112 = vpop.xlane.xlu0 %4111
        %4113 = vadd.xlane.f32.xlu0 %v4082
        %v4114 = vpop.xlane.xlu0 %4113
        %4115 = vadd.xlane.f32.xlu0 %v4084
        %v4116 = vpop.xlane.xlu0 %4115
        %4117 = vadd.xlane.f32.xlu0 %v4086
        %v4118 = vpop.xlane.xlu0 %4117
        %4119 = vadd.xlane.f32.xlu0 %v4088
        %v4120 = vpop.xlane.xlu0 %4119
        %v4121 = vrcp.pop %v4090
        %v4122 = vrcp.pop %v4092
        %v4123 = vrcp.pop %v4094
        %v4124 = vrcp.pop %v4096
        %v4125 = vrcp.pop %v4098
        %v4126 = vrcp.pop %v4100
        %v4127 = vrcp.pop %v4102
        %v4128 = vrcp.pop %v4104
        %v4129 = vrcp.pop %v4106
        %v4130 = vrcp.pop %v4108
        %v4131 = vrcp.pop %v4110
        %v4132 = vrcp.pop %v4112
        %v4133 = vrcp.pop %v4114
        %v4134 = vrcp.pop %v4116
        %v4135 = vrcp.pop %v4118
        %v4136 = vrcp.pop %v4120
        %v4137 = vpack.c.bf16 %v4060, %v4058
        %v4138 = vpack.c.bf16 %v4064, %v4062
        %v4139 = vpack.c.bf16 %v4068, %v4066
        %v4140 = vpack.c.bf16 %v4072, %v4070
        %v4141 = vpack.c.bf16 %v4076, %v4074
        %v4142 = vpack.c.bf16 %v4080, %v4078
        %v4143 = vpack.c.bf16 %v4084, %v4082
        %v4144 = vpack.c.bf16 %v4088, %v4086
        %4145 = vmatprep.subr.bf16.mxu0 0
        %4146 = vmatpush1.bf16.msra.mxu0 %v2926
        %4147 = vmatprep.subr.bf16.mxu0 0
        %4148 = vmatpush1.bf16.msra.mxu0 %v2917
        %4149 = vmatprep.subr.bf16.mxu0 0
        %4150 = vmatpush1.bf16.msra.mxu0 %v2908
        %4151 = vmatprep.subr.bf16.mxu0 0
        %4152 = vmatpush1.bf16.msra.mxu0 %v2899
        %4153 = vmatprep.subr.bf16.mxu0 0
        %4154 = vmatpush1.bf16.msra.mxu0 %v2890
        %4155 = vmatprep.subr.bf16.mxu0 0
        %4156 = vmatpush1.bf16.msra.mxu0 %v2881
        %4157 = vmatprep.subr.bf16.mxu0 0
        %4158 = vmatpush1.bf16.msra.mxu0 %v2872
        %4159 = vmatprep.subr.bf16.mxu0 0
        %4160 = vmatpush1.bf16.msra.mxu0 %v2863
        %4161 = vmatprep.subr.bf16.mxu0 0
        %4162 = vmatpush2.bf16.msra.mxu0 0
        %4163 = vmatprep.subr.bf16.mxu0 0
        %4164 = vmatpush2.bf16.msra.mxu0 0
        %4165 = vmatprep.subr.bf16.mxu0 0
        %4166 = vmatpush2.bf16.msra.mxu0 0
        %4167 = vmatprep.subr.bf16.mxu0 0
        %4168 = vmatpush2.bf16.msra.mxu0 0
        %4169 = vmatprep.subr.bf16.mxu0 0
        %4170 = vmatpush2.bf16.msra.mxu0 0
        %4171 = vmatprep.subr.bf16.mxu0 0
        %4172 = vmatpush2.bf16.msra.mxu0 0
        %4173 = vmatprep.subr.bf16.mxu0 0
        %4174 = vmatpush2.bf16.msra.mxu0 0
        %4175 = vmatprep.subr.bf16.mxu0 0
        %4176 = vmatpush2.bf16.msra.mxu0 0
        %4177 = vmatprep.mubr.bf16.mxu0 0
        %4178 = vmatmul.mubr.bf16.gmra.mxu0 %v4137
        %v4179 = vpop.f32.mrf.mxu0
        %v4180 = vadd.f32 0.0, %v4179
        %v4181 = vpop.f32.mrf.mxu0
        %v4182 = vpop.f32.mrf.mxu0
        %v4183 = vadd.f32 0.0, %v4182
        %v4184 = vpop.f32.mrf.mxu0
        %4185 = vmatprep.mubr.bf16.mxu0 0
        %4186 = vmatmul.mubr.bf16.gmra.mxu0 %v4138
        %v4187 = vpop.f32.mrf.mxu0
        %v4188 = vadd.f32 0.0, %v4187
        %v4189 = vpop.f32.mrf.mxu0
        %v4190 = vpop.f32.mrf.mxu0
        %v4191 = vadd.f32 0.0, %v4190
        %v4192 = vpop.f32.mrf.mxu0
        %4193 = vmatprep.mubr.bf16.mxu0 0
        %4194 = vmatmul.mubr.bf16.gmra.mxu0 %v4139
        %v4195 = vpop.f32.mrf.mxu0
        %v4196 = vadd.f32 0.0, %v4195
        %v4197 = vpop.f32.mrf.mxu0
        %v4198 = vpop.f32.mrf.mxu0
        %v4199 = vadd.f32 0.0, %v4198
        %v4200 = vpop.f32.mrf.mxu0
        %4201 = vmatprep.mubr.bf16.mxu0 0
        %4202 = vmatmul.mubr.bf16.gmra.mxu0 %v4140
        %v4203 = vpop.f32.mrf.mxu0
        %v4204 = vadd.f32 0.0, %v4203
        %v4205 = vpop.f32.mrf.mxu0
        %v4206 = vpop.f32.mrf.mxu0
        %v4207 = vadd.f32 0.0, %v4206
        %v4208 = vpop.f32.mrf.mxu0
        %4209 = vmatprep.mubr.bf16.mxu0 0
        %4210 = vmatmul.mubr.bf16.gmra.mxu0 %v4141
        %v4211 = vpop.f32.mrf.mxu0
        %v4212 = vadd.f32 0.0, %v4211
        %v4213 = vpop.f32.mrf.mxu0
        %v4214 = vpop.f32.mrf.mxu0
        %v4215 = vadd.f32 0.0, %v4214
        %v4216 = vpop.f32.mrf.mxu0
        %4217 = vmatprep.mubr.bf16.mxu0 0
        %4218 = vmatmul.mubr.bf16.gmra.mxu0 %v4142
        %v4219 = vpop.f32.mrf.mxu0
        %v4220 = vadd.f32 0.0, %v4219
        %v4221 = vpop.f32.mrf.mxu0
        %v4222 = vpop.f32.mrf.mxu0
        %v4223 = vadd.f32 0.0, %v4222
        %v4224 = vpop.f32.mrf.mxu0
        %4225 = vmatprep.mubr.bf16.mxu0 0
        %4226 = vmatmul.mubr.bf16.gmra.mxu0 %v4143
        %v4227 = vpop.f32.mrf.mxu0
        %v4228 = vadd.f32 0.0, %v4227
        %v4229 = vpop.f32.mrf.mxu0
        %v4230 = vpop.f32.mrf.mxu0
        %v4231 = vadd.f32 0.0, %v4230
        %v4232 = vpop.f32.mrf.mxu0
        %4233 = vmatprep.mubr.bf16.mxu0 0
        %4234 = vmatmul.mubr.bf16.gmra.mxu0 %v4144
        %v4235 = vpop.f32.mrf.mxu0
        %v4236 = vadd.f32 0.0, %v4235
        %v4237 = vpop.f32.mrf.mxu0
        %v4238 = vpop.f32.mrf.mxu0
        %v4239 = vadd.f32 0.0, %v4238
        %v4240 = vpop.f32.mrf.mxu0
        %4241 = vdwg.mxu0
        %v4242 = vmul.f32 %v4180, %v4121
        %v4243 = vmul.f32 %v4183, %v4122
        %v4244 = vmul.f32 %v4188, %v4123
        %v4245 = vmul.f32 %v4191, %v4124
        %v4246 = vmul.f32 %v4196, %v4125
        %v4247 = vmul.f32 %v4199, %v4126
        %v4248 = vmul.f32 %v4204, %v4127
        %v4249 = vmul.f32 %v4207, %v4128
        %v4250 = vmul.f32 %v4212, %v4129
        %v4251 = vmul.f32 %v4215, %v4130
        %v4252 = vmul.f32 %v4220, %v4131
        %v4253 = vmul.f32 %v4223, %v4132
        %v4254 = vmul.f32 %v4228, %v4133
        %v4255 = vmul.f32 %v4231, %v4134
        %v4256 = vmul.f32 %v4236, %v4135
        %v4257 = vmul.f32 %v4239, %v4136
        %v4258 = vpack.c.bf16 %v4243, %v4242
        %v4259 = vpack.c.bf16 %v4245, %v4244
        %v4260 = vpack.c.bf16 %v4247, %v4246
        %v4261 = vpack.c.bf16 %v4249, %v4248
        %v4262 = vpack.c.bf16 %v4251, %v4250
        %v4263 = vpack.c.bf16 %v4253, %v4252
        %v4264 = vpack.c.bf16 %v4255, %v4254
        %v4265 = vpack.c.bf16 %v4257, %v4256
        %4274 = vrot.lane.b32.xlu0 %v2857, 64
        %v4275 = vpop.permute.xlu0 %4274
        %4276 = vrot.lane.b32.xlu0 %v2866, 64
        %v4277 = vpop.permute.xlu0 %4276
        %4278 = vrot.lane.b32.xlu0 %v2875, 64
        %v4279 = vpop.permute.xlu0 %4278
        %4280 = vrot.lane.b32.xlu0 %v2884, 64
        %v4281 = vpop.permute.xlu0 %4280
        %4282 = vrot.lane.b32.xlu0 %v2893, 64
        %v4283 = vpop.permute.xlu0 %4282
        %4284 = vrot.lane.b32.xlu0 %v2902, 64
        %v4285 = vpop.permute.xlu0 %4284
        %4286 = vrot.lane.b32.xlu0 %v2911, 64
        %v4287 = vpop.permute.xlu0 %4286
        %4288 = vrot.lane.b32.xlu0 %v2920, 64
        %v4289 = vpop.permute.xlu0 %4288
        %4298 = vrot.lane.b32.xlu0 %v2860, 64
        %v4299 = vpop.permute.xlu0 %4298
        %4300 = vrot.lane.b32.xlu0 %v2869, 64
        %v4301 = vpop.permute.xlu0 %4300
        %4302 = vrot.lane.b32.xlu0 %v2878, 64
        %v4303 = vpop.permute.xlu0 %4302
        %4304 = vrot.lane.b32.xlu0 %v2887, 64
        %v4305 = vpop.permute.xlu0 %4304
        %4306 = vrot.lane.b32.xlu0 %v2896, 64
        %v4307 = vpop.permute.xlu0 %4306
        %4308 = vrot.lane.b32.xlu0 %v2905, 64
        %v4309 = vpop.permute.xlu0 %4308
        %4310 = vrot.lane.b32.xlu0 %v2914, 64
        %v4311 = vpop.permute.xlu0 %4310
        %4312 = vrot.lane.b32.xlu0 %v2923, 64
        %v4313 = vpop.permute.xlu0 %4312
        %v4315 = vsel %vm2979, %v4275, 0
        %v4318 = vsel %vm2979, %v4277, 0
        %v4321 = vsel %vm2979, %v4279, 0
        %v4324 = vsel %vm2979, %v4281, 0
        %v4327 = vsel %vm2979, %v4283, 0
        %v4330 = vsel %vm2979, %v4285, 0
        %v4333 = vsel %vm2979, %v4287, 0
        %v4336 = vsel %vm2979, %v4289, 0
        %v4339 = vsel %vm2979, %v4299, 0
        %v4342 = vsel %vm2979, %v4301, 0
        %v4345 = vsel %vm2979, %v4303, 0
        %v4348 = vsel %vm2979, %v4305, 0
        %v4351 = vsel %vm2979, %v4307, 0
        %v4354 = vsel %vm2979, %v4309, 0
        %v4357 = vsel %vm2979, %v4311, 0
        %v4360 = vsel %vm2979, %v4313, 0
        %4362 = vmatprep.subr.bf16.mxu0 0
        %4363 = vmatpush1.bf16.xpose.msra.mxu0 %v4360
        %4364 = vmatprep.subr.bf16.mxu0 0
        %4365 = vmatpush1.bf16.xpose.msra.mxu0 %v4357
        %4366 = vmatprep.subr.bf16.mxu0 0
        %4367 = vmatpush1.bf16.xpose.msra.mxu0 %v4354
        %4368 = vmatprep.subr.bf16.mxu0 0
        %4369 = vmatpush1.bf16.xpose.msra.mxu0 %v4351
        %4370 = vmatprep.subr.bf16.mxu0 0
        %4371 = vmatpush1.bf16.xpose.msra.mxu0 %v4348
        %4372 = vmatprep.subr.bf16.mxu0 0
        %4373 = vmatpush1.bf16.xpose.msra.mxu0 %v4345
        %4374 = vmatprep.subr.bf16.mxu0 0
        %4375 = vmatpush1.bf16.xpose.msra.mxu0 %v4342
        %4376 = vmatprep.subr.bf16.mxu0 0
        %4377 = vmatpush1.bf16.xpose.msra.mxu0 %v4339
        %4378 = vmatprep.subr.bf16.mxu0 0
        %4379 = vmatpush2.bf16.xpose.msra.mxu0 0
        %4380 = vmatprep.subr.bf16.mxu0 0
        %4381 = vmatpush2.bf16.xpose.msra.mxu0 0
        %4382 = vmatprep.subr.bf16.mxu0 0
        %4383 = vmatpush2.bf16.xpose.msra.mxu0 0
        %4384 = vmatprep.subr.bf16.mxu0 0
        %4385 = vmatpush2.bf16.xpose.msra.mxu0 0
        %4386 = vmatprep.subr.bf16.mxu0 0
        %4387 = vmatpush2.bf16.xpose.msra.mxu0 0
        %4388 = vmatprep.subr.bf16.mxu0 0
        %4389 = vmatpush2.bf16.xpose.msra.mxu0 0
        %4390 = vmatprep.subr.bf16.mxu0 0
        %4391 = vmatpush2.bf16.xpose.msra.mxu0 0
        %4392 = vmatprep.subr.bf16.mxu0 0
        %4393 = vmatpush2.bf16.xpose.msra.mxu0 0
        %4394 = vmatprep.mubr.bf16.mxu0 0
        %4395 = vmatmul.mubr.bf16.gmra.mxu0 %v4315
        %v4396 = vpop.f32.mrf.mxu0
        %v4397 = vadd.f32 %v2963, %v4396
        %v4398 = vpop.f32.mrf.mxu0
        %v4399 = vpop.f32.mrf.mxu0
        %v4400 = vadd.f32 %v2964, %v4399
        %v4401 = vpop.f32.mrf.mxu0
        %4402 = vmatprep.mubr.bf16.mxu0 0
        %4403 = vmatmul.mubr.bf16.gmra.mxu0 %v4318
        %v4404 = vpop.f32.mrf.mxu0
        %v4405 = vadd.f32 %v2965, %v4404
        %v4406 = vpop.f32.mrf.mxu0
        %v4407 = vpop.f32.mrf.mxu0
        %v4408 = vadd.f32 %v2966, %v4407
        %v4409 = vpop.f32.mrf.mxu0
        %4410 = vmatprep.mubr.bf16.mxu0 0
        %4411 = vmatmul.mubr.bf16.gmra.mxu0 %v4321
        %v4412 = vpop.f32.mrf.mxu0
        %v4413 = vadd.f32 %v2967, %v4412
        %v4414 = vpop.f32.mrf.mxu0
        %v4415 = vpop.f32.mrf.mxu0
        %v4416 = vadd.f32 %v2968, %v4415
        %v4417 = vpop.f32.mrf.mxu0
        %4418 = vmatprep.mubr.bf16.mxu0 0
        %4419 = vmatmul.mubr.bf16.gmra.mxu0 %v4324
        %v4420 = vpop.f32.mrf.mxu0
        %v4421 = vadd.f32 %v2969, %v4420
        %v4422 = vpop.f32.mrf.mxu0
        %v4423 = vpop.f32.mrf.mxu0
        %v4424 = vadd.f32 %v2970, %v4423
        %v4425 = vpop.f32.mrf.mxu0
        %4426 = vmatprep.mubr.bf16.mxu0 0
        %4427 = vmatmul.mubr.bf16.gmra.mxu0 %v4327
        %v4428 = vpop.f32.mrf.mxu0
        %v4429 = vadd.f32 %v2971, %v4428
        %v4430 = vpop.f32.mrf.mxu0
        %v4431 = vpop.f32.mrf.mxu0
        %v4432 = vadd.f32 %v2972, %v4431
        %v4433 = vpop.f32.mrf.mxu0
        %4434 = vmatprep.mubr.bf16.mxu0 0
        %4435 = vmatmul.mubr.bf16.gmra.mxu0 %v4330
        %v4436 = vpop.f32.mrf.mxu0
        %v4437 = vadd.f32 %v2973, %v4436
        %v4438 = vpop.f32.mrf.mxu0
        %v4439 = vpop.f32.mrf.mxu0
        %v4440 = vadd.f32 %v2974, %v4439
        %v4441 = vpop.f32.mrf.mxu0
        %4442 = vmatprep.mubr.bf16.mxu0 0
        %4443 = vmatmul.mubr.bf16.gmra.mxu0 %v4333
        %v4444 = vpop.f32.mrf.mxu0
        %v4445 = vadd.f32 %v2975, %v4444
        %v4446 = vpop.f32.mrf.mxu0
        %v4447 = vpop.f32.mrf.mxu0
        %v4448 = vadd.f32 %v2976, %v4447
        %v4449 = vpop.f32.mrf.mxu0
        %4450 = vmatprep.mubr.bf16.mxu0 0
        %4451 = vmatmul.mubr.bf16.gmra.mxu0 %v4336
        %v4452 = vpop.f32.mrf.mxu0
        %v4453 = vadd.f32 %v2977, %v4452
        %v4454 = vpop.f32.mrf.mxu0
        %v4455 = vpop.f32.mrf.mxu0
        %v4456 = vadd.f32 %v2978, %v4455
        %v4457 = vpop.f32.mrf.mxu0
        %4458 = vdwg.mxu0
        %4459 = vmax.xlane.f32.xlu0 %v4397
        %v4460 = vpop.xlane.xlu0 %4459
        %4461 = vmax.xlane.f32.xlu0 %v4400
        %v4462 = vpop.xlane.xlu0 %4461
        %4463 = vmax.xlane.f32.xlu0 %v4405
        %v4464 = vpop.xlane.xlu0 %4463
        %4465 = vmax.xlane.f32.xlu0 %v4408
        %v4466 = vpop.xlane.xlu0 %4465
        %4467 = vmax.xlane.f32.xlu0 %v4413
        %v4468 = vpop.xlane.xlu0 %4467
        %4469 = vmax.xlane.f32.xlu0 %v4416
        %v4470 = vpop.xlane.xlu0 %4469
        %4471 = vmax.xlane.f32.xlu0 %v4421
        %v4472 = vpop.xlane.xlu0 %4471
        %4473 = vmax.xlane.f32.xlu0 %v4424
        %v4474 = vpop.xlane.xlu0 %4473
        %4475 = vmax.xlane.f32.xlu0 %v4429
        %v4476 = vpop.xlane.xlu0 %4475
        %4477 = vmax.xlane.f32.xlu0 %v4432
        %v4478 = vpop.xlane.xlu0 %4477
        %4479 = vmax.xlane.f32.xlu0 %v4437
        %v4480 = vpop.xlane.xlu0 %4479
        %4481 = vmax.xlane.f32.xlu0 %v4440
        %v4482 = vpop.xlane.xlu0 %4481
        %4483 = vmax.xlane.f32.xlu0 %v4445
        %v4484 = vpop.xlane.xlu0 %4483
        %4485 = vmax.xlane.f32.xlu0 %v4448
        %v4486 = vpop.xlane.xlu0 %4485
        %4487 = vmax.xlane.f32.xlu0 %v4453
        %v4488 = vpop.xlane.xlu0 %4487
        %4489 = vmax.xlane.f32.xlu0 %v4456
        %v4490 = vpop.xlane.xlu0 %4489
        %v4491 = vsub.f32 %v4397, %v4460
        %v4492 = vsub.f32 %v4400, %v4462
        %v4493 = vsub.f32 %v4405, %v4464
        %v4494 = vsub.f32 %v4408, %v4466
        %v4495 = vsub.f32 %v4413, %v4468
        %v4496 = vsub.f32 %v4416, %v4470
        %v4497 = vsub.f32 %v4421, %v4472
        %v4498 = vsub.f32 %v4424, %v4474
        %v4499 = vsub.f32 %v4429, %v4476
        %v4500 = vsub.f32 %v4432, %v4478
        %v4501 = vsub.f32 %v4437, %v4480
        %v4502 = vsub.f32 %v4440, %v4482
        %v4503 = vsub.f32 %v4445, %v4484
        %v4504 = vsub.f32 %v4448, %v4486
        %v4505 = vsub.f32 %v4453, %v4488
        %v4506 = vsub.f32 %v4456, %v4490
        %v4507 = vmul.f32 %v4491, 1.442695
        %v4508 = vpow.pop %v4507
        %v4509 = vmul.f32 %v4492, 1.442695
        %v4510 = vpow.pop %v4509
        %v4511 = vmul.f32 %v4493, 1.442695
        %v4512 = vpow.pop %v4511
        %v4513 = vmul.f32 %v4494, 1.442695
        %v4514 = vpow.pop %v4513
        %v4515 = vmul.f32 %v4495, 1.442695
        %v4516 = vpow.pop %v4515
        %v4517 = vmul.f32 %v4496, 1.442695
        %v4518 = vpow.pop %v4517
        %v4519 = vmul.f32 %v4497, 1.442695
        %v4520 = vpow.pop %v4519
        %v4521 = vmul.f32 %v4498, 1.442695
        %v4522 = vpow.pop %v4521
        %v4523 = vmul.f32 %v4499, 1.442695
        %v4524 = vpow.pop %v4523
        %v4525 = vmul.f32 %v4500, 1.442695
        %v4526 = vpow.pop %v4525
        %v4527 = vmul.f32 %v4501, 1.442695
        %v4528 = vpow.pop %v4527
        %v4529 = vmul.f32 %v4502, 1.442695
        %v4530 = vpow.pop %v4529
        %v4531 = vmul.f32 %v4503, 1.442695
        %v4532 = vpow.pop %v4531
        %v4533 = vmul.f32 %v4504, 1.442695
        %v4534 = vpow.pop %v4533
        %v4535 = vmul.f32 %v4505, 1.442695
        %v4536 = vpow.pop %v4535
        %v4537 = vmul.f32 %v4506, 1.442695
        %v4538 = vpow.pop %v4537
        %4539 = vadd.xlane.f32.xlu0 %v4508
        %v4540 = vpop.xlane.xlu0 %4539
        %4541 = vadd.xlane.f32.xlu0 %v4510
        %v4542 = vpop.xlane.xlu0 %4541
        %4543 = vadd.xlane.f32.xlu0 %v4512
        %v4544 = vpop.xlane.xlu0 %4543
        %4545 = vadd.xlane.f32.xlu0 %v4514
        %v4546 = vpop.xlane.xlu0 %4545
        %4547 = vadd.xlane.f32.xlu0 %v4516
        %v4548 = vpop.xlane.xlu0 %4547
        %4549 = vadd.xlane.f32.xlu0 %v4518
        %v4550 = vpop.xlane.xlu0 %4549
        %4551 = vadd.xlane.f32.xlu0 %v4520
        %v4552 = vpop.xlane.xlu0 %4551
        %4553 = vadd.xlane.f32.xlu0 %v4522
        %v4554 = vpop.xlane.xlu0 %4553
        %4555 = vadd.xlane.f32.xlu0 %v4524
        %v4556 = vpop.xlane.xlu0 %4555
        %4557 = vadd.xlane.f32.xlu0 %v4526
        %v4558 = vpop.xlane.xlu0 %4557
        %4559 = vadd.xlane.f32.xlu0 %v4528
        %v4560 = vpop.xlane.xlu0 %4559
        %4561 = vadd.xlane.f32.xlu0 %v4530
        %v4562 = vpop.xlane.xlu0 %4561
        %4563 = vadd.xlane.f32.xlu0 %v4532
        %v4564 = vpop.xlane.xlu0 %4563
        %4565 = vadd.xlane.f32.xlu0 %v4534
        %v4566 = vpop.xlane.xlu0 %4565
        %4567 = vadd.xlane.f32.xlu0 %v4536
        %v4568 = vpop.xlane.xlu0 %4567
        %4569 = vadd.xlane.f32.xlu0 %v4538
        %v4570 = vpop.xlane.xlu0 %4569
        %v4571 = vrcp.pop %v4540
        %v4572 = vrcp.pop %v4542
        %v4573 = vrcp.pop %v4544
        %v4574 = vrcp.pop %v4546
        %v4575 = vrcp.pop %v4548
        %v4576 = vrcp.pop %v4550
        %v4577 = vrcp.pop %v4552
        %v4578 = vrcp.pop %v4554
        %v4579 = vrcp.pop %v4556
        %v4580 = vrcp.pop %v4558
        %v4581 = vrcp.pop %v4560
        %v4582 = vrcp.pop %v4562
        %v4583 = vrcp.pop %v4564
        %v4584 = vrcp.pop %v4566
        %v4585 = vrcp.pop %v4568
        %v4586 = vrcp.pop %v4570
        %v4587 = vpack.c.bf16 %v4510, %v4508
        %v4588 = vpack.c.bf16 %v4514, %v4512
        %v4589 = vpack.c.bf16 %v4518, %v4516
        %v4590 = vpack.c.bf16 %v4522, %v4520
        %v4591 = vpack.c.bf16 %v4526, %v4524
        %v4592 = vpack.c.bf16 %v4530, %v4528
        %v4593 = vpack.c.bf16 %v4534, %v4532
        %v4594 = vpack.c.bf16 %v4538, %v4536
        %4603 = vrot.lane.b32.xlu0 %v2863, 64
        %v4604 = vpop.permute.xlu0 %4603
        %4605 = vrot.lane.b32.xlu0 %v2872, 64
        %v4606 = vpop.permute.xlu0 %4605
        %4607 = vrot.lane.b32.xlu0 %v2881, 64
        %v4608 = vpop.permute.xlu0 %4607
        %4609 = vrot.lane.b32.xlu0 %v2890, 64
        %v4610 = vpop.permute.xlu0 %4609
        %4611 = vrot.lane.b32.xlu0 %v2899, 64
        %v4612 = vpop.permute.xlu0 %4611
        %4613 = vrot.lane.b32.xlu0 %v2908, 64
        %v4614 = vpop.permute.xlu0 %4613
        %4615 = vrot.lane.b32.xlu0 %v2917, 64
        %v4616 = vpop.permute.xlu0 %4615
        %4617 = vrot.lane.b32.xlu0 %v2926, 64
        %v4618 = vpop.permute.xlu0 %4617
        %4627 = vmatprep.subr.bf16.mxu0 0
        %4628 = vmatpush1.bf16.msra.mxu0 %v4618
        %4629 = vmatprep.subr.bf16.mxu0 0
        %4630 = vmatpush1.bf16.msra.mxu0 %v4616
        %4631 = vmatprep.subr.bf16.mxu0 0
        %4632 = vmatpush1.bf16.msra.mxu0 %v4614
        %4633 = vmatprep.subr.bf16.mxu0 0
        %4634 = vmatpush1.bf16.msra.mxu0 %v4612
        %4635 = vmatprep.subr.bf16.mxu0 0
        %4636 = vmatpush1.bf16.msra.mxu0 %v4610
        %4637 = vmatprep.subr.bf16.mxu0 0
        %4638 = vmatpush1.bf16.msra.mxu0 %v4608
        %4639 = vmatprep.subr.bf16.mxu0 0
        %4640 = vmatpush1.bf16.msra.mxu0 %v4606
        %4641 = vmatprep.subr.bf16.mxu0 0
        %4642 = vmatpush1.bf16.msra.mxu0 %v4604
        %4643 = vmatprep.subr.bf16.mxu0 0
        %4644 = vmatpush2.bf16.msra.mxu0 0
        %4645 = vmatprep.subr.bf16.mxu0 0
        %4646 = vmatpush2.bf16.msra.mxu0 0
        %4647 = vmatprep.subr.bf16.mxu0 0
        %4648 = vmatpush2.bf16.msra.mxu0 0
        %4649 = vmatprep.subr.bf16.mxu0 0
        %4650 = vmatpush2.bf16.msra.mxu0 0
        %4651 = vmatprep.subr.bf16.mxu0 0
        %4652 = vmatpush2.bf16.msra.mxu0 0
        %4653 = vmatprep.subr.bf16.mxu0 0
        %4654 = vmatpush2.bf16.msra.mxu0 0
        %4655 = vmatprep.subr.bf16.mxu0 0
        %4656 = vmatpush2.bf16.msra.mxu0 0
        %4657 = vmatprep.subr.bf16.mxu0 0
        %4658 = vmatpush2.bf16.msra.mxu0 0
        %4659 = vmatprep.mubr.bf16.mxu0 0
        %4660 = vmatmul.mubr.bf16.gmra.mxu0 %v4587
        %v4661 = vpop.f32.mrf.mxu0
        %v4662 = vadd.f32 0.0, %v4661
        %v4663 = vpop.f32.mrf.mxu0
        %v4664 = vpop.f32.mrf.mxu0
        %v4665 = vadd.f32 0.0, %v4664
        %v4666 = vpop.f32.mrf.mxu0
        %4667 = vmatprep.mubr.bf16.mxu0 0
        %4668 = vmatmul.mubr.bf16.gmra.mxu0 %v4588
        %v4669 = vpop.f32.mrf.mxu0
        %v4670 = vadd.f32 0.0, %v4669
        %v4671 = vpop.f32.mrf.mxu0
        %v4672 = vpop.f32.mrf.mxu0
        %v4673 = vadd.f32 0.0, %v4672
        %v4674 = vpop.f32.mrf.mxu0
        %4675 = vmatprep.mubr.bf16.mxu0 0
        %4676 = vmatmul.mubr.bf16.gmra.mxu0 %v4589
        %v4677 = vpop.f32.mrf.mxu0
        %v4678 = vadd.f32 0.0, %v4677
        %v4679 = vpop.f32.mrf.mxu0
        %v4680 = vpop.f32.mrf.mxu0
        %v4681 = vadd.f32 0.0, %v4680
        %v4682 = vpop.f32.mrf.mxu0
        %4683 = vmatprep.mubr.bf16.mxu0 0
        %4684 = vmatmul.mubr.bf16.gmra.mxu0 %v4590
        %v4685 = vpop.f32.mrf.mxu0
        %v4686 = vadd.f32 0.0, %v4685
        %v4687 = vpop.f32.mrf.mxu0
        %v4688 = vpop.f32.mrf.mxu0
        %v4689 = vadd.f32 0.0, %v4688
        %v4690 = vpop.f32.mrf.mxu0
        %4691 = vmatprep.mubr.bf16.mxu0 0
        %4692 = vmatmul.mubr.bf16.gmra.mxu0 %v4591
        %v4693 = vpop.f32.mrf.mxu0
        %v4694 = vadd.f32 0.0, %v4693
        %v4695 = vpop.f32.mrf.mxu0
        %v4696 = vpop.f32.mrf.mxu0
        %v4697 = vadd.f32 0.0, %v4696
        %v4698 = vpop.f32.mrf.mxu0
        %4699 = vmatprep.mubr.bf16.mxu0 0
        %4700 = vmatmul.mubr.bf16.gmra.mxu0 %v4592
        %v4701 = vpop.f32.mrf.mxu0
        %v4702 = vadd.f32 0.0, %v4701
        %v4703 = vpop.f32.mrf.mxu0
        %v4704 = vpop.f32.mrf.mxu0
        %v4705 = vadd.f32 0.0, %v4704
        %v4706 = vpop.f32.mrf.mxu0
        %4707 = vmatprep.mubr.bf16.mxu0 0
        %4708 = vmatmul.mubr.bf16.gmra.mxu0 %v4593
        %v4709 = vpop.f32.mrf.mxu0
        %v4710 = vadd.f32 0.0, %v4709
        %v4711 = vpop.f32.mrf.mxu0
        %v4712 = vpop.f32.mrf.mxu0
        %v4713 = vadd.f32 0.0, %v4712
        %v4714 = vpop.f32.mrf.mxu0
        %4715 = vmatprep.mubr.bf16.mxu0 0
        %4716 = vmatmul.mubr.bf16.gmra.mxu0 %v4594
        %v4717 = vpop.f32.mrf.mxu0
        %v4718 = vadd.f32 0.0, %v4717
        %v4719 = vpop.f32.mrf.mxu0
        %v4720 = vpop.f32.mrf.mxu0
        %v4721 = vadd.f32 0.0, %v4720
        %v4722 = vpop.f32.mrf.mxu0
        %4723 = vdwg.mxu0
        %v4724 = vmul.f32 %v4662, %v4571
        %v4725 = vmul.f32 %v4665, %v4572
        %v4726 = vmul.f32 %v4670, %v4573
        %v4727 = vmul.f32 %v4673, %v4574
        %v4728 = vmul.f32 %v4678, %v4575
        %v4729 = vmul.f32 %v4681, %v4576
        %v4730 = vmul.f32 %v4686, %v4577
        %v4731 = vmul.f32 %v4689, %v4578
        %v4732 = vmul.f32 %v4694, %v4579
        %v4733 = vmul.f32 %v4697, %v4580
        %v4734 = vmul.f32 %v4702, %v4581
        %v4735 = vmul.f32 %v4705, %v4582
        %v4736 = vmul.f32 %v4710, %v4583
        %v4737 = vmul.f32 %v4713, %v4584
        %v4738 = vmul.f32 %v4718, %v4585
        %v4739 = vmul.f32 %v4721, %v4586
        %v4740 = vpack.c.bf16 %v4725, %v4724
        %v4741 = vpack.c.bf16 %v4727, %v4726
        %v4742 = vpack.c.bf16 %v4729, %v4728
        %v4743 = vpack.c.bf16 %v4731, %v4730
        %v4744 = vpack.c.bf16 %v4733, %v4732
        %v4745 = vpack.c.bf16 %v4735, %v4734
        %v4746 = vpack.c.bf16 %v4737, %v4736
        %v4747 = vpack.c.bf16 %v4739, %v4738
        %v4749 = vsel %vm2979, %v2858, 0
        %v4752 = vsel %vm2979, %v2867, 0
        %v4755 = vsel %vm2979, %v2876, 0
        %v4758 = vsel %vm2979, %v2885, 0
        %v4761 = vsel %vm2979, %v2894, 0
        %v4764 = vsel %vm2979, %v2903, 0
        %v4767 = vsel %vm2979, %v2912, 0
        %v4770 = vsel %vm2979, %v2921, 0
        %v4773 = vsel %vm2979, %v2861, 0
        %v4776 = vsel %vm2979, %v2870, 0
        %v4779 = vsel %vm2979, %v2879, 0
        %v4782 = vsel %vm2979, %v2888, 0
        %v4785 = vsel %vm2979, %v2897, 0
        %v4788 = vsel %vm2979, %v2906, 0
        %v4791 = vsel %vm2979, %v2915, 0
        %v4794 = vsel %vm2979, %v2924, 0
        %4796 = vmatprep.subr.bf16.mxu0 0
        %4797 = vmatpush1.bf16.xpose.msra.mxu0 %v4794
        %4798 = vmatprep.subr.bf16.mxu0 0
        %4799 = vmatpush1.bf16.xpose.msra.mxu0 %v4791
        %4800 = vmatprep.subr.bf16.mxu0 0
        %4801 = vmatpush1.bf16.xpose.msra.mxu0 %v4788
        %4802 = vmatprep.subr.bf16.mxu0 0
        %4803 = vmatpush1.bf16.xpose.msra.mxu0 %v4785
        %4804 = vmatprep.subr.bf16.mxu0 0
        %4805 = vmatpush1.bf16.xpose.msra.mxu0 %v4782
        %4806 = vmatprep.subr.bf16.mxu0 0
        %4807 = vmatpush1.bf16.xpose.msra.mxu0 %v4779
        %4808 = vmatprep.subr.bf16.mxu0 0
        %4809 = vmatpush1.bf16.xpose.msra.mxu0 %v4776
        %4810 = vmatprep.subr.bf16.mxu0 0
        %4811 = vmatpush1.bf16.xpose.msra.mxu0 %v4773
        %4812 = vmatprep.subr.bf16.mxu0 0
        %4813 = vmatpush2.bf16.xpose.msra.mxu0 0
        %4814 = vmatprep.subr.bf16.mxu0 0
        %4815 = vmatpush2.bf16.xpose.msra.mxu0 0
        %4816 = vmatprep.subr.bf16.mxu0 0
        %4817 = vmatpush2.bf16.xpose.msra.mxu0 0
        %4818 = vmatprep.subr.bf16.mxu0 0
        %4819 = vmatpush2.bf16.xpose.msra.mxu0 0
        %4820 = vmatprep.subr.bf16.mxu0 0
        %4821 = vmatpush2.bf16.xpose.msra.mxu0 0
        %4822 = vmatprep.subr.bf16.mxu0 0
        %4823 = vmatpush2.bf16.xpose.msra.mxu0 0
        %4824 = vmatprep.subr.bf16.mxu0 0
        %4825 = vmatpush2.bf16.xpose.msra.mxu0 0
        %4826 = vmatprep.subr.bf16.mxu0 0
        %4827 = vmatpush2.bf16.xpose.msra.mxu0 0
        %4828 = vmatprep.mubr.bf16.mxu0 0
        %4829 = vmatmul.mubr.bf16.gmra.mxu0 %v4749
        %v4830 = vpop.f32.mrf.mxu0
        %v4831 = vadd.f32 %v2963, %v4830
        %v4832 = vpop.f32.mrf.mxu0
        %v4833 = vpop.f32.mrf.mxu0
        %v4834 = vadd.f32 %v2964, %v4833
        %v4835 = vpop.f32.mrf.mxu0
        %4836 = vmatprep.mubr.bf16.mxu0 0
        %4837 = vmatmul.mubr.bf16.gmra.mxu0 %v4752
        %v4838 = vpop.f32.mrf.mxu0
        %v4839 = vadd.f32 %v2965, %v4838
        %v4840 = vpop.f32.mrf.mxu0
        %v4841 = vpop.f32.mrf.mxu0
        %v4842 = vadd.f32 %v2966, %v4841
        %v4843 = vpop.f32.mrf.mxu0
        %4844 = vmatprep.mubr.bf16.mxu0 0
        %4845 = vmatmul.mubr.bf16.gmra.mxu0 %v4755
        %v4846 = vpop.f32.mrf.mxu0
        %v4847 = vadd.f32 %v2967, %v4846
        %v4848 = vpop.f32.mrf.mxu0
        %v4849 = vpop.f32.mrf.mxu0
        %v4850 = vadd.f32 %v2968, %v4849
        %v4851 = vpop.f32.mrf.mxu0
        %4852 = vmatprep.mubr.bf16.mxu0 0
        %4853 = vmatmul.mubr.bf16.gmra.mxu0 %v4758
        %v4854 = vpop.f32.mrf.mxu0
        %v4855 = vadd.f32 %v2969, %v4854
        %v4856 = vpop.f32.mrf.mxu0
        %v4857 = vpop.f32.mrf.mxu0
        %v4858 = vadd.f32 %v2970, %v4857
        %v4859 = vpop.f32.mrf.mxu0
        %4860 = vmatprep.mubr.bf16.mxu0 0
        %4861 = vmatmul.mubr.bf16.gmra.mxu0 %v4761
        %v4862 = vpop.f32.mrf.mxu0
        %v4863 = vadd.f32 %v2971, %v4862
        %v4864 = vpop.f32.mrf.mxu0
        %v4865 = vpop.f32.mrf.mxu0
        %v4866 = vadd.f32 %v2972, %v4865
        %v4867 = vpop.f32.mrf.mxu0
        %4868 = vmatprep.mubr.bf16.mxu0 0
        %4869 = vmatmul.mubr.bf16.gmra.mxu0 %v4764
        %v4870 = vpop.f32.mrf.mxu0
        %v4871 = vadd.f32 %v2973, %v4870
        %v4872 = vpop.f32.mrf.mxu0
        %v4873 = vpop.f32.mrf.mxu0
        %v4874 = vadd.f32 %v2974, %v4873
        %v4875 = vpop.f32.mrf.mxu0
        %4876 = vmatprep.mubr.bf16.mxu0 0
        %4877 = vmatmul.mubr.bf16.gmra.mxu0 %v4767
        %v4878 = vpop.f32.mrf.mxu0
        %v4879 = vadd.f32 %v2975, %v4878
        %v4880 = vpop.f32.mrf.mxu0
        %v4881 = vpop.f32.mrf.mxu0
        %v4882 = vadd.f32 %v2976, %v4881
        %v4883 = vpop.f32.mrf.mxu0
        %4884 = vmatprep.mubr.bf16.mxu0 0
        %4885 = vmatmul.mubr.bf16.gmra.mxu0 %v4770
        %v4886 = vpop.f32.mrf.mxu0
        %v4887 = vadd.f32 %v2977, %v4886
        %v4888 = vpop.f32.mrf.mxu0
        %v4889 = vpop.f32.mrf.mxu0
        %v4890 = vadd.f32 %v2978, %v4889
        %v4891 = vpop.f32.mrf.mxu0
        %4892 = vdwg.mxu0
        %4893 = vmax.xlane.f32.xlu0 %v4831
        %v4894 = vpop.xlane.xlu0 %4893
        %4895 = vmax.xlane.f32.xlu0 %v4834
        %v4896 = vpop.xlane.xlu0 %4895
        %4897 = vmax.xlane.f32.xlu0 %v4839
        %v4898 = vpop.xlane.xlu0 %4897
        %4899 = vmax.xlane.f32.xlu0 %v4842
        %v4900 = vpop.xlane.xlu0 %4899
        %4901 = vmax.xlane.f32.xlu0 %v4847
        %v4902 = vpop.xlane.xlu0 %4901
        %4903 = vmax.xlane.f32.xlu0 %v4850
        %v4904 = vpop.xlane.xlu0 %4903
        %4905 = vmax.xlane.f32.xlu0 %v4855
        %v4906 = vpop.xlane.xlu0 %4905
        %4907 = vmax.xlane.f32.xlu0 %v4858
        %v4908 = vpop.xlane.xlu0 %4907
        %4909 = vmax.xlane.f32.xlu0 %v4863
        %v4910 = vpop.xlane.xlu0 %4909
        %4911 = vmax.xlane.f32.xlu0 %v4866
        %v4912 = vpop.xlane.xlu0 %4911
        %4913 = vmax.xlane.f32.xlu0 %v4871
        %v4914 = vpop.xlane.xlu0 %4913
        %4915 = vmax.xlane.f32.xlu0 %v4874
        %v4916 = vpop.xlane.xlu0 %4915
        %4917 = vmax.xlane.f32.xlu0 %v4879
        %v4918 = vpop.xlane.xlu0 %4917
        %4919 = vmax.xlane.f32.xlu0 %v4882
        %v4920 = vpop.xlane.xlu0 %4919
        %4921 = vmax.xlane.f32.xlu0 %v4887
        %v4922 = vpop.xlane.xlu0 %4921
        %4923 = vmax.xlane.f32.xlu0 %v4890
        %v4924 = vpop.xlane.xlu0 %4923
        %v4925 = vsub.f32 %v4831, %v4894
        %v4926 = vsub.f32 %v4834, %v4896
        %v4927 = vsub.f32 %v4839, %v4898
        %v4928 = vsub.f32 %v4842, %v4900
        %v4929 = vsub.f32 %v4847, %v4902
        %v4930 = vsub.f32 %v4850, %v4904
        %v4931 = vsub.f32 %v4855, %v4906
        %v4932 = vsub.f32 %v4858, %v4908
        %v4933 = vsub.f32 %v4863, %v4910
        %v4934 = vsub.f32 %v4866, %v4912
        %v4935 = vsub.f32 %v4871, %v4914
        %v4936 = vsub.f32 %v4874, %v4916
        %v4937 = vsub.f32 %v4879, %v4918
        %v4938 = vsub.f32 %v4882, %v4920
        %v4939 = vsub.f32 %v4887, %v4922
        %v4940 = vsub.f32 %v4890, %v4924
        %v4941 = vmul.f32 %v4925, 1.442695
        %v4942 = vpow.pop %v4941
        %v4943 = vmul.f32 %v4926, 1.442695
        %v4944 = vpow.pop %v4943
        %v4945 = vmul.f32 %v4927, 1.442695
        %v4946 = vpow.pop %v4945
        %v4947 = vmul.f32 %v4928, 1.442695
        %v4948 = vpow.pop %v4947
        %v4949 = vmul.f32 %v4929, 1.442695
        %v4950 = vpow.pop %v4949
        %v4951 = vmul.f32 %v4930, 1.442695
        %v4952 = vpow.pop %v4951
        %v4953 = vmul.f32 %v4931, 1.442695
        %v4954 = vpow.pop %v4953
        %v4955 = vmul.f32 %v4932, 1.442695
        %v4956 = vpow.pop %v4955
        %v4957 = vmul.f32 %v4933, 1.442695
        %v4958 = vpow.pop %v4957
        %v4959 = vmul.f32 %v4934, 1.442695
        %v4960 = vpow.pop %v4959
        %v4961 = vmul.f32 %v4935, 1.442695
        %v4962 = vpow.pop %v4961
        %v4963 = vmul.f32 %v4936, 1.442695
        %v4964 = vpow.pop %v4963
        %v4965 = vmul.f32 %v4937, 1.442695
        %v4966 = vpow.pop %v4965
        %v4967 = vmul.f32 %v4938, 1.442695
        %v4968 = vpow.pop %v4967
        %v4969 = vmul.f32 %v4939, 1.442695
        %v4970 = vpow.pop %v4969
        %v4971 = vmul.f32 %v4940, 1.442695
        %v4972 = vpow.pop %v4971
        %4973 = vadd.xlane.f32.xlu0 %v4942
        %v4974 = vpop.xlane.xlu0 %4973
        %4975 = vadd.xlane.f32.xlu0 %v4944
        %v4976 = vpop.xlane.xlu0 %4975
        %4977 = vadd.xlane.f32.xlu0 %v4946
        %v4978 = vpop.xlane.xlu0 %4977
        %4979 = vadd.xlane.f32.xlu0 %v4948
        %v4980 = vpop.xlane.xlu0 %4979
        %4981 = vadd.xlane.f32.xlu0 %v4950
        %v4982 = vpop.xlane.xlu0 %4981
        %4983 = vadd.xlane.f32.xlu0 %v4952
        %v4984 = vpop.xlane.xlu0 %4983
        %4985 = vadd.xlane.f32.xlu0 %v4954
        %v4986 = vpop.xlane.xlu0 %4985
        %4987 = vadd.xlane.f32.xlu0 %v4956
        %v4988 = vpop.xlane.xlu0 %4987
        %4989 = vadd.xlane.f32.xlu0 %v4958
        %v4990 = vpop.xlane.xlu0 %4989
        %4991 = vadd.xlane.f32.xlu0 %v4960
        %v4992 = vpop.xlane.xlu0 %4991
        %4993 = vadd.xlane.f32.xlu0 %v4962
        %v4994 = vpop.xlane.xlu0 %4993
        %4995 = vadd.xlane.f32.xlu0 %v4964
        %v4996 = vpop.xlane.xlu0 %4995
        %4997 = vadd.xlane.f32.xlu0 %v4966
        %v4998 = vpop.xlane.xlu0 %4997
        %4999 = vadd.xlane.f32.xlu0 %v4968
        %v5000 = vpop.xlane.xlu0 %4999
        %5001 = vadd.xlane.f32.xlu0 %v4970
        %v5002 = vpop.xlane.xlu0 %5001
        %5003 = vadd.xlane.f32.xlu0 %v4972
        %v5004 = vpop.xlane.xlu0 %5003
        %v5005 = vrcp.pop %v4974
        %v5006 = vrcp.pop %v4976
        %v5007 = vrcp.pop %v4978
        %v5008 = vrcp.pop %v4980
        %v5009 = vrcp.pop %v4982
        %v5010 = vrcp.pop %v4984
        %v5011 = vrcp.pop %v4986
        %v5012 = vrcp.pop %v4988
        %v5013 = vrcp.pop %v4990
        %v5014 = vrcp.pop %v4992
        %v5015 = vrcp.pop %v4994
        %v5016 = vrcp.pop %v4996
        %v5017 = vrcp.pop %v4998
        %v5018 = vrcp.pop %v5000
        %v5019 = vrcp.pop %v5002
        %v5020 = vrcp.pop %v5004
        %v5021 = vpack.c.bf16 %v4944, %v4942
        %v5022 = vpack.c.bf16 %v4948, %v4946
        %v5023 = vpack.c.bf16 %v4952, %v4950
        %v5024 = vpack.c.bf16 %v4956, %v4954
        %v5025 = vpack.c.bf16 %v4960, %v4958
        %v5026 = vpack.c.bf16 %v4964, %v4962
        %v5027 = vpack.c.bf16 %v4968, %v4966
        %v5028 = vpack.c.bf16 %v4972, %v4970
        %5029 = vmatprep.subr.bf16.mxu0 0
        %5030 = vmatpush1.bf16.msra.mxu0 %v2927
        %5031 = vmatprep.subr.bf16.mxu0 0
        %5032 = vmatpush1.bf16.msra.mxu0 %v2918
        %5033 = vmatprep.subr.bf16.mxu0 0
        %5034 = vmatpush1.bf16.msra.mxu0 %v2909
        %5035 = vmatprep.subr.bf16.mxu0 0
        %5036 = vmatpush1.bf16.msra.mxu0 %v2900
        %5037 = vmatprep.subr.bf16.mxu0 0
        %5038 = vmatpush1.bf16.msra.mxu0 %v2891
        %5039 = vmatprep.subr.bf16.mxu0 0
        %5040 = vmatpush1.bf16.msra.mxu0 %v2882
        %5041 = vmatprep.subr.bf16.mxu0 0
        %5042 = vmatpush1.bf16.msra.mxu0 %v2873
        %5043 = vmatprep.subr.bf16.mxu0 0
        %5044 = vmatpush1.bf16.msra.mxu0 %v2864
        %5045 = vmatprep.subr.bf16.mxu0 0
        %5046 = vmatpush2.bf16.msra.mxu0 0
        %5047 = vmatprep.subr.bf16.mxu0 0
        %5048 = vmatpush2.bf16.msra.mxu0 0
        %5049 = vmatprep.subr.bf16.mxu0 0
        %5050 = vmatpush2.bf16.msra.mxu0 0
        %5051 = vmatprep.subr.bf16.mxu0 0
        %5052 = vmatpush2.bf16.msra.mxu0 0
        %5053 = vmatprep.subr.bf16.mxu0 0
        %5054 = vmatpush2.bf16.msra.mxu0 0
        %5055 = vmatprep.subr.bf16.mxu0 0
        %5056 = vmatpush2.bf16.msra.mxu0 0
        %5057 = vmatprep.subr.bf16.mxu0 0
        %5058 = vmatpush2.bf16.msra.mxu0 0
        %5059 = vmatprep.subr.bf16.mxu0 0
        %5060 = vmatpush2.bf16.msra.mxu0 0
        %5061 = vmatprep.mubr.bf16.mxu0 0
        %5062 = vmatmul.mubr.bf16.gmra.mxu0 %v5021
        %v5063 = vpop.f32.mrf.mxu0
        %v5064 = vadd.f32 0.0, %v5063
        %v5065 = vpop.f32.mrf.mxu0
        %v5066 = vpop.f32.mrf.mxu0
        %v5067 = vadd.f32 0.0, %v5066
        %v5068 = vpop.f32.mrf.mxu0
        %5069 = vmatprep.mubr.bf16.mxu0 0
        %5070 = vmatmul.mubr.bf16.gmra.mxu0 %v5022
        %v5071 = vpop.f32.mrf.mxu0
        %v5072 = vadd.f32 0.0, %v5071
        %v5073 = vpop.f32.mrf.mxu0
        %v5074 = vpop.f32.mrf.mxu0
        %v5075 = vadd.f32 0.0, %v5074
        %v5076 = vpop.f32.mrf.mxu0
        %5077 = vmatprep.mubr.bf16.mxu0 0
        %5078 = vmatmul.mubr.bf16.gmra.mxu0 %v5023
        %v5079 = vpop.f32.mrf.mxu0
        %v5080 = vadd.f32 0.0, %v5079
        %v5081 = vpop.f32.mrf.mxu0
        %v5082 = vpop.f32.mrf.mxu0
        %v5083 = vadd.f32 0.0, %v5082
        %v5084 = vpop.f32.mrf.mxu0
        %5085 = vmatprep.mubr.bf16.mxu0 0
        %5086 = vmatmul.mubr.bf16.gmra.mxu0 %v5024
        %v5087 = vpop.f32.mrf.mxu0
        %v5088 = vadd.f32 0.0, %v5087
        %v5089 = vpop.f32.mrf.mxu0
        %v5090 = vpop.f32.mrf.mxu0
        %v5091 = vadd.f32 0.0, %v5090
        %v5092 = vpop.f32.mrf.mxu0
        %5093 = vmatprep.mubr.bf16.mxu0 0
        %5094 = vmatmul.mubr.bf16.gmra.mxu0 %v5025
        %v5095 = vpop.f32.mrf.mxu0
        %v5096 = vadd.f32 0.0, %v5095
        %v5097 = vpop.f32.mrf.mxu0
        %v5098 = vpop.f32.mrf.mxu0
        %v5099 = vadd.f32 0.0, %v5098
        %v5100 = vpop.f32.mrf.mxu0
        %5101 = vmatprep.mubr.bf16.mxu0 0
        %5102 = vmatmul.mubr.bf16.gmra.mxu0 %v5026
        %v5103 = vpop.f32.mrf.mxu0
        %v5104 = vadd.f32 0.0, %v5103
        %v5105 = vpop.f32.mrf.mxu0
        %v5106 = vpop.f32.mrf.mxu0
        %v5107 = vadd.f32 0.0, %v5106
        %v5108 = vpop.f32.mrf.mxu0
        %5109 = vmatprep.mubr.bf16.mxu0 0
        %5110 = vmatmul.mubr.bf16.gmra.mxu0 %v5027
        %v5111 = vpop.f32.mrf.mxu0
        %v5112 = vadd.f32 0.0, %v5111
        %v5113 = vpop.f32.mrf.mxu0
        %v5114 = vpop.f32.mrf.mxu0
        %v5115 = vadd.f32 0.0, %v5114
        %v5116 = vpop.f32.mrf.mxu0
        %5117 = vmatprep.mubr.bf16.mxu0 0
        %5118 = vmatmul.mubr.bf16.gmra.mxu0 %v5028
        %v5119 = vpop.f32.mrf.mxu0
        %v5120 = vadd.f32 0.0, %v5119
        %v5121 = vpop.f32.mrf.mxu0
        %v5122 = vpop.f32.mrf.mxu0
        %v5123 = vadd.f32 0.0, %v5122
        %v5124 = vpop.f32.mrf.mxu0
        %5125 = vdwg.mxu0
        %v5126 = vmul.f32 %v5064, %v5005
        %v5127 = vmul.f32 %v5067, %v5006
        %v5128 = vmul.f32 %v5072, %v5007
        %v5129 = vmul.f32 %v5075, %v5008
        %v5130 = vmul.f32 %v5080, %v5009
        %v5131 = vmul.f32 %v5083, %v5010
        %v5132 = vmul.f32 %v5088, %v5011
        %v5133 = vmul.f32 %v5091, %v5012
        %v5134 = vmul.f32 %v5096, %v5013
        %v5135 = vmul.f32 %v5099, %v5014
        %v5136 = vmul.f32 %v5104, %v5015
        %v5137 = vmul.f32 %v5107, %v5016
        %v5138 = vmul.f32 %v5112, %v5017
        %v5139 = vmul.f32 %v5115, %v5018
        %v5140 = vmul.f32 %v5120, %v5019
        %v5141 = vmul.f32 %v5123, %v5020
        %v5142 = vpack.c.bf16 %v5127, %v5126
        %v5143 = vpack.c.bf16 %v5129, %v5128
        %v5144 = vpack.c.bf16 %v5131, %v5130
        %v5145 = vpack.c.bf16 %v5133, %v5132
        %v5146 = vpack.c.bf16 %v5135, %v5134
        %v5147 = vpack.c.bf16 %v5137, %v5136
        %v5148 = vpack.c.bf16 %v5139, %v5138
        %v5149 = vpack.c.bf16 %v5141, %v5140
        %5158 = vrot.lane.b32.xlu0 %v2858, 64
        %v5159 = vpop.permute.xlu0 %5158
        %5160 = vrot.lane.b32.xlu0 %v2867, 64
        %v5161 = vpop.permute.xlu0 %5160
        %5162 = vrot.lane.b32.xlu0 %v2876, 64
        %v5163 = vpop.permute.xlu0 %5162
        %5164 = vrot.lane.b32.xlu0 %v2885, 64
        %v5165 = vpop.permute.xlu0 %5164
        %5166 = vrot.lane.b32.xlu0 %v2894, 64
        %v5167 = vpop.permute.xlu0 %5166
        %5168 = vrot.lane.b32.xlu0 %v2903, 64
        %v5169 = vpop.permute.xlu0 %5168
        %5170 = vrot.lane.b32.xlu0 %v2912, 64
        %v5171 = vpop.permute.xlu0 %5170
        %5172 = vrot.lane.b32.xlu0 %v2921, 64
        %v5173 = vpop.permute.xlu0 %5172
        %5182 = vrot.lane.b32.xlu0 %v2861, 64
        %v5183 = vpop.permute.xlu0 %5182
        %5184 = vrot.lane.b32.xlu0 %v2870, 64
        %v5185 = vpop.permute.xlu0 %5184
        %5186 = vrot.lane.b32.xlu0 %v2879, 64
        %v5187 = vpop.permute.xlu0 %5186
        %5188 = vrot.lane.b32.xlu0 %v2888, 64
        %v5189 = vpop.permute.xlu0 %5188
        %5190 = vrot.lane.b32.xlu0 %v2897, 64
        %v5191 = vpop.permute.xlu0 %5190
        %5192 = vrot.lane.b32.xlu0 %v2906, 64
        %v5193 = vpop.permute.xlu0 %5192
        %5194 = vrot.lane.b32.xlu0 %v2915, 64
        %v5195 = vpop.permute.xlu0 %5194
        %5196 = vrot.lane.b32.xlu0 %v2924, 64
        %v5197 = vpop.permute.xlu0 %5196
        %v5199 = vsel %vm2979, %v5159, 0
        %v5202 = vsel %vm2979, %v5161, 0
        %v5205 = vsel %vm2979, %v5163, 0
        %v5208 = vsel %vm2979, %v5165, 0
        %v5211 = vsel %vm2979, %v5167, 0
        %v5214 = vsel %vm2979, %v5169, 0
        %v5217 = vsel %vm2979, %v5171, 0
        %v5220 = vsel %vm2979, %v5173, 0
        %v5223 = vsel %vm2979, %v5183, 0
        %v5226 = vsel %vm2979, %v5185, 0
        %v5229 = vsel %vm2979, %v5187, 0
        %v5232 = vsel %vm2979, %v5189, 0
        %v5235 = vsel %vm2979, %v5191, 0
        %v5238 = vsel %vm2979, %v5193, 0
        %v5241 = vsel %vm2979, %v5195, 0
        %v5244 = vsel %vm2979, %v5197, 0
        %5246 = vmatprep.subr.bf16.mxu0 0
        %5247 = vmatpush1.bf16.xpose.msra.mxu0 %v5244
        %5248 = vmatprep.subr.bf16.mxu0 0
        %5249 = vmatpush1.bf16.xpose.msra.mxu0 %v5241
        %5250 = vmatprep.subr.bf16.mxu0 0
        %5251 = vmatpush1.bf16.xpose.msra.mxu0 %v5238
        %5252 = vmatprep.subr.bf16.mxu0 0
        %5253 = vmatpush1.bf16.xpose.msra.mxu0 %v5235
        %5254 = vmatprep.subr.bf16.mxu0 0
        %5255 = vmatpush1.bf16.xpose.msra.mxu0 %v5232
        %5256 = vmatprep.subr.bf16.mxu0 0
        %5257 = vmatpush1.bf16.xpose.msra.mxu0 %v5229
        %5258 = vmatprep.subr.bf16.mxu0 0
        %5259 = vmatpush1.bf16.xpose.msra.mxu0 %v5226
        %5260 = vmatprep.subr.bf16.mxu0 0
        %5261 = vmatpush1.bf16.xpose.msra.mxu0 %v5223
        %5262 = vmatprep.subr.bf16.mxu0 0
        %5263 = vmatpush2.bf16.xpose.msra.mxu0 0
        %5264 = vmatprep.subr.bf16.mxu0 0
        %5265 = vmatpush2.bf16.xpose.msra.mxu0 0
        %5266 = vmatprep.subr.bf16.mxu0 0
        %5267 = vmatpush2.bf16.xpose.msra.mxu0 0
        %5268 = vmatprep.subr.bf16.mxu0 0
        %5269 = vmatpush2.bf16.xpose.msra.mxu0 0
        %5270 = vmatprep.subr.bf16.mxu0 0
        %5271 = vmatpush2.bf16.xpose.msra.mxu0 0
        %5272 = vmatprep.subr.bf16.mxu0 0
        %5273 = vmatpush2.bf16.xpose.msra.mxu0 0
        %5274 = vmatprep.subr.bf16.mxu0 0
        %5275 = vmatpush2.bf16.xpose.msra.mxu0 0
        %5276 = vmatprep.subr.bf16.mxu0 0
        %5277 = vmatpush2.bf16.xpose.msra.mxu0 0
        %5278 = vmatprep.mubr.bf16.mxu0 0
        %5279 = vmatmul.mubr.bf16.gmra.mxu0 %v5199
        %v5280 = vpop.f32.mrf.mxu0
        %v5281 = vadd.f32 %v2963, %v5280
        %v5282 = vpop.f32.mrf.mxu0
        %v5283 = vpop.f32.mrf.mxu0
        %v5284 = vadd.f32 %v2964, %v5283
        %v5285 = vpop.f32.mrf.mxu0
        %5286 = vmatprep.mubr.bf16.mxu0 0
        %5287 = vmatmul.mubr.bf16.gmra.mxu0 %v5202
        %v5288 = vpop.f32.mrf.mxu0
        %v5289 = vadd.f32 %v2965, %v5288
        %v5290 = vpop.f32.mrf.mxu0
        %v5291 = vpop.f32.mrf.mxu0
        %v5292 = vadd.f32 %v2966, %v5291
        %v5293 = vpop.f32.mrf.mxu0
        %5294 = vmatprep.mubr.bf16.mxu0 0
        %5295 = vmatmul.mubr.bf16.gmra.mxu0 %v5205
        %v5296 = vpop.f32.mrf.mxu0
        %v5297 = vadd.f32 %v2967, %v5296
        %v5298 = vpop.f32.mrf.mxu0
        %v5299 = vpop.f32.mrf.mxu0
        %v5300 = vadd.f32 %v2968, %v5299
        %v5301 = vpop.f32.mrf.mxu0
        %5302 = vmatprep.mubr.bf16.mxu0 0
        %5303 = vmatmul.mubr.bf16.gmra.mxu0 %v5208
        %v5304 = vpop.f32.mrf.mxu0
        %v5305 = vadd.f32 %v2969, %v5304
        %v5306 = vpop.f32.mrf.mxu0
        %v5307 = vpop.f32.mrf.mxu0
        %v5308 = vadd.f32 %v2970, %v5307
        %v5309 = vpop.f32.mrf.mxu0
        %5310 = vmatprep.mubr.bf16.mxu0 0
        %5311 = vmatmul.mubr.bf16.gmra.mxu0 %v5211
        %v5312 = vpop.f32.mrf.mxu0
        %v5313 = vadd.f32 %v2971, %v5312
        %v5314 = vpop.f32.mrf.mxu0
        %v5315 = vpop.f32.mrf.mxu0
        %v5316 = vadd.f32 %v2972, %v5315
        %v5317 = vpop.f32.mrf.mxu0
        %5318 = vmatprep.mubr.bf16.mxu0 0
        %5319 = vmatmul.mubr.bf16.gmra.mxu0 %v5214
        %v5320 = vpop.f32.mrf.mxu0
        %v5321 = vadd.f32 %v2973, %v5320
        %v5322 = vpop.f32.mrf.mxu0
        %v5323 = vpop.f32.mrf.mxu0
        %v5324 = vadd.f32 %v2974, %v5323
        %v5325 = vpop.f32.mrf.mxu0
        %5326 = vmatprep.mubr.bf16.mxu0 0
        %5327 = vmatmul.mubr.bf16.gmra.mxu0 %v5217
        %v5328 = vpop.f32.mrf.mxu0
        %v5329 = vadd.f32 %v2975, %v5328
        %v5330 = vpop.f32.mrf.mxu0
        %v5331 = vpop.f32.mrf.mxu0
        %v5332 = vadd.f32 %v2976, %v5331
        %v5333 = vpop.f32.mrf.mxu0
        %5334 = vmatprep.mubr.bf16.mxu0 0
        %5335 = vmatmul.mubr.bf16.gmra.mxu0 %v5220
        %v5336 = vpop.f32.mrf.mxu0
        %v5337 = vadd.f32 %v2977, %v5336
        %v5338 = vpop.f32.mrf.mxu0
        %v5339 = vpop.f32.mrf.mxu0
        %v5340 = vadd.f32 %v2978, %v5339
        %v5341 = vpop.f32.mrf.mxu0
        %5342 = vdwg.mxu0
        %5343 = vmax.xlane.f32.xlu0 %v5281
        %v5344 = vpop.xlane.xlu0 %5343
        %5345 = vmax.xlane.f32.xlu0 %v5284
        %v5346 = vpop.xlane.xlu0 %5345
        %5347 = vmax.xlane.f32.xlu0 %v5289
        %v5348 = vpop.xlane.xlu0 %5347
        %5349 = vmax.xlane.f32.xlu0 %v5292
        %v5350 = vpop.xlane.xlu0 %5349
        %5351 = vmax.xlane.f32.xlu0 %v5297
        %v5352 = vpop.xlane.xlu0 %5351
        %5353 = vmax.xlane.f32.xlu0 %v5300
        %v5354 = vpop.xlane.xlu0 %5353
        %5355 = vmax.xlane.f32.xlu0 %v5305
        %v5356 = vpop.xlane.xlu0 %5355
        %5357 = vmax.xlane.f32.xlu0 %v5308
        %v5358 = vpop.xlane.xlu0 %5357
        %5359 = vmax.xlane.f32.xlu0 %v5313
        %v5360 = vpop.xlane.xlu0 %5359
        %5361 = vmax.xlane.f32.xlu0 %v5316
        %v5362 = vpop.xlane.xlu0 %5361
        %5363 = vmax.xlane.f32.xlu0 %v5321
        %v5364 = vpop.xlane.xlu0 %5363
        %5365 = vmax.xlane.f32.xlu0 %v5324
        %v5366 = vpop.xlane.xlu0 %5365
        %5367 = vmax.xlane.f32.xlu0 %v5329
        %v5368 = vpop.xlane.xlu0 %5367
        %5369 = vmax.xlane.f32.xlu0 %v5332
        %v5370 = vpop.xlane.xlu0 %5369
        %5371 = vmax.xlane.f32.xlu0 %v5337
        %v5372 = vpop.xlane.xlu0 %5371
        %5373 = vmax.xlane.f32.xlu0 %v5340
        %v5374 = vpop.xlane.xlu0 %5373
        %v5375 = vsub.f32 %v5281, %v5344
        %v5376 = vsub.f32 %v5284, %v5346
        %v5377 = vsub.f32 %v5289, %v5348
        %v5378 = vsub.f32 %v5292, %v5350
        %v5379 = vsub.f32 %v5297, %v5352
        %v5380 = vsub.f32 %v5300, %v5354
        %v5381 = vsub.f32 %v5305, %v5356
        %v5382 = vsub.f32 %v5308, %v5358
        %v5383 = vsub.f32 %v5313, %v5360
        %v5384 = vsub.f32 %v5316, %v5362
        %v5385 = vsub.f32 %v5321, %v5364
        %v5386 = vsub.f32 %v5324, %v5366
        %v5387 = vsub.f32 %v5329, %v5368
        %v5388 = vsub.f32 %v5332, %v5370
        %v5389 = vsub.f32 %v5337, %v5372
        %v5390 = vsub.f32 %v5340, %v5374
        %v5391 = vmul.f32 %v5375, 1.442695
        %v5392 = vpow.pop %v5391
        %v5393 = vmul.f32 %v5376, 1.442695
        %v5394 = vpow.pop %v5393
        %v5395 = vmul.f32 %v5377, 1.442695
        %v5396 = vpow.pop %v5395
        %v5397 = vmul.f32 %v5378, 1.442695
        %v5398 = vpow.pop %v5397
        %v5399 = vmul.f32 %v5379, 1.442695
        %v5400 = vpow.pop %v5399
        %v5401 = vmul.f32 %v5380, 1.442695
        %v5402 = vpow.pop %v5401
        %v5403 = vmul.f32 %v5381, 1.442695
        %v5404 = vpow.pop %v5403
        %v5405 = vmul.f32 %v5382, 1.442695
        %v5406 = vpow.pop %v5405
        %v5407 = vmul.f32 %v5383, 1.442695
        %v5408 = vpow.pop %v5407
        %v5409 = vmul.f32 %v5384, 1.442695
        %v5410 = vpow.pop %v5409
        %v5411 = vmul.f32 %v5385, 1.442695
        %v5412 = vpow.pop %v5411
        %v5413 = vmul.f32 %v5386, 1.442695
        %v5414 = vpow.pop %v5413
        %v5415 = vmul.f32 %v5387, 1.442695
        %v5416 = vpow.pop %v5415
        %v5417 = vmul.f32 %v5388, 1.442695
        %v5418 = vpow.pop %v5417
        %v5419 = vmul.f32 %v5389, 1.442695
        %v5420 = vpow.pop %v5419
        %v5421 = vmul.f32 %v5390, 1.442695
        %v5422 = vpow.pop %v5421
        %5423 = vadd.xlane.f32.xlu0 %v5392
        %v5424 = vpop.xlane.xlu0 %5423
        %5425 = vadd.xlane.f32.xlu0 %v5394
        %v5426 = vpop.xlane.xlu0 %5425
        %5427 = vadd.xlane.f32.xlu0 %v5396
        %v5428 = vpop.xlane.xlu0 %5427
        %5429 = vadd.xlane.f32.xlu0 %v5398
        %v5430 = vpop.xlane.xlu0 %5429
        %5431 = vadd.xlane.f32.xlu0 %v5400
        %v5432 = vpop.xlane.xlu0 %5431
        %5433 = vadd.xlane.f32.xlu0 %v5402
        %v5434 = vpop.xlane.xlu0 %5433
        %5435 = vadd.xlane.f32.xlu0 %v5404
        %v5436 = vpop.xlane.xlu0 %5435
        %5437 = vadd.xlane.f32.xlu0 %v5406
        %v5438 = vpop.xlane.xlu0 %5437
        %5439 = vadd.xlane.f32.xlu0 %v5408
        %v5440 = vpop.xlane.xlu0 %5439
        %5441 = vadd.xlane.f32.xlu0 %v5410
        %v5442 = vpop.xlane.xlu0 %5441
        %5443 = vadd.xlane.f32.xlu0 %v5412
        %v5444 = vpop.xlane.xlu0 %5443
        %5445 = vadd.xlane.f32.xlu0 %v5414
        %v5446 = vpop.xlane.xlu0 %5445
        %5447 = vadd.xlane.f32.xlu0 %v5416
        %v5448 = vpop.xlane.xlu0 %5447
        %5449 = vadd.xlane.f32.xlu0 %v5418
        %v5450 = vpop.xlane.xlu0 %5449
        %5451 = vadd.xlane.f32.xlu0 %v5420
        %v5452 = vpop.xlane.xlu0 %5451
        %5453 = vadd.xlane.f32.xlu0 %v5422
        %v5454 = vpop.xlane.xlu0 %5453
        %v5455 = vrcp.pop %v5424
        %v5456 = vrcp.pop %v5426
        %v5457 = vrcp.pop %v5428
        %v5458 = vrcp.pop %v5430
        %v5459 = vrcp.pop %v5432
        %v5460 = vrcp.pop %v5434
        %v5461 = vrcp.pop %v5436
        %v5462 = vrcp.pop %v5438
        %v5463 = vrcp.pop %v5440
        %v5464 = vrcp.pop %v5442
        %v5465 = vrcp.pop %v5444
        %v5466 = vrcp.pop %v5446
        %v5467 = vrcp.pop %v5448
        %v5468 = vrcp.pop %v5450
        %v5469 = vrcp.pop %v5452
        %v5470 = vrcp.pop %v5454
        %v5471 = vpack.c.bf16 %v5394, %v5392
        %v5472 = vpack.c.bf16 %v5398, %v5396
        %v5473 = vpack.c.bf16 %v5402, %v5400
        %v5474 = vpack.c.bf16 %v5406, %v5404
        %v5475 = vpack.c.bf16 %v5410, %v5408
        %v5476 = vpack.c.bf16 %v5414, %v5412
        %v5477 = vpack.c.bf16 %v5418, %v5416
        %v5478 = vpack.c.bf16 %v5422, %v5420
        %5487 = vrot.lane.b32.xlu0 %v2864, 64
        %v5488 = vpop.permute.xlu0 %5487
        %5489 = vrot.lane.b32.xlu0 %v2873, 64
        %v5490 = vpop.permute.xlu0 %5489
        %5491 = vrot.lane.b32.xlu0 %v2882, 64
        %v5492 = vpop.permute.xlu0 %5491
        %5493 = vrot.lane.b32.xlu0 %v2891, 64
        %v5494 = vpop.permute.xlu0 %5493
        %5495 = vrot.lane.b32.xlu0 %v2900, 64
        %v5496 = vpop.permute.xlu0 %5495
        %5497 = vrot.lane.b32.xlu0 %v2909, 64
        %v5498 = vpop.permute.xlu0 %5497
        %5499 = vrot.lane.b32.xlu0 %v2918, 64
        %v5500 = vpop.permute.xlu0 %5499
        %5501 = vrot.lane.b32.xlu0 %v2927, 64
        %v5502 = vpop.permute.xlu0 %5501
        %5511 = vmatprep.subr.bf16.mxu0 0
        %5512 = vmatpush1.bf16.msra.mxu0 %v5502
        %5513 = vmatprep.subr.bf16.mxu0 0
        %5514 = vmatpush1.bf16.msra.mxu0 %v5500
        %5515 = vmatprep.subr.bf16.mxu0 0
        %5516 = vmatpush1.bf16.msra.mxu0 %v5498
        %5517 = vmatprep.subr.bf16.mxu0 0
        %5518 = vmatpush1.bf16.msra.mxu0 %v5496
        %5519 = vmatprep.subr.bf16.mxu0 0
        %5520 = vmatpush1.bf16.msra.mxu0 %v5494
        %5521 = vmatprep.subr.bf16.mxu0 0
        %5522 = vmatpush1.bf16.msra.mxu0 %v5492
        %5523 = vmatprep.subr.bf16.mxu0 0
        %5524 = vmatpush1.bf16.msra.mxu0 %v5490
        %5525 = vmatprep.subr.bf16.mxu0 0
        %5526 = vmatpush1.bf16.msra.mxu0 %v5488
        %5527 = vmatprep.subr.bf16.mxu0 0
        %5528 = vmatpush2.bf16.msra.mxu0 0
        %5529 = vmatprep.subr.bf16.mxu0 0
        %5530 = vmatpush2.bf16.msra.mxu0 0
        %5531 = vmatprep.subr.bf16.mxu0 0
        %5532 = vmatpush2.bf16.msra.mxu0 0
        %5533 = vmatprep.subr.bf16.mxu0 0
        %5534 = vmatpush2.bf16.msra.mxu0 0
        %5535 = vmatprep.subr.bf16.mxu0 0
        %5536 = vmatpush2.bf16.msra.mxu0 0
        %5537 = vmatprep.subr.bf16.mxu0 0
        %5538 = vmatpush2.bf16.msra.mxu0 0
        %5539 = vmatprep.subr.bf16.mxu0 0
        %5540 = vmatpush2.bf16.msra.mxu0 0
        %5541 = vmatprep.subr.bf16.mxu0 0
        %5542 = vmatpush2.bf16.msra.mxu0 0
        %5543 = vmatprep.mubr.bf16.mxu0 0
        %5544 = vmatmul.mubr.bf16.gmra.mxu0 %v5471
        %v5545 = vpop.f32.mrf.mxu0
        %v5546 = vadd.f32 0.0, %v5545
        %v5547 = vpop.f32.mrf.mxu0
        %v5548 = vpop.f32.mrf.mxu0
        %v5549 = vadd.f32 0.0, %v5548
        %v5550 = vpop.f32.mrf.mxu0
        %5551 = vmatprep.mubr.bf16.mxu0 0
        %5552 = vmatmul.mubr.bf16.gmra.mxu0 %v5472
        %v5553 = vpop.f32.mrf.mxu0
        %v5554 = vadd.f32 0.0, %v5553
        %v5555 = vpop.f32.mrf.mxu0
        %v5556 = vpop.f32.mrf.mxu0
        %v5557 = vadd.f32 0.0, %v5556
        %v5558 = vpop.f32.mrf.mxu0
        %5559 = vmatprep.mubr.bf16.mxu0 0
        %5560 = vmatmul.mubr.bf16.gmra.mxu0 %v5473
        %v5561 = vpop.f32.mrf.mxu0
        %v5562 = vadd.f32 0.0, %v5561
        %v5563 = vpop.f32.mrf.mxu0
        %v5564 = vpop.f32.mrf.mxu0
        %v5565 = vadd.f32 0.0, %v5564
        %v5566 = vpop.f32.mrf.mxu0
        %5567 = vmatprep.mubr.bf16.mxu0 0
        %5568 = vmatmul.mubr.bf16.gmra.mxu0 %v5474
        %v5569 = vpop.f32.mrf.mxu0
        %v5570 = vadd.f32 0.0, %v5569
        %v5571 = vpop.f32.mrf.mxu0
        %v5572 = vpop.f32.mrf.mxu0
        %v5573 = vadd.f32 0.0, %v5572
        %v5574 = vpop.f32.mrf.mxu0
        %5575 = vmatprep.mubr.bf16.mxu0 0
        %5576 = vmatmul.mubr.bf16.gmra.mxu0 %v5475
        %v5577 = vpop.f32.mrf.mxu0
        %v5578 = vadd.f32 0.0, %v5577
        %v5579 = vpop.f32.mrf.mxu0
        %v5580 = vpop.f32.mrf.mxu0
        %v5581 = vadd.f32 0.0, %v5580
        %v5582 = vpop.f32.mrf.mxu0
        %5583 = vmatprep.mubr.bf16.mxu0 0
        %5584 = vmatmul.mubr.bf16.gmra.mxu0 %v5476
        %v5585 = vpop.f32.mrf.mxu0
        %v5586 = vadd.f32 0.0, %v5585
        %v5587 = vpop.f32.mrf.mxu0
        %v5588 = vpop.f32.mrf.mxu0
        %v5589 = vadd.f32 0.0, %v5588
        %v5590 = vpop.f32.mrf.mxu0
        %5591 = vmatprep.mubr.bf16.mxu0 0
        %5592 = vmatmul.mubr.bf16.gmra.mxu0 %v5477
        %v5593 = vpop.f32.mrf.mxu0
        %v5594 = vadd.f32 0.0, %v5593
        %v5595 = vpop.f32.mrf.mxu0
        %v5596 = vpop.f32.mrf.mxu0
        %v5597 = vadd.f32 0.0, %v5596
        %v5598 = vpop.f32.mrf.mxu0
        %5599 = vmatprep.mubr.bf16.mxu0 0
        %5600 = vmatmul.mubr.bf16.gmra.mxu0 %v5478
        %v5601 = vpop.f32.mrf.mxu0
        %v5602 = vadd.f32 0.0, %v5601
        %v5603 = vpop.f32.mrf.mxu0
        %v5604 = vpop.f32.mrf.mxu0
        %v5605 = vadd.f32 0.0, %v5604
        %v5606 = vpop.f32.mrf.mxu0
        %5607 = vdwg.mxu0
        %v5608 = vmul.f32 %v5546, %v5455
        %v5609 = vmul.f32 %v5549, %v5456
        %v5610 = vmul.f32 %v5554, %v5457
        %v5611 = vmul.f32 %v5557, %v5458
        %v5612 = vmul.f32 %v5562, %v5459
        %v5613 = vmul.f32 %v5565, %v5460
        %v5614 = vmul.f32 %v5570, %v5461
        %v5615 = vmul.f32 %v5573, %v5462
        %v5616 = vmul.f32 %v5578, %v5463
        %v5617 = vmul.f32 %v5581, %v5464
        %v5618 = vmul.f32 %v5586, %v5465
        %v5619 = vmul.f32 %v5589, %v5466
        %v5620 = vmul.f32 %v5594, %v5467
        %v5621 = vmul.f32 %v5597, %v5468
        %v5622 = vmul.f32 %v5602, %v5469
        %v5623 = vmul.f32 %v5605, %v5470
        %v5624 = vpack.c.bf16 %v5609, %v5608
        %v5625 = vpack.c.bf16 %v5611, %v5610
        %v5626 = vpack.c.bf16 %v5613, %v5612
        %v5627 = vpack.c.bf16 %v5615, %v5614
        %v5628 = vpack.c.bf16 %v5617, %v5616
        %v5629 = vpack.c.bf16 %v5619, %v5618
        %v5630 = vpack.c.bf16 %v5621, %v5620
        %v5631 = vpack.c.bf16 %v5623, %v5622
        %5640 = vrot.lane.b32.xlu0 %v3856, 64
        %v5641 = vpop.permute.xlu0 %5640
        %5642 = vrot.lane.b32.xlu0 %v3857, 64
        %v5643 = vpop.permute.xlu0 %5642
        %5644 = vrot.lane.b32.xlu0 %v3858, 64
        %v5645 = vpop.permute.xlu0 %5644
        %5646 = vrot.lane.b32.xlu0 %v3859, 64
        %v5647 = vpop.permute.xlu0 %5646
        %5648 = vrot.lane.b32.xlu0 %v3860, 64
        %v5649 = vpop.permute.xlu0 %5648
        %5650 = vrot.lane.b32.xlu0 %v3861, 64
        %v5651 = vpop.permute.xlu0 %5650
        %5652 = vrot.lane.b32.xlu0 %v3862, 64
        %v5653 = vpop.permute.xlu0 %5652
        %5654 = vrot.lane.b32.xlu0 %v3863, 64
        %v5655 = vpop.permute.xlu0 %5654
        %5664 = vrot.lane.b32.xlu0 %v4740, 64
        %v5665 = vpop.permute.xlu0 %5664
        %5666 = vrot.lane.b32.xlu0 %v4741, 64
        %v5667 = vpop.permute.xlu0 %5666
        %5668 = vrot.lane.b32.xlu0 %v4742, 64
        %v5669 = vpop.permute.xlu0 %5668
        %5670 = vrot.lane.b32.xlu0 %v4743, 64
        %v5671 = vpop.permute.xlu0 %5670
        %5672 = vrot.lane.b32.xlu0 %v4744, 64
        %v5673 = vpop.permute.xlu0 %5672
        %5674 = vrot.lane.b32.xlu0 %v4745, 64
        %v5675 = vpop.permute.xlu0 %5674
        %5676 = vrot.lane.b32.xlu0 %v4746, 64
        %v5677 = vpop.permute.xlu0 %5676
        %5678 = vrot.lane.b32.xlu0 %v4747, 64
        %v5679 = vpop.permute.xlu0 %5678
        %5688 = vrot.lane.b32.xlu0 %v5624, 64
        %v5689 = vpop.permute.xlu0 %5688
        %5690 = vrot.lane.b32.xlu0 %v5625, 64
        %v5691 = vpop.permute.xlu0 %5690
        %5692 = vrot.lane.b32.xlu0 %v5626, 64
        %v5693 = vpop.permute.xlu0 %5692
        %5694 = vrot.lane.b32.xlu0 %v5627, 64
        %v5695 = vpop.permute.xlu0 %5694
        %5696 = vrot.lane.b32.xlu0 %v5628, 64
        %v5697 = vpop.permute.xlu0 %5696
        %5698 = vrot.lane.b32.xlu0 %v5629, 64
        %v5699 = vpop.permute.xlu0 %5698
        %5700 = vrot.lane.b32.xlu0 %v5630, 64
        %v5701 = vpop.permute.xlu0 %5700
        %5702 = vrot.lane.b32.xlu0 %v5631, 64
        %v5703 = vpop.permute.xlu0 %5702
        %v5706 = vsel %vm2979, %v3374, %v5641
        %v5710 = vsel %vm2979, %v3375, %v5643
        %v5714 = vsel %vm2979, %v3376, %v5645
        %v5718 = vsel %vm2979, %v3377, %v5647
        %v5722 = vsel %vm2979, %v3378, %v5649
        %v5726 = vsel %vm2979, %v3379, %v5651
        %v5730 = vsel %vm2979, %v3380, %v5653
        %v5734 = vsel %vm2979, %v3381, %v5655
        %v5738 = vsel %vm2979, %v4258, %v5665
        %v5742 = vsel %vm2979, %v4259, %v5667
        %v5746 = vsel %vm2979, %v4260, %v5669
        %v5750 = vsel %vm2979, %v4261, %v5671
        %v5754 = vsel %vm2979, %v4262, %v5673
        %v5758 = vsel %vm2979, %v4263, %v5675
        %v5762 = vsel %vm2979, %v4264, %v5677
        %v5766 = vsel %vm2979, %v4265, %v5679
        %v5770 = vsel %vm2979, %v5142, %v5689
        %v5774 = vsel %vm2979, %v5143, %v5691
        %v5778 = vsel %vm2979, %v5144, %v5693
        %v5782 = vsel %vm2979, %v5145, %v5695
        %v5786 = vsel %vm2979, %v5146, %v5697
        %v5790 = vsel %vm2979, %v5147, %v5699
        %v5794 = vsel %vm2979, %v5148, %v5701
        %v5798 = vsel %vm2979, %v5149, %v5703
        %v5800 = vld [vmem:[%s3] sm:$0x7]
        %v5802 = vlaneseq
        %v5803 = vshrl.u32 %v5802, 7
        %v5804 = vsub.s32 0, %v5803
        %v5805 = vrot.slane %v5800, %v5804
        %v5806 = vlaneseq
        %v5807 = vshrl.u32 %v5806, 7
        %v5808 = vsub.s32 1, %v5807
        %v5809 = vrot.slane %v5800, %v5808
        %v5810 = vlaneseq
        %v5811 = vshrl.u32 %v5810, 7
        %v5812 = vsub.s32 2, %v5811
        %v5813 = vrot.slane %v5800, %v5812
        %v5913 = vunpack.c.l.b16 %v558
        %v5914 = vunpack.c.h.b16 %v558
        %v5915 = vunpack.c.l.b16 %v559
        %v5916 = vunpack.c.l.b16 %v560
        %v5917 = vunpack.c.h.b16 %v560
        %v5918 = vunpack.c.l.b16 %v561
        %v5919 = vunpack.c.l.b16 %v562
        %v5920 = vunpack.c.h.b16 %v562
        %v5921 = vunpack.c.l.b16 %v563
        %v5922 = vunpack.c.l.b16 %v564
        %v5923 = vunpack.c.h.b16 %v564
        %v5924 = vunpack.c.l.b16 %v565
        %v5925 = vunpack.c.l.b16 %v566
        %v5926 = vunpack.c.h.b16 %v566
        %v5927 = vunpack.c.l.b16 %v567
        %v5928 = vunpack.c.l.b16 %v568
        %v5929 = vunpack.c.h.b16 %v568
        %v5930 = vunpack.c.l.b16 %v569
        %v5931 = vunpack.c.l.b16 %v570
        %v5932 = vunpack.c.h.b16 %v570
        %v5933 = vunpack.c.l.b16 %v571
        %v5934 = vunpack.c.l.b16 %v572
        %v5935 = vunpack.c.h.b16 %v572
        %v5936 = vunpack.c.l.b16 %v573
        %v5937 = vunpack.c.l.b16 %v574
        %v5938 = vunpack.c.h.b16 %v574
        %v5939 = vunpack.c.l.b16 %v575
        %v5940 = vunpack.c.l.b16 %v576
        %v5941 = vunpack.c.h.b16 %v576
        %v5942 = vunpack.c.l.b16 %v577
        %v5943 = vunpack.c.l.b16 %v578
        %v5944 = vunpack.c.h.b16 %v578
        %v5945 = vunpack.c.l.b16 %v579
        %v5946 = vunpack.c.l.b16 %v580
        %v5947 = vunpack.c.h.b16 %v580
        %v5948 = vunpack.c.l.b16 %v581
        %v5949 = vunpack.c.l.b16 %v582
        %v5950 = vunpack.c.h.b16 %v582
        %v5951 = vunpack.c.l.b16 %v583
        %v5952 = vunpack.c.l.b16 %v584
        %v5953 = vunpack.c.h.b16 %v584
        %v5954 = vunpack.c.l.b16 %v585
        %v5955 = vunpack.c.l.b16 %v586
        %v5956 = vunpack.c.h.b16 %v586
        %v5957 = vunpack.c.l.b16 %v587
        %v5958 = vunpack.c.l.b16 %v588
        %v5959 = vunpack.c.h.b16 %v588
        %v5960 = vunpack.c.l.b16 %v589
        %v5961 = vunpack.c.l.b16 %v590
        %v5962 = vunpack.c.h.b16 %v590
        %v5963 = vunpack.c.l.b16 %v591
        %v5964 = vunpack.c.l.b16 %v592
        %v5965 = vunpack.c.h.b16 %v592
        %v5966 = vunpack.c.l.b16 %v593
        %v5967 = vunpack.c.l.b16 %v594
        %v5968 = vunpack.c.h.b16 %v594
        %v5969 = vunpack.c.l.b16 %v595
        %v5970 = vunpack.c.l.b16 %v596
        %v5971 = vunpack.c.h.b16 %v596
        %v5972 = vunpack.c.l.b16 %v597
        %v5973 = vunpack.c.l.b16 %v598
        %v5974 = vunpack.c.h.b16 %v598
        %v5975 = vunpack.c.l.b16 %v599
        %v5976 = vunpack.c.l.b16 %v600
        %v5977 = vunpack.c.h.b16 %v600
        %v5978 = vunpack.c.l.b16 %v601
        %v5979 = vunpack.c.l.b16 %v602
        %v5980 = vunpack.c.h.b16 %v602
        %v5981 = vunpack.c.l.b16 %v603
        %v5982 = vunpack.c.l.b16 %v604
        %v5983 = vunpack.c.h.b16 %v604
        %v5984 = vunpack.c.l.b16 %v605
        %v5985 = vunpack.c.l.b16 %v606
        %v5986 = vunpack.c.h.b16 %v606
        %v5987 = vunpack.c.l.b16 %v607
        %v5988 = vunpack.c.l.b16 %v608
        %v5989 = vunpack.c.h.b16 %v608
        %v5990 = vunpack.c.l.b16 %v609
        %v5991 = vunpack.c.l.b16 %v610
        %v5992 = vunpack.c.h.b16 %v610
        %v5993 = vunpack.c.l.b16 %v611
        %v5994 = vunpack.c.l.b16 %v612
        %v5995 = vunpack.c.h.b16 %v612
        %v5996 = vunpack.c.l.b16 %v613
        %v5997 = vunpack.c.l.b16 %v614
        %v5998 = vunpack.c.h.b16 %v614
        %v5999 = vunpack.c.l.b16 %v615
        %v6000 = vunpack.c.l.b16 %v616
        %v6001 = vunpack.c.h.b16 %v616
        %v6002 = vunpack.c.l.b16 %v617
        %v6003 = vunpack.c.l.b16 %v618
        %v6004 = vunpack.c.h.b16 %v618
        %v6005 = vunpack.c.l.b16 %v619
        %v6006 = vunpack.c.l.b16 %v620
        %v6007 = vunpack.c.h.b16 %v620
        %v6008 = vunpack.c.l.b16 %v621
        %v6009 = vunpack.c.l.b16 %v622
        %v6010 = vunpack.c.h.b16 %v622
        %v6011 = vunpack.c.l.b16 %v623
        %v6012 = vunpack.c.l.b16 %v624
        %v6013 = vunpack.c.h.b16 %v624
        %v6014 = vunpack.c.l.b16 %v625
        %v6015 = vunpack.c.l.b16 %v626
        %v6016 = vunpack.c.h.b16 %v626
        %v6017 = vunpack.c.l.b16 %v627
        %v6018 = vunpack.c.l.b16 %v628
        %v6019 = vunpack.c.h.b16 %v628
        %v6020 = vunpack.c.l.b16 %v629
        %v6021 = vunpack.c.l.b16 %v630
        %v6022 = vunpack.c.h.b16 %v630
        %v6023 = vunpack.c.l.b16 %v631
        %v6024 = vunpack.c.l.b16 %v632
        %v6025 = vunpack.c.h.b16 %v632
        %v6026 = vunpack.c.l.b16 %v633
        %v6027 = vunpack.c.l.b16 %v634
        %v6028 = vunpack.c.h.b16 %v634
        %v6029 = vunpack.c.l.b16 %v635
        %v6030 = vunpack.c.l.b16 %v636
        %v6031 = vunpack.c.h.b16 %v636
        %v6032 = vunpack.c.l.b16 %v637
        %v6033 = vunpack.c.l.b16 %v638
        %v6034 = vunpack.c.h.b16 %v638
        %v6035 = vunpack.c.l.b16 %v639
        %v6036 = vunpack.c.l.b16 %v640
        %v6037 = vunpack.c.h.b16 %v640
        %v6038 = vunpack.c.l.b16 %v641
        %v6039 = vunpack.c.l.b16 %v642
        %v6040 = vunpack.c.h.b16 %v642
        %v6041 = vunpack.c.l.b16 %v643
        %v6042 = vunpack.c.l.b16 %v644
        %v6043 = vunpack.c.h.b16 %v644
        %v6044 = vunpack.c.l.b16 %v645
        %v6045 = vunpack.c.l.b16 %v646
        %v6046 = vunpack.c.h.b16 %v646
        %v6047 = vunpack.c.l.b16 %v647
        %v6048 = vunpack.c.l.b16 %v648
        %v6049 = vunpack.c.h.b16 %v648
        %v6050 = vunpack.c.l.b16 %v649
        %v6051 = vunpack.c.l.b16 %v650
        %v6052 = vunpack.c.h.b16 %v650
        %v6053 = vunpack.c.l.b16 %v651
        %v6054 = vunpack.c.l.b16 %v652
        %v6055 = vunpack.c.h.b16 %v652
        %v6056 = vunpack.c.l.b16 %v653
        %v6057 = vpack.c.b16 %v5916, %v5913
        %v6058 = vpack.c.b16 %v5917, %v5914
        %v6059 = vpack.c.b16 %v5918, %v5915
        %v6060 = vpack.c.b16 %v5922, %v5919
        %v6061 = vpack.c.b16 %v5923, %v5920
        %v6062 = vpack.c.b16 %v5924, %v5921
        %v6063 = vpack.c.b16 %v5928, %v5925
        %v6064 = vpack.c.b16 %v5929, %v5926
        %v6065 = vpack.c.b16 %v5930, %v5927
        %v6066 = vpack.c.b16 %v5934, %v5931
        %v6067 = vpack.c.b16 %v5935, %v5932
        %v6068 = vpack.c.b16 %v5936, %v5933
        %v6069 = vpack.c.b16 %v5940, %v5937
        %v6070 = vpack.c.b16 %v5941, %v5938
        %v6071 = vpack.c.b16 %v5942, %v5939
        %v6072 = vpack.c.b16 %v5946, %v5943
        %v6073 = vpack.c.b16 %v5947, %v5944
        %v6074 = vpack.c.b16 %v5948, %v5945
        %v6075 = vpack.c.b16 %v5952, %v5949
        %v6076 = vpack.c.b16 %v5953, %v5950
        %v6077 = vpack.c.b16 %v5954, %v5951
        %v6078 = vpack.c.b16 %v5958, %v5955
        %v6079 = vpack.c.b16 %v5959, %v5956
        %v6080 = vpack.c.b16 %v5960, %v5957
        %v6081 = vpack.c.b16 %v5964, %v5961
        %v6082 = vpack.c.b16 %v5965, %v5962
        %v6083 = vpack.c.b16 %v5966, %v5963
        %v6084 = vpack.c.b16 %v5970, %v5967
        %v6085 = vpack.c.b16 %v5971, %v5968
        %v6086 = vpack.c.b16 %v5972, %v5969
        %v6087 = vpack.c.b16 %v5976, %v5973
        %v6088 = vpack.c.b16 %v5977, %v5974
        %v6089 = vpack.c.b16 %v5978, %v5975
        %v6090 = vpack.c.b16 %v5982, %v5979
        %v6091 = vpack.c.b16 %v5983, %v5980
        %v6092 = vpack.c.b16 %v5984, %v5981
        %v6093 = vpack.c.b16 %v5988, %v5985
        %v6094 = vpack.c.b16 %v5989, %v5986
        %v6095 = vpack.c.b16 %v5990, %v5987
        %v6096 = vpack.c.b16 %v5994, %v5991
        %v6097 = vpack.c.b16 %v5995, %v5992
        %v6098 = vpack.c.b16 %v5996, %v5993
        %v6099 = vpack.c.b16 %v6000, %v5997
        %v6100 = vpack.c.b16 %v6001, %v5998
        %v6101 = vpack.c.b16 %v6002, %v5999
        %v6102 = vpack.c.b16 %v6006, %v6003
        %v6103 = vpack.c.b16 %v6007, %v6004
        %v6104 = vpack.c.b16 %v6008, %v6005
        %v6105 = vpack.c.b16 %v6012, %v6009
        %v6106 = vpack.c.b16 %v6013, %v6010
        %v6107 = vpack.c.b16 %v6014, %v6011
        %v6108 = vpack.c.b16 %v6018, %v6015
        %v6109 = vpack.c.b16 %v6019, %v6016
        %v6110 = vpack.c.b16 %v6020, %v6017
        %v6111 = vpack.c.b16 %v6024, %v6021
        %v6112 = vpack.c.b16 %v6025, %v6022
        %v6113 = vpack.c.b16 %v6026, %v6023
        %v6114 = vpack.c.b16 %v6030, %v6027
        %v6115 = vpack.c.b16 %v6031, %v6028
        %v6116 = vpack.c.b16 %v6032, %v6029
        %v6117 = vpack.c.b16 %v6036, %v6033
        %v6118 = vpack.c.b16 %v6037, %v6034
        %v6119 = vpack.c.b16 %v6038, %v6035
        %v6120 = vpack.c.b16 %v6042, %v6039
        %v6121 = vpack.c.b16 %v6043, %v6040
        %v6122 = vpack.c.b16 %v6044, %v6041
        %v6123 = vpack.c.b16 %v6048, %v6045
        %v6124 = vpack.c.b16 %v6049, %v6046
        %v6125 = vpack.c.b16 %v6050, %v6047
        %v6126 = vpack.c.b16 %v6054, %v6051
        %v6127 = vpack.c.b16 %v6055, %v6052
        %v6128 = vpack.c.b16 %v6056, %v6053
        %6201 = vmatprep.subr.bf16.mxu0 %v6079
        %6202 = vmatpush1.bf16.msra.mxu0 %v6078
        %6203 = vmatprep.subr.bf16.mxu0 %v6076
        %6204 = vmatpush1.bf16.msra.mxu0 %v6075
        %6205 = vmatprep.subr.bf16.mxu0 %v6073
        %6206 = vmatpush1.bf16.msra.mxu0 %v6072
        %6207 = vmatprep.subr.bf16.mxu0 %v6070
        %6208 = vmatpush1.bf16.msra.mxu0 %v6069
        %6209 = vmatprep.subr.bf16.mxu0 %v6067
        %6210 = vmatpush1.bf16.msra.mxu0 %v6066
        %6211 = vmatprep.subr.bf16.mxu0 %v6064
        %6212 = vmatpush1.bf16.msra.mxu0 %v6063
        %6213 = vmatprep.subr.bf16.mxu0 %v6061
        %6214 = vmatpush1.bf16.msra.mxu0 %v6060
        %6215 = vmatprep.subr.bf16.mxu0 %v6058
        %6216 = vmatpush1.bf16.msra.mxu0 %v6057
        %6217 = vmatprep.subr.bf16.mxu0 %v6103
        %6218 = vmatpush2.bf16.msra.mxu0 %v6102
        %6219 = vmatprep.subr.bf16.mxu0 %v6100
        %6220 = vmatpush2.bf16.msra.mxu0 %v6099
        %6221 = vmatprep.subr.bf16.mxu0 %v6097
        %6222 = vmatpush2.bf16.msra.mxu0 %v6096
        %6223 = vmatprep.subr.bf16.mxu0 %v6094
        %6224 = vmatpush2.bf16.msra.mxu0 %v6093
        %6225 = vmatprep.subr.bf16.mxu0 %v6091
        %6226 = vmatpush2.bf16.msra.mxu0 %v6090
        %6227 = vmatprep.subr.bf16.mxu0 %v6088
        %6228 = vmatpush2.bf16.msra.mxu0 %v6087
        %6229 = vmatprep.subr.bf16.mxu0 %v6085
        %6230 = vmatpush2.bf16.msra.mxu0 %v6084
        %6231 = vmatprep.subr.bf16.mxu0 %v6082
        %6232 = vmatpush2.bf16.msra.mxu0 %v6081
        %6233 = vmatprep.mubr.bf16.mxu0 %v5738
        %6234 = vmatmul.mubr.bf16.gmra.mxu0 %v5706
        %v6235 = vpop.f32.mrf.mxu0
        %v6236 = vadd.f32 %v5805, %v6235
        %v6237 = vpop.f32.mrf.mxu0
        %v6238 = vadd.f32 %v5809, %v6237
        %v6239 = vpop.f32.mrf.mxu0
        %v6240 = vadd.f32 %v5805, %v6239
        %v6241 = vpop.f32.mrf.mxu0
        %v6242 = vadd.f32 %v5809, %v6241
        %6243 = vmatprep.mubr.bf16.mxu0 %v5742
        %6244 = vmatmul.mubr.bf16.gmra.mxu0 %v5710
        %v6245 = vpop.f32.mrf.mxu0
        %v6246 = vadd.f32 %v5805, %v6245
        %v6247 = vpop.f32.mrf.mxu0
        %v6248 = vadd.f32 %v5809, %v6247
        %v6249 = vpop.f32.mrf.mxu0
        %v6250 = vadd.f32 %v5805, %v6249
        %v6251 = vpop.f32.mrf.mxu0
        %v6252 = vadd.f32 %v5809, %v6251
        %6253 = vmatprep.mubr.bf16.mxu0 %v5746
        %6254 = vmatmul.mubr.bf16.gmra.mxu0 %v5714
        %v6255 = vpop.f32.mrf.mxu0
        %v6256 = vadd.f32 %v5805, %v6255
        %v6257 = vpop.f32.mrf.mxu0
        %v6258 = vadd.f32 %v5809, %v6257
        %v6259 = vpop.f32.mrf.mxu0
        %v6260 = vadd.f32 %v5805, %v6259
        %v6261 = vpop.f32.mrf.mxu0
        %v6262 = vadd.f32 %v5809, %v6261
        %6263 = vmatprep.mubr.bf16.mxu0 %v5750
        %6264 = vmatmul.mubr.bf16.gmra.mxu0 %v5718
        %v6265 = vpop.f32.mrf.mxu0
        %v6266 = vadd.f32 %v5805, %v6265
        %v6267 = vpop.f32.mrf.mxu0
        %v6268 = vadd.f32 %v5809, %v6267
        %v6269 = vpop.f32.mrf.mxu0
        %v6270 = vadd.f32 %v5805, %v6269
        %v6271 = vpop.f32.mrf.mxu0
        %v6272 = vadd.f32 %v5809, %v6271
        %6273 = vmatprep.mubr.bf16.mxu0 %v5754
        %6274 = vmatmul.mubr.bf16.gmra.mxu0 %v5722
        %v6275 = vpop.f32.mrf.mxu0
        %v6276 = vadd.f32 %v5805, %v6275
        %v6277 = vpop.f32.mrf.mxu0
        %v6278 = vadd.f32 %v5809, %v6277
        %v6279 = vpop.f32.mrf.mxu0
        %v6280 = vadd.f32 %v5805, %v6279
        %v6281 = vpop.f32.mrf.mxu0
        %v6282 = vadd.f32 %v5809, %v6281
        %6283 = vmatprep.mubr.bf16.mxu0 %v5758
        %6284 = vmatmul.mubr.bf16.gmra.mxu0 %v5726
        %v6285 = vpop.f32.mrf.mxu0
        %v6286 = vadd.f32 %v5805, %v6285
        %v6287 = vpop.f32.mrf.mxu0
        %v6288 = vadd.f32 %v5809, %v6287
        %v6289 = vpop.f32.mrf.mxu0
        %v6290 = vadd.f32 %v5805, %v6289
        %v6291 = vpop.f32.mrf.mxu0
        %v6292 = vadd.f32 %v5809, %v6291
        %6293 = vmatprep.mubr.bf16.mxu0 %v5762
        %6294 = vmatmul.mubr.bf16.gmra.mxu0 %v5730
        %v6295 = vpop.f32.mrf.mxu0
        %v6296 = vadd.f32 %v5805, %v6295
        %v6297 = vpop.f32.mrf.mxu0
        %v6298 = vadd.f32 %v5809, %v6297
        %v6299 = vpop.f32.mrf.mxu0
        %v6300 = vadd.f32 %v5805, %v6299
        %v6301 = vpop.f32.mrf.mxu0
        %v6302 = vadd.f32 %v5809, %v6301
        %6303 = vmatprep.mubr.bf16.mxu0 %v5766
        %6304 = vmatmul.mubr.bf16.gmra.mxu0 %v5734
        %v6305 = vpop.f32.mrf.mxu0
        %v6306 = vadd.f32 %v5805, %v6305
        %v6307 = vpop.f32.mrf.mxu0
        %v6308 = vadd.f32 %v5809, %v6307
        %v6309 = vpop.f32.mrf.mxu0
        %v6310 = vadd.f32 %v5805, %v6309
        %v6311 = vpop.f32.mrf.mxu0
        %v6312 = vadd.f32 %v5809, %v6311
        %6313 = vdwg.mxu0
        %6314 = vmatprep.subr.bf16.mxu0 %v6127
        %6315 = vmatpush1.bf16.msra.mxu0 %v6126
        %6316 = vmatprep.subr.bf16.mxu0 %v6124
        %6317 = vmatpush1.bf16.msra.mxu0 %v6123
        %6318 = vmatprep.subr.bf16.mxu0 %v6121
        %6319 = vmatpush1.bf16.msra.mxu0 %v6120
        %6320 = vmatprep.subr.bf16.mxu0 %v6118
        %6321 = vmatpush1.bf16.msra.mxu0 %v6117
        %6322 = vmatprep.subr.bf16.mxu0 %v6115
        %6323 = vmatpush1.bf16.msra.mxu0 %v6114
        %6324 = vmatprep.subr.bf16.mxu0 %v6112
        %6325 = vmatpush1.bf16.msra.mxu0 %v6111
        %6326 = vmatprep.subr.bf16.mxu0 %v6109
        %6327 = vmatpush1.bf16.msra.mxu0 %v6108
        %6328 = vmatprep.subr.bf16.mxu0 %v6106
        %6329 = vmatpush1.bf16.msra.mxu0 %v6105
        %6330 = vmatprep.subr.bf16.mxu0 0
        %6331 = vmatpush2.bf16.msra.mxu0 0
        %6332 = vmatprep.subr.bf16.mxu0 0
        %6333 = vmatpush2.bf16.msra.mxu0 0
        %6334 = vmatprep.subr.bf16.mxu0 0
        %6335 = vmatpush2.bf16.msra.mxu0 0
        %6336 = vmatprep.subr.bf16.mxu0 0
        %6337 = vmatpush2.bf16.msra.mxu0 0
        %6338 = vmatprep.subr.bf16.mxu0 0
        %6339 = vmatpush2.bf16.msra.mxu0 0
        %6340 = vmatprep.subr.bf16.mxu0 0
        %6341 = vmatpush2.bf16.msra.mxu0 0
        %6342 = vmatprep.subr.bf16.mxu0 0
        %6343 = vmatpush2.bf16.msra.mxu0 0
        %6344 = vmatprep.subr.bf16.mxu0 0
        %6345 = vmatpush2.bf16.msra.mxu0 0
        %6346 = vmatprep.mubr.bf16.mxu0 0
        %6347 = vmatmul.mubr.bf16.gmra.mxu0 %v5770
        %v6348 = vpop.f32.mrf.mxu0
        %v6349 = vadd.f32 %v6236, %v6348
        %v6350 = vpop.f32.mrf.mxu0
        %v6351 = vadd.f32 %v6238, %v6350
        %v6352 = vpop.f32.mrf.mxu0
        %v6353 = vadd.f32 %v6240, %v6352
        %v6354 = vpop.f32.mrf.mxu0
        %v6355 = vadd.f32 %v6242, %v6354
        %6356 = vmatprep.mubr.bf16.mxu0 0
        %6357 = vmatmul.mubr.bf16.gmra.mxu0 %v5774
        %v6358 = vpop.f32.mrf.mxu0
        %v6359 = vadd.f32 %v6246, %v6358
        %v6360 = vpop.f32.mrf.mxu0
        %v6361 = vadd.f32 %v6248, %v6360
        %v6362 = vpop.f32.mrf.mxu0
        %v6363 = vadd.f32 %v6250, %v6362
        %v6364 = vpop.f32.mrf.mxu0
        %v6365 = vadd.f32 %v6252, %v6364
        %6366 = vmatprep.mubr.bf16.mxu0 0
        %6367 = vmatmul.mubr.bf16.gmra.mxu0 %v5778
        %v6368 = vpop.f32.mrf.mxu0
        %v6369 = vadd.f32 %v6256, %v6368
        %v6370 = vpop.f32.mrf.mxu0
        %v6371 = vadd.f32 %v6258, %v6370
        %v6372 = vpop.f32.mrf.mxu0
        %v6373 = vadd.f32 %v6260, %v6372
        %v6374 = vpop.f32.mrf.mxu0
        %v6375 = vadd.f32 %v6262, %v6374
        %6376 = vmatprep.mubr.bf16.mxu0 0
        %6377 = vmatmul.mubr.bf16.gmra.mxu0 %v5782
        %v6378 = vpop.f32.mrf.mxu0
        %v6379 = vadd.f32 %v6266, %v6378
        %v6380 = vpop.f32.mrf.mxu0
        %v6381 = vadd.f32 %v6268, %v6380
        %v6382 = vpop.f32.mrf.mxu0
        %v6383 = vadd.f32 %v6270, %v6382
        %v6384 = vpop.f32.mrf.mxu0
        %v6385 = vadd.f32 %v6272, %v6384
        %6386 = vmatprep.mubr.bf16.mxu0 0
        %6387 = vmatmul.mubr.bf16.gmra.mxu0 %v5786
        %v6388 = vpop.f32.mrf.mxu0
        %v6389 = vadd.f32 %v6276, %v6388
        %v6390 = vpop.f32.mrf.mxu0
        %v6391 = vadd.f32 %v6278, %v6390
        %v6392 = vpop.f32.mrf.mxu0
        %v6393 = vadd.f32 %v6280, %v6392
        %v6394 = vpop.f32.mrf.mxu0
        %v6395 = vadd.f32 %v6282, %v6394
        %6396 = vmatprep.mubr.bf16.mxu0 0
        %6397 = vmatmul.mubr.bf16.gmra.mxu0 %v5790
        %v6398 = vpop.f32.mrf.mxu0
        %v6399 = vadd.f32 %v6286, %v6398
        %v6400 = vpop.f32.mrf.mxu0
        %v6401 = vadd.f32 %v6288, %v6400
        %v6402 = vpop.f32.mrf.mxu0
        %v6403 = vadd.f32 %v6290, %v6402
        %v6404 = vpop.f32.mrf.mxu0
        %v6405 = vadd.f32 %v6292, %v6404
        %6406 = vmatprep.mubr.bf16.mxu0 0
        %6407 = vmatmul.mubr.bf16.gmra.mxu0 %v5794
        %v6408 = vpop.f32.mrf.mxu0
        %v6409 = vadd.f32 %v6296, %v6408
        %v6410 = vpop.f32.mrf.mxu0
        %v6411 = vadd.f32 %v6298, %v6410
        %v6412 = vpop.f32.mrf.mxu0
        %v6413 = vadd.f32 %v6300, %v6412
        %v6414 = vpop.f32.mrf.mxu0
        %v6415 = vadd.f32 %v6302, %v6414
        %6416 = vmatprep.mubr.bf16.mxu0 0
        %6417 = vmatmul.mubr.bf16.gmra.mxu0 %v5798
        %v6418 = vpop.f32.mrf.mxu0
        %v6419 = vadd.f32 %v6306, %v6418
        %v6420 = vpop.f32.mrf.mxu0
        %v6421 = vadd.f32 %v6308, %v6420
        %v6422 = vpop.f32.mrf.mxu0
        %v6423 = vadd.f32 %v6310, %v6422
        %v6424 = vpop.f32.mrf.mxu0
        %v6425 = vadd.f32 %v6312, %v6424
        %6426 = vdwg.mxu0
        %6427 = vmatprep.subr.bf16.mxu0 0
        %6428 = vmatpush1.bf16.msra.mxu0 %v6080
        %6429 = vmatprep.subr.bf16.mxu0 0
        %6430 = vmatpush1.bf16.msra.mxu0 %v6077
        %6431 = vmatprep.subr.bf16.mxu0 0
        %6432 = vmatpush1.bf16.msra.mxu0 %v6074
        %6433 = vmatprep.subr.bf16.mxu0 0
        %6434 = vmatpush1.bf16.msra.mxu0 %v6071
        %6435 = vmatprep.subr.bf16.mxu0 0
        %6436 = vmatpush1.bf16.msra.mxu0 %v6068
        %6437 = vmatprep.subr.bf16.mxu0 0
        %6438 = vmatpush1.bf16.msra.mxu0 %v6065
        %6439 = vmatprep.subr.bf16.mxu0 0
        %6440 = vmatpush1.bf16.msra.mxu0 %v6062
        %6441 = vmatprep.subr.bf16.mxu0 0
        %6442 = vmatpush1.bf16.msra.mxu0 %v6059
        %6443 = vmatprep.subr.bf16.mxu0 0
        %6444 = vmatpush2.bf16.msra.mxu0 %v6104
        %6445 = vmatprep.subr.bf16.mxu0 0
        %6446 = vmatpush2.bf16.msra.mxu0 %v6101
        %6447 = vmatprep.subr.bf16.mxu0 0
        %6448 = vmatpush2.bf16.msra.mxu0 %v6098
        %6449 = vmatprep.subr.bf16.mxu0 0
        %6450 = vmatpush2.bf16.msra.mxu0 %v6095
        %6451 = vmatprep.subr.bf16.mxu0 0
        %6452 = vmatpush2.bf16.msra.mxu0 %v6092
        %6453 = vmatprep.subr.bf16.mxu0 0
        %6454 = vmatpush2.bf16.msra.mxu0 %v6089
        %6455 = vmatprep.subr.bf16.mxu0 0
        %6456 = vmatpush2.bf16.msra.mxu0 %v6086
        %6457 = vmatprep.subr.bf16.mxu0 0
        %6458 = vmatpush2.bf16.msra.mxu0 %v6083
        %6459 = vmatprep.mubr.bf16.mxu0 %v5738
        %6460 = vmatmul.mubr.bf16.gmra.mxu0 %v5706
        %v6461 = vpop.f32.mrf.mxu0
        %v6462 = vadd.f32 %v5813, %v6461
        %v6463 = vpop.f32.mrf.mxu0
        %v6464 = vpop.f32.mrf.mxu0
        %v6465 = vadd.f32 %v5813, %v6464
        %v6466 = vpop.f32.mrf.mxu0
        %6467 = vmatprep.mubr.bf16.mxu0 %v5742
        %6468 = vmatmul.mubr.bf16.gmra.mxu0 %v5710
        %v6469 = vpop.f32.mrf.mxu0
        %v6470 = vadd.f32 %v5813, %v6469
        %v6471 = vpop.f32.mrf.mxu0
        %v6472 = vpop.f32.mrf.mxu0
        %v6473 = vadd.f32 %v5813, %v6472
        %v6474 = vpop.f32.mrf.mxu0
        %6475 = vmatprep.mubr.bf16.mxu0 %v5746
        %6476 = vmatmul.mubr.bf16.gmra.mxu0 %v5714
        %v6477 = vpop.f32.mrf.mxu0
        %v6478 = vadd.f32 %v5813, %v6477
        %v6479 = vpop.f32.mrf.mxu0
        %v6480 = vpop.f32.mrf.mxu0
        %v6481 = vadd.f32 %v5813, %v6480
        %v6482 = vpop.f32.mrf.mxu0
        %6483 = vmatprep.mubr.bf16.mxu0 %v5750
        %6484 = vmatmul.mubr.bf16.gmra.mxu0 %v5718
        %v6485 = vpop.f32.mrf.mxu0
        %v6486 = vadd.f32 %v5813, %v6485
        %v6487 = vpop.f32.mrf.mxu0
        %v6488 = vpop.f32.mrf.mxu0
        %v6489 = vadd.f32 %v5813, %v6488
        %v6490 = vpop.f32.mrf.mxu0
        %6491 = vmatprep.mubr.bf16.mxu0 %v5754
        %6492 = vmatmul.mubr.bf16.gmra.mxu0 %v5722
        %v6493 = vpop.f32.mrf.mxu0
        %v6494 = vadd.f32 %v5813, %v6493
        %v6495 = vpop.f32.mrf.mxu0
        %v6496 = vpop.f32.mrf.mxu0
        %v6497 = vadd.f32 %v5813, %v6496
        %v6498 = vpop.f32.mrf.mxu0
        %6499 = vmatprep.mubr.bf16.mxu0 %v5758
        %6500 = vmatmul.mubr.bf16.gmra.mxu0 %v5726
        %v6501 = vpop.f32.mrf.mxu0
        %v6502 = vadd.f32 %v5813, %v6501
        %v6503 = vpop.f32.mrf.mxu0
        %v6504 = vpop.f32.mrf.mxu0
        %v6505 = vadd.f32 %v5813, %v6504
        %v6506 = vpop.f32.mrf.mxu0
        %6507 = vmatprep.mubr.bf16.mxu0 %v5762
        %6508 = vmatmul.mubr.bf16.gmra.mxu0 %v5730
        %v6509 = vpop.f32.mrf.mxu0
        %v6510 = vadd.f32 %v5813, %v6509
        %v6511 = vpop.f32.mrf.mxu0
        %v6512 = vpop.f32.mrf.mxu0
        %v6513 = vadd.f32 %v5813, %v6512
        %v6514 = vpop.f32.mrf.mxu0
        %6515 = vmatprep.mubr.bf16.mxu0 %v5766
        %6516 = vmatmul.mubr.bf16.gmra.mxu0 %v5734
        %v6517 = vpop.f32.mrf.mxu0
        %v6518 = vadd.f32 %v5813, %v6517
        %v6519 = vpop.f32.mrf.mxu0
        %v6520 = vpop.f32.mrf.mxu0
        %v6521 = vadd.f32 %v5813, %v6520
        %v6522 = vpop.f32.mrf.mxu0
        %6523 = vdwg.mxu0
        %6524 = vmatprep.subr.bf16.mxu0 0
        %6525 = vmatpush1.bf16.msra.mxu0 %v6128
        %6526 = vmatprep.subr.bf16.mxu0 0
        %6527 = vmatpush1.bf16.msra.mxu0 %v6125
        %6528 = vmatprep.subr.bf16.mxu0 0
        %6529 = vmatpush1.bf16.msra.mxu0 %v6122
        %6530 = vmatprep.subr.bf16.mxu0 0
        %6531 = vmatpush1.bf16.msra.mxu0 %v6119
        %6532 = vmatprep.subr.bf16.mxu0 0
        %6533 = vmatpush1.bf16.msra.mxu0 %v6116
        %6534 = vmatprep.subr.bf16.mxu0 0
        %6535 = vmatpush1.bf16.msra.mxu0 %v6113
        %6536 = vmatprep.subr.bf16.mxu0 0
        %6537 = vmatpush1.bf16.msra.mxu0 %v6110
        %6538 = vmatprep.subr.bf16.mxu0 0
        %6539 = vmatpush1.bf16.msra.mxu0 %v6107
        %6540 = vmatprep.subr.bf16.mxu0 0
        %6541 = vmatpush2.bf16.msra.mxu0 0
        %6542 = vmatprep.subr.bf16.mxu0 0
        %6543 = vmatpush2.bf16.msra.mxu0 0
        %6544 = vmatprep.subr.bf16.mxu0 0
        %6545 = vmatpush2.bf16.msra.mxu0 0
        %6546 = vmatprep.subr.bf16.mxu0 0
        %6547 = vmatpush2.bf16.msra.mxu0 0
        %6548 = vmatprep.subr.bf16.mxu0 0
        %6549 = vmatpush2.bf16.msra.mxu0 0
        %6550 = vmatprep.subr.bf16.mxu0 0
        %6551 = vmatpush2.bf16.msra.mxu0 0
        %6552 = vmatprep.subr.bf16.mxu0 0
        %6553 = vmatpush2.bf16.msra.mxu0 0
        %6554 = vmatprep.subr.bf16.mxu0 0
        %6555 = vmatpush2.bf16.msra.mxu0 0
        %6556 = vmatprep.mubr.bf16.mxu0 0
        %6557 = vmatmul.mubr.bf16.gmra.mxu0 %v5770
        %v6558 = vpop.f32.mrf.mxu0
        %v6559 = vadd.f32 %v6462, %v6558
        %v6560 = vpop.f32.mrf.mxu0
        %v6561 = vpop.f32.mrf.mxu0
        %v6562 = vadd.f32 %v6465, %v6561
        %v6563 = vpop.f32.mrf.mxu0
        %6564 = vmatprep.mubr.bf16.mxu0 0
        %6565 = vmatmul.mubr.bf16.gmra.mxu0 %v5774
        %v6566 = vpop.f32.mrf.mxu0
        %v6567 = vadd.f32 %v6470, %v6566
        %v6568 = vpop.f32.mrf.mxu0
        %v6569 = vpop.f32.mrf.mxu0
        %v6570 = vadd.f32 %v6473, %v6569
        %v6571 = vpop.f32.mrf.mxu0
        %6572 = vmatprep.mubr.bf16.mxu0 0
        %6573 = vmatmul.mubr.bf16.gmra.mxu0 %v5778
        %v6574 = vpop.f32.mrf.mxu0
        %v6575 = vadd.f32 %v6478, %v6574
        %v6576 = vpop.f32.mrf.mxu0
        %v6577 = vpop.f32.mrf.mxu0
        %v6578 = vadd.f32 %v6481, %v6577
        %v6579 = vpop.f32.mrf.mxu0
        %6580 = vmatprep.mubr.bf16.mxu0 0
        %6581 = vmatmul.mubr.bf16.gmra.mxu0 %v5782
        %v6582 = vpop.f32.mrf.mxu0
        %v6583 = vadd.f32 %v6486, %v6582
        %v6584 = vpop.f32.mrf.mxu0
        %v6585 = vpop.f32.mrf.mxu0
        %v6586 = vadd.f32 %v6489, %v6585
        %v6587 = vpop.f32.mrf.mxu0
        %6588 = vmatprep.mubr.bf16.mxu0 0
        %6589 = vmatmul.mubr.bf16.gmra.mxu0 %v5786
        %v6590 = vpop.f32.mrf.mxu0
        %v6591 = vadd.f32 %v6494, %v6590
        %v6592 = vpop.f32.mrf.mxu0
        %v6593 = vpop.f32.mrf.mxu0
        %v6594 = vadd.f32 %v6497, %v6593
        %v6595 = vpop.f32.mrf.mxu0
        %6596 = vmatprep.mubr.bf16.mxu0 0
        %6597 = vmatmul.mubr.bf16.gmra.mxu0 %v5790
        %v6598 = vpop.f32.mrf.mxu0
        %v6599 = vadd.f32 %v6502, %v6598
        %v6600 = vpop.f32.mrf.mxu0
        %v6601 = vpop.f32.mrf.mxu0
        %v6602 = vadd.f32 %v6505, %v6601
        %v6603 = vpop.f32.mrf.mxu0
        %6604 = vmatprep.mubr.bf16.mxu0 0
        %6605 = vmatmul.mubr.bf16.gmra.mxu0 %v5794
        %v6606 = vpop.f32.mrf.mxu0
        %v6607 = vadd.f32 %v6510, %v6606
        %v6608 = vpop.f32.mrf.mxu0
        %v6609 = vpop.f32.mrf.mxu0
        %v6610 = vadd.f32 %v6513, %v6609
        %v6611 = vpop.f32.mrf.mxu0
        %6612 = vmatprep.mubr.bf16.mxu0 0
        %6613 = vmatmul.mubr.bf16.gmra.mxu0 %v5798
        %v6614 = vpop.f32.mrf.mxu0
        %v6615 = vadd.f32 %v6518, %v6614
        %v6616 = vpop.f32.mrf.mxu0
        %v6617 = vpop.f32.mrf.mxu0
        %v6618 = vadd.f32 %v6521, %v6617
        %v6619 = vpop.f32.mrf.mxu0
        %6620 = vdwg.mxu0
        %6621 = vst [vmem:[%s244] sm:$0xff] %v6349
        %6622 = vst [vmem:[%s244 + $0x8] sm:$0xff] %v6351
        %6623 = vst [vmem:[%s244 + $0x10] sm:$0xff] %v6559
        %6624 = vst [vmem:[%s244 + $0x18] sm:$0xff] %v6353
        %6625 = vst [vmem:[%s244 + $0x20] sm:$0xff] %v6355
        %6626 = vst [vmem:[%s244 + $0x28] sm:$0xff] %v6562
        %6627 = vst [vmem:[%s244 + $0x30] sm:$0xff] %v6359
        %6628 = vst [vmem:[%s244 + $0x38] sm:$0xff] %v6361
        %6629 = vst [vmem:[%s244 + $0x40] sm:$0xff] %v6567
        %6630 = vst [vmem:[%s244 + $0x48] sm:$0xff] %v6363
        %6631 = vst [vmem:[%s244 + $0x50] sm:$0xff] %v6365
        %6632 = vst [vmem:[%s244 + $0x58] sm:$0xff] %v6570
        %6633 = vst [vmem:[%s244 + $0x60] sm:$0xff] %v6369
        %6634 = vst [vmem:[%s244 + $0x68] sm:$0xff] %v6371
        %6635 = vst [vmem:[%s244 + $0x70] sm:$0xff] %v6575
        %6636 = vst [vmem:[%s244 + $0x78] sm:$0xff] %v6373
        %6637 = vst [vmem:[%s244 + $0x80] sm:$0xff] %v6375
        %6638 = vst [vmem:[%s244 + $0x88] sm:$0xff] %v6578
        %6639 = vst [vmem:[%s244 + $0x90] sm:$0xff] %v6379
        %6640 = vst [vmem:[%s244 + $0x98] sm:$0xff] %v6381
        %6641 = vst [vmem:[%s244 + $0xa0] sm:$0xff] %v6583
        %6642 = vst [vmem:[%s244 + $0xa8] sm:$0xff] %v6383
        %6643 = vst [vmem:[%s244 + $0xb0] sm:$0xff] %v6385
        %6644 = vst [vmem:[%s244 + $0xb8] sm:$0xff] %v6586
        %6645 = vst [vmem:[%s244 + $0xc0] sm:$0xff] %v6389
        %6646 = vst [vmem:[%s244 + $0xc8] sm:$0xff] %v6391
        %6647 = vst [vmem:[%s244 + $0xd0] sm:$0xff] %v6591
        %6648 = vst [vmem:[%s244 + $0xd8] sm:$0xff] %v6393
        %6649 = vst [vmem:[%s244 + $0xe0] sm:$0xff] %v6395
        %6650 = vst [vmem:[%s244 + $0xe8] sm:$0xff] %v6594
        %6651 = vst [vmem:[%s244 + $0xf0] sm:$0xff] %v6399
        %6652 = vst [vmem:[%s244 + $0xf8] sm:$0xff] %v6401
        %6653 = vst [vmem:[%s244 + $0x100] sm:$0xff] %v6599
        %6654 = vst [vmem:[%s244 + $0x108] sm:$0xff] %v6403
        %6655 = vst [vmem:[%s244 + $0x110] sm:$0xff] %v6405
        %6656 = vst [vmem:[%s244 + $0x118] sm:$0xff] %v6602
        %6657 = vst [vmem:[%s244 + $0x120] sm:$0xff] %v6409
        %6658 = vst [vmem:[%s244 + $0x128] sm:$0xff] %v6411
        %6659 = vst [vmem:[%s244 + $0x130] sm:$0xff] %v6607
        %6660 = vst [vmem:[%s244 + $0x138] sm:$0xff] %v6413
        %6661 = vst [vmem:[%s244 + $0x140] sm:$0xff] %v6415
        %6662 = vst [vmem:[%s244 + $0x148] sm:$0xff] %v6610
        %6663 = vst [vmem:[%s244 + $0x150] sm:$0xff] %v6419
        %6664 = vst [vmem:[%s244 + $0x158] sm:$0xff] %v6421
        %6665 = vst [vmem:[%s244 + $0x160] sm:$0xff] %v6615
        %6666 = vst [vmem:[%s244 + $0x168] sm:$0xff] %v6423
        %6667 = vst [vmem:[%s244 + $0x170] sm:$0xff] %v6425
        %6668 = vst [vmem:[%s244 + $0x178] sm:$0xff] %v6618
        %s6669 = sand.u32 %s119, 1
        %s6670 = scalar_lea.sflag [#allocation4], %s6669
        %s6671 = sand.u32 %s119, 1
        %s6672 = smul.addr %s6671, 384
        %s6673 = scalar_lea.vmem [#allocation8], %s6672
        // Predicated region
        $region49: #{tpu_custom_call.1} parent=35 // pred_check
          %p6674 = pneg %p129
        $region50: #{tpu_custom_call.1} parent=35 // pred_check_branch
          %6676 = sbr.rel (%p6674) target = $region52
        $region51: #{tpu_custom_call.1} parent=35 // pred_region
          %s6678 = ssub.s32 6144, 6144
          %6679 = vsyncadd %s6670, %s6678
          %s6680 = smul.addr %s22, 48
          %s6681 = smul.addr %s6680, 128
          %s6682 = scalar_lea.hbm %s4, %s6681
          %s6683 = sshll.u32 %s6673, 4
          %s6684 = int_to_ptr.vmem [resolvable:$true] %s6683
          %6689 = dma.vmem_to_hbm [thread:$0]  %s6684, 6144, %s6682, %s6670, 384, 384, 24
        $region52: #{tpu_custom_call.1} parent=35 // pred_fallthru
          _
      $region36: #{tpu_custom_call.1} parent=5 // pred_fallthru
        _
      %p6690 = scmp.le.s32.totalorder 2, %s17
      // Predicated region
      $region53: #{tpu_custom_call.1} parent=5 // pred_check
        %p6691 = pneg %p6690
      $region54: #{tpu_custom_call.1} parent=5 // pred_check_branch
        %6693 = sbr.rel (%p6691) target = $region56
      $region55: #{tpu_custom_call.1} parent=5 // pred_region
        %s6694 = ssub.s32 %s17, 2
        // Predicated region
        $region57: #{tpu_custom_call.1} parent=55 // pred_check
          %p6695 = pneg %p135
        $region58: #{tpu_custom_call.1} parent=55 // pred_check_branch
          %6697 = sbr.rel (%p6695) target = $region60
        $region59: #{tpu_custom_call.1} parent=55 // pred_region
          %s6698 = sand.u32 %s120, 1
          %s6699 = scalar_lea.sflag [#allocation4], %s6698
          %s6700 = sand.u32 %s120, 1
          %s6701 = smul.addr %s6700, 384
          %s6702 = scalar_lea.vmem [#allocation8], %s6701
          %6703 = dma.done %s6699, 6144
        $region60: #{tpu_custom_call.1} parent=55 // pred_fallthru
          _
      $region56: #{tpu_custom_call.1} parent=5 // pred_fallthru
        _
    $region6: #{tpu_custom_call.1} parent=1 // loop_footer
      %s21 = sadd.s32 1, %s17
    $region7: #{tpu_custom_call.1} parent=1 // loop_footer_branch
      %16 = sbr.rel target = $region3
    $region8: #{tpu_custom_call.1} parent=1 // loop_exit
      _
    %6704 = vsyncpa [#allocation3], 1
    %s6705 = scalar_lea.sflag [#allocation3], 1
    %6706 = vsyncpa %s6705, 1
    %6707 = vsyncpa [#allocation6], 1
    %6708 = vsyncpa [#allocation4], 1
    %s6709 = scalar_lea.sflag [#allocation4], 1
    %6710 = vsyncpa %s6709, 1

</llo_original>
